<compile_context>
chip_gen: v5e
topology: v5e:2x2
jax: 0.10.0
libtpu: 0.0.40
codegen_flags: <defaults>
</compile_context>

<pallas_src>
import jax
import jax.numpy as jnp
from jax.experimental import pallas as pl
from jax.experimental.pallas import tpu as pltpu

INPUT_DIM = 28 * 28        # 784
HIDDEN = 400
N_LATENT = 20

# Lane-padded dims (multiples of 128)
INPUT_PAD = 896            # 784 -> 7*128
HIDDEN_PAD = 512           # 400 -> 4*128
LATENT_PAD = 128           # 20  -> 1*128
HEAD_PAD = 2 * LATENT_PAD  # fused [mu | logvar] head, 128-aligned halves

VMEM_LIMIT_BYTES = 48 * 1024 * 1024   # safe on v5e/v6e (128 MiB) and v7x (64 MiB)


def _round_up(x, m):
    return (x + m - 1) // m * m


def vae_forward_kernel(
    x_ref, eps_ref,
    w1_ref, b1_ref,
    wh_ref, bh_ref,
    w3_ref, b3_ref,
    w4_ref, b4_ref,
    recon_ref, head_ref,
):
    # encode: h1 = relu(x @ W1 + b1)      (bf16 operands, f32 accumulate)
    h1 = jnp.dot(x_ref[...], w1_ref[...],
                 preferred_element_type=jnp.float32) + b1_ref[...]      # (TB, 512)
    h1 = jnp.maximum(h1, 0.0)

    # fused mu/logvar head: one matmul, 128-aligned lane halves
    head = jnp.dot(h1.astype(jnp.bfloat16), wh_ref[...],
                   preferred_element_type=jnp.float32) + bh_ref[...]    # (TB, 256)
    mu_pad = head[:, :LATENT_PAD]                                       # (TB, 128)
    logvar_pad = head[:, LATENT_PAD:]                                   # (TB, 128)

    # reparameterize: z = mu + eps * exp(0.5 * logvar)
    # (pad columns: mu/logvar = 0, eps = 0 -> z pad = 0)
    std = jnp.exp(0.5 * logvar_pad)
    z = mu_pad + eps_ref[...] * std                                     # (TB, 128) f32

    # decode: h3 = relu(z @ W3 + b3); recon = sigmoid(h3 @ W4 + b4)
    h3 = jnp.dot(z.astype(jnp.bfloat16), w3_ref[...],
                 preferred_element_type=jnp.float32) + b3_ref[...]      # (TB, 512)
    h3 = jnp.maximum(h3, 0.0)
    logits = jnp.dot(h3.astype(jnp.bfloat16), w4_ref[...],
                     preferred_element_type=jnp.float32) + b4_ref[...]  # (TB, 896)
    recon = pl.reciprocal(1.0 + jnp.exp(-logits), approx=True)          # EUP exp + rcp

    recon_ref[...] = recon.astype(recon_ref.dtype)                      # bf16 store
    head_ref[...] = head.astype(head_ref.dtype)                         # f32 [mu|logvar]


def init_params(key):
    """Deterministic init mimicking torch.nn.Linear default (uniform +/- 1/sqrt(fan_in)).

    Weights are stored as (in_features, out_features), biases as (1, out)."""
    def linear(k, fan_in, fan_out):
        kw, kb = jax.random.split(k)
        bound = 1.0 / jnp.sqrt(fan_in)
        w = jax.random.uniform(kw, (fan_in, fan_out), jnp.float32, -bound, bound)
        b = jax.random.uniform(kb, (1, fan_out), jnp.float32, -bound, bound)
        return w, b

    k1, k21, k22, k3, k4 = jax.random.split(key, 5)
    return {
        "fc1": linear(k1, INPUT_DIM, HIDDEN),
        "fc21": linear(k21, HIDDEN, N_LATENT),
        "fc22": linear(k22, HIDDEN, N_LATENT),
        "fc3": linear(k3, N_LATENT, HIDDEN),
        "fc4": linear(k4, HIDDEN, INPUT_DIM),
    }


def _pack_params(params):
    """Zero-pad lane (and fc1 contraction) dims to multiples of 128, fuse
    fc21/fc22, cast weights to bf16 (biases stay f32)."""
    (w1, b1) = params["fc1"]
    (w21, b21) = params["fc21"]
    (w22, b22) = params["fc22"]
    (w3, b3) = params["fc3"]
    (w4, b4) = params["fc4"]

    # fc1: contraction dim padded 784 -> 896 so the bf16 x stream is lane-dense.
    w1p = jnp.zeros((INPUT_PAD, HIDDEN_PAD), jnp.bfloat16)
    w1p = w1p.at[:INPUT_DIM, :HIDDEN].set(w1.astype(jnp.bfloat16))
    b1p = jnp.zeros((1, HIDDEN_PAD), jnp.float32).at[:, :HIDDEN].set(b1)

    # fused [mu | logvar] head
    whp = jnp.zeros((HIDDEN_PAD, HEAD_PAD), jnp.bfloat16)
    whp = whp.at[:HIDDEN, :N_LATENT].set(w21.astype(jnp.bfloat16))
    whp = whp.at[:HIDDEN, LATENT_PAD:LATENT_PAD + N_LATENT].set(w22.astype(jnp.bfloat16))
    bhp = jnp.zeros((1, HEAD_PAD), jnp.float32)
    bhp = bhp.at[:, :N_LATENT].set(b21)
    bhp = bhp.at[:, LATENT_PAD:LATENT_PAD + N_LATENT].set(b22)

    w3p = jnp.zeros((LATENT_PAD, HIDDEN_PAD), jnp.bfloat16)
    w3p = w3p.at[:N_LATENT, :HIDDEN].set(w3.astype(jnp.bfloat16))
    b3p = jnp.zeros((1, HIDDEN_PAD), jnp.float32).at[:, :HIDDEN].set(b3)

    w4p = jnp.zeros((HIDDEN_PAD, INPUT_PAD), jnp.bfloat16)
    w4p = w4p.at[:HIDDEN, :INPUT_DIM].set(w4.astype(jnp.bfloat16))
    b4p = jnp.zeros((1, INPUT_PAD), jnp.float32).at[:, :INPUT_DIM].set(b4)

    return (w1p, b1p, whp, bhp, w3p, b3p, w4p, b4p)


def vae_forward(x_nchw, eps, params, *, block_b=512):
    """x_nchw: (B, 1, 28, 28) f32; eps: (B, 20) f32.

    Returns (recon (B, 784), mu (B, 20), logvar (B, 20)) matching
    VAE_Model.forward's output plus the stored self.mu / self.logvar.
    block_b=512 is v7x-safe; 1024 is fine on v5e/v6e with the 48 MiB limit."""
    B = x_nchw.shape[0]
    x = x_nchw.reshape(B, INPUT_DIM)               # same as torch .view(-1, 784)

    # Balanced batch tiling: pick the number of tiles first, then the tile size,
    # so the last tile is never mostly padding (e.g. B=300, block_b=256 ->
    # 2 tiles of 152 rows instead of one 256 + one 44-real/212-pad tile).
    n_tiles = max(1, pl.cdiv(B, block_b))
    tb = _round_up(pl.cdiv(B, n_tiles), 8)
    b_pad = tb * n_tiles

    # x streamed lane-dense in bf16 (halves the largest input DMA, unmasked MXU K).
    x_p = jnp.zeros((b_pad, INPUT_PAD), jnp.bfloat16)
    x_p = x_p.at[:B, :INPUT_DIM].set(x.astype(jnp.bfloat16))
    eps_p = jnp.zeros((b_pad, LATENT_PAD), jnp.float32).at[:B, :N_LATENT].set(eps)

    packed = _pack_params(params)
    grid = (n_tiles,)

    def batch_spec(last):
        return pl.BlockSpec((tb, last), lambda i: (i, 0))

    def const_spec(shape):
        return pl.BlockSpec(shape, lambda i: (0, 0))

    in_specs = [
        batch_spec(INPUT_PAD),                      # x   bf16  (streams over batch)
        batch_spec(LATENT_PAD),                     # eps f32
        const_spec((INPUT_PAD, HIDDEN_PAD)),        # W1        (VMEM-resident)
        const_spec((1, HIDDEN_PAD)),                # b1
        const_spec((HIDDEN_PAD, HEAD_PAD)),         # W_head (fc21|fc22 fused)
        const_spec((1, HEAD_PAD)),                  # b_head
        const_spec((LATENT_PAD, HIDDEN_PAD)),       # W3
        const_spec((1, HIDDEN_PAD)),                # b3
        const_spec((HIDDEN_PAD, INPUT_PAD)),        # W4
        const_spec((1, INPUT_PAD)),                 # b4
    ]
    out_specs = (
        batch_spec(INPUT_PAD),                      # recon (bf16, lane-dense, padded)
        batch_spec(HEAD_PAD),                       # fused [mu | logvar] head (f32)
    )
    out_shapes = (
        jax.ShapeDtypeStruct((b_pad, INPUT_PAD), jnp.bfloat16),
        jax.ShapeDtypeStruct((b_pad, HEAD_PAD), jnp.float32),
    )

    # Advisory cost estimate for XLA's scheduler.
    flops = 2 * b_pad * (INPUT_PAD * HIDDEN_PAD + HIDDEN_PAD * HEAD_PAD
                         + LATENT_PAD * HIDDEN_PAD + HIDDEN_PAD * INPUT_PAD)
    transcendentals = b_pad * (LATENT_PAD + INPUT_PAD)
    weight_bytes = 2 * (INPUT_PAD * HIDDEN_PAD + HIDDEN_PAD * HEAD_PAD
                        + LATENT_PAD * HIDDEN_PAD + HIDDEN_PAD * INPUT_PAD)
    bias_bytes = 4 * (HIDDEN_PAD + HEAD_PAD + HIDDEN_PAD + INPUT_PAD)
    act_bytes = b_pad * (2 * INPUT_PAD          # x bf16 in
                         + 4 * LATENT_PAD       # eps f32 in
                         + 2 * INPUT_PAD        # recon bf16 out
                         + 4 * HEAD_PAD)        # head f32 out
    bytes_accessed = weight_bytes + bias_bytes + act_bytes

    recon_p, head_p = pl.pallas_call(
        vae_forward_kernel,
        out_shape=out_shapes,
        grid=grid,
        in_specs=in_specs,
        out_specs=out_specs,
        compiler_params=pltpu.CompilerParams(
            dimension_semantics=("parallel",),        # megacore sharding on v7x
            vmem_limit_bytes=VMEM_LIMIT_BYTES,        # don't rely on default scoped limit
        ),
        cost_estimate=pl.CostEstimate(
            flops=flops,
            transcendentals=transcendentals,
            bytes_accessed=bytes_accessed,
        ),
    )(x_p, eps_p, *packed)

    recon = recon_p[:B, :INPUT_DIM].astype(jnp.float32)
    mu = head_p[:B, :N_LATENT]
    logvar = head_p[:B, LATENT_PAD:LATENT_PAD + N_LATENT]
    return recon, mu, logvar


def vae_forward_ref(x_nchw, eps, params):
    """Pure-JAX f32 reference (matches the PyTorch module's math)."""
    B = x_nchw.shape[0]
    x = x_nchw.reshape(B, INPUT_DIM)
    (w1, b1) = params["fc1"]
    (w21, b21) = params["fc21"]
    (w22, b22) = params["fc22"]
    (w3, b3) = params["fc3"]
    (w4, b4) = params["fc4"]
    h1 = jax.nn.relu(x @ w1 + b1)
    mu = h1 @ w21 + b21
    logvar = h1 @ w22 + b22
    z = mu + eps * jnp.exp(0.5 * logvar)
    h3 = jax.nn.relu(z @ w3 + b3)
    recon = jax.nn.sigmoid(h3 @ w4 + b4)
    return recon, mu, logvar


if __name__ == "__main__":
    key = jax.random.PRNGKey(0)
    k_params, k_x, k_eps = jax.random.split(key, 3)

    B = 2
    params = init_params(k_params)
    # "image" input in NCHW like the torch module expects
    x = jax.random.uniform(k_x, (B, 1, 28, 28), jnp.float32)
    eps = jax.random.normal(k_eps, (B, N_LATENT), jnp.float32)

    recon, mu, logvar = jax.block_until_ready(vae_forward(x, eps, params))

    # sanity check against pure-JAX f32 reference
    # (kernel uses bf16 matmul operands / bf16 recon store with f32 accumulation
    #  and an approx reciprocal in sigmoid -> loose tolerance)
    recon_r, mu_r, logvar_r = vae_forward_ref(x, eps, params)
    assert recon.shape == (B, INPUT_DIM)
    assert mu.shape == (B, N_LATENT) and logvar.shape == (B, N_LATENT)
    assert jnp.allclose(recon, recon_r, atol=3e-2), "recon mismatch"
    assert jnp.allclose(mu, mu_r, atol=3e-2), "mu mismatch"
    assert jnp.allclose(logvar, logvar_r, atol=3e-2), "logvar mismatch"

    print("KERNEL_OK")
</pallas_src>

<mosaic_0001>
module attributes {stable_mosaic.version = 11 : i64} {
  func.func @vae_forward_kernel(%arg0: i32, %arg1: memref<8x896xbf16, #tpu.memory_space<vmem>>, %arg2: memref<8x128xf32, #tpu.memory_space<vmem>>, %arg3: memref<896x512xbf16, #tpu.memory_space<vmem>>, %arg4: memref<1x512xf32, #tpu.memory_space<vmem>>, %arg5: memref<512x256xbf16, #tpu.memory_space<vmem>>, %arg6: memref<1x256xf32, #tpu.memory_space<vmem>>, %arg7: memref<128x512xbf16, #tpu.memory_space<vmem>>, %arg8: memref<1x512xf32, #tpu.memory_space<vmem>>, %arg9: memref<512x896xbf16, #tpu.memory_space<vmem>>, %arg10: memref<1x896xf32, #tpu.memory_space<vmem>>, %arg11: memref<8x896xbf16, #tpu.memory_space<vmem>>, %arg12: memref<8x256xf32, #tpu.memory_space<vmem>>) attributes {dimension_semantics = [#tpu.dimension_semantics<parallel>], iteration_bounds = array<i64: 1>, scalar_prefetch = 0 : i64, scratch_operands = 0 : i64, tpu.core_type = #tpu.core_type<tc>, window_params = [{transform_indices = @transform_0, window_bounds = array<i64: 8, 896>}, {transform_indices = @transform_1, window_bounds = array<i64: 8, 128>}, {pipeline_mode = #tpu.pipeline_mode<synchronous>, transform_indices = @transform_2, window_bounds = array<i64: 896, 512>}, {pipeline_mode = #tpu.pipeline_mode<synchronous>, transform_indices = @transform_3, window_bounds = array<i64: 1, 512>}, {pipeline_mode = #tpu.pipeline_mode<synchronous>, transform_indices = @transform_4, window_bounds = array<i64: 512, 256>}, {pipeline_mode = #tpu.pipeline_mode<synchronous>, transform_indices = @transform_5, window_bounds = array<i64: 1, 256>}, {pipeline_mode = #tpu.pipeline_mode<synchronous>, transform_indices = @transform_6, window_bounds = array<i64: 128, 512>}, {pipeline_mode = #tpu.pipeline_mode<synchronous>, transform_indices = @transform_7, window_bounds = array<i64: 1, 512>}, {pipeline_mode = #tpu.pipeline_mode<synchronous>, transform_indices = @transform_8, window_bounds = array<i64: 512, 896>}, {pipeline_mode = #tpu.pipeline_mode<synchronous>, transform_indices = @transform_9, window_bounds = array<i64: 1, 896>}, {transform_indices = @transform_10, window_bounds = array<i64: 8, 896>}, {transform_indices = @transform_11, window_bounds = array<i64: 8, 256>}]} {
    %c0 = arith.constant 0 : index
    %c0_0 = arith.constant 0 : index
    %0 = vector.load %arg1[%c0, %c0_0] : memref<8x896xbf16, #tpu.memory_space<vmem>>, vector<8x896xbf16>
    %c0_1 = arith.constant 0 : index
    %c0_2 = arith.constant 0 : index
    %1 = vector.load %arg3[%c0_1, %c0_2] : memref<896x512xbf16, #tpu.memory_space<vmem>>, vector<896x512xbf16>
    %cst = arith.constant dense<0.000000e+00> : vector<8x512xf32>
    %2 = tpu.matmul %0, %1, %cst {dimension_numbers = #tpu.dot_dimension_numbers<[1], [0], [0], [1], [0, 0, 1, 1], [], []>} : vector<8x896xbf16>, vector<896x512xbf16>, vector<8x512xf32> -> vector<8x512xf32>
    %c0_3 = arith.constant 0 : index
    %c0_4 = arith.constant 0 : index
    %3 = vector.load %arg4[%c0_3, %c0_4] : memref<1x512xf32, #tpu.memory_space<vmem>>, vector<1x512xf32>
    %4 = vector.broadcast %3 : vector<1x512xf32> to vector<8x512xf32>
    %5 = arith.addf %2, %4 : vector<8x512xf32>
    %cst_5 = arith.constant 0.000000e+00 : f32
    %6 = vector.broadcast %cst_5 : f32 to vector<8x512xf32>
    %7 = arith.maximumf %5, %6 : vector<8x512xf32>
    %8 = arith.truncf %7 : vector<8x512xf32> to vector<8x512xbf16>
    %c0_6 = arith.constant 0 : index
    %c0_7 = arith.constant 0 : index
    %9 = vector.load %arg5[%c0_6, %c0_7] : memref<512x256xbf16, #tpu.memory_space<vmem>>, vector<512x256xbf16>
    %cst_8 = arith.constant dense<0.000000e+00> : vector<8x256xf32>
    %10 = tpu.matmul %8, %9, %cst_8 {dimension_numbers = #tpu.dot_dimension_numbers<[1], [0], [0], [1], [0, 0, 1, 1], [], []>} : vector<8x512xbf16>, vector<512x256xbf16>, vector<8x256xf32> -> vector<8x256xf32>
    %c0_9 = arith.constant 0 : index
    %c0_10 = arith.constant 0 : index
    %11 = vector.load %arg6[%c0_9, %c0_10] : memref<1x256xf32, #tpu.memory_space<vmem>>, vector<1x256xf32>
    %12 = vector.broadcast %11 : vector<1x256xf32> to vector<8x256xf32>
    %13 = arith.addf %10, %12 : vector<8x256xf32>
    %14 = vector.extract_strided_slice %13 {offsets = [0, 0], sizes = [8, 128], strides = [1, 1]} : vector<8x256xf32> to vector<8x128xf32>
    %15 = vector.extract_strided_slice %13 {offsets = [0, 128], sizes = [8, 128], strides = [1, 1]} : vector<8x256xf32> to vector<8x128xf32>
    %cst_11 = arith.constant 5.000000e-01 : f32
    %16 = vector.broadcast %cst_11 : f32 to vector<8x128xf32>
    %17 = arith.mulf %16, %15 : vector<8x128xf32>
    %18 = math.exp %17 : vector<8x128xf32>
    %c0_12 = arith.constant 0 : index
    %c0_13 = arith.constant 0 : index
    %19 = vector.load %arg2[%c0_12, %c0_13] : memref<8x128xf32, #tpu.memory_space<vmem>>, vector<8x128xf32>
    %20 = arith.mulf %19, %18 : vector<8x128xf32>
    %21 = arith.addf %14, %20 : vector<8x128xf32>
    %22 = arith.truncf %21 : vector<8x128xf32> to vector<8x128xbf16>
    %c0_14 = arith.constant 0 : index
    %c0_15 = arith.constant 0 : index
    %23 = vector.load %arg7[%c0_14, %c0_15] : memref<128x512xbf16, #tpu.memory_space<vmem>>, vector<128x512xbf16>
    %cst_16 = arith.constant dense<0.000000e+00> : vector<8x512xf32>
    %24 = tpu.matmul %22, %23, %cst_16 {dimension_numbers = #tpu.dot_dimension_numbers<[1], [0], [0], [1], [0, 0, 1, 1], [], []>} : vector<8x128xbf16>, vector<128x512xbf16>, vector<8x512xf32> -> vector<8x512xf32>
    %c0_17 = arith.constant 0 : index
    %c0_18 = arith.constant 0 : index
    %25 = vector.load %arg8[%c0_17, %c0_18] : memref<1x512xf32, #tpu.memory_space<vmem>>, vector<1x512xf32>
    %26 = vector.broadcast %25 : vector<1x512xf32> to vector<8x512xf32>
    %27 = arith.addf %24, %26 : vector<8x512xf32>
    %cst_19 = arith.constant 0.000000e+00 : f32
    %28 = vector.broadcast %cst_19 : f32 to vector<8x512xf32>
    %29 = arith.maximumf %27, %28 : vector<8x512xf32>
    %30 = arith.truncf %29 : vector<8x512xf32> to vector<8x512xbf16>
    %c0_20 = arith.constant 0 : index
    %c0_21 = arith.constant 0 : index
    %31 = vector.load %arg9[%c0_20, %c0_21] : memref<512x896xbf16, #tpu.memory_space<vmem>>, vector<512x896xbf16>
    %cst_22 = arith.constant dense<0.000000e+00> : vector<8x896xf32>
    %32 = tpu.matmul %30, %31, %cst_22 {dimension_numbers = #tpu.dot_dimension_numbers<[1], [0], [0], [1], [0, 0, 1, 1], [], []>} : vector<8x512xbf16>, vector<512x896xbf16>, vector<8x896xf32> -> vector<8x896xf32>
    %c0_23 = arith.constant 0 : index
    %c0_24 = arith.constant 0 : index
    %33 = vector.load %arg10[%c0_23, %c0_24] : memref<1x896xf32, #tpu.memory_space<vmem>>, vector<1x896xf32>
    %34 = vector.broadcast %33 : vector<1x896xf32> to vector<8x896xf32>
    %35 = arith.addf %32, %34 : vector<8x896xf32>
    %cst_25 = arith.constant 0.000000e+00 : f32
    %36 = vector.broadcast %cst_25 : f32 to vector<8x896xf32>
    %37 = arith.subf %36, %35 : vector<8x896xf32>
    %38 = math.exp %37 : vector<8x896xf32>
    %cst_26 = arith.constant 1.000000e+00 : f32
    %39 = vector.broadcast %cst_26 : f32 to vector<8x896xf32>
    %40 = arith.addf %39, %38 : vector<8x896xf32>
    %41 = tpu.reciprocal %40 {approx = true} : vector<8x896xf32> -> vector<8x896xf32>
    %42 = arith.truncf %41 : vector<8x896xf32> to vector<8x896xbf16>
    %c0_27 = arith.constant 0 : index
    %c0_28 = arith.constant 0 : index
    %43 = vector.load %arg11[%c0_27, %c0_28] : memref<8x896xbf16, #tpu.memory_space<vmem>>, vector<8x896xbf16>
    tpu.vector_store %arg11[%c0_27, %c0_28], %42 {strides = array<i32>} : memref<8x896xbf16, #tpu.memory_space<vmem>>, vector<8x896xbf16>,
    %c0_29 = arith.constant 0 : index
    %c0_30 = arith.constant 0 : index
    %44 = vector.load %arg12[%c0_29, %c0_30] : memref<8x256xf32, #tpu.memory_space<vmem>>, vector<8x256xf32>
    tpu.vector_store %arg12[%c0_29, %c0_30], %13 {strides = array<i32>} : memref<8x256xf32, #tpu.memory_space<vmem>>, vector<8x256xf32>,
    return
  }
  func.func @transform_0(%arg0: i32) -> (i32, i32) {
    %c0_i32 = arith.constant 0 : i32
    %c0_i32_0 = arith.constant 0 : i32
    return %arg0, %c0_i32 : i32, i32
  }
  func.func @transform_1(%arg0: i32) -> (i32, i32) {
    %c0_i32 = arith.constant 0 : i32
    %c0_i32_0 = arith.constant 0 : i32
    return %arg0, %c0_i32 : i32, i32
  }
  func.func @transform_2(%arg0: i32) -> (i32, i32) {
    %c0_i32 = arith.constant 0 : i32
    %c0_i32_0 = arith.constant 0 : i32
    %c0_i32_1 = arith.constant 0 : i32
    return %c0_i32, %c0_i32_0 : i32, i32
  }
  func.func @transform_3(%arg0: i32) -> (i32, i32) {
    %c0_i32 = arith.constant 0 : i32
    %c0_i32_0 = arith.constant 0 : i32
    %c0_i32_1 = arith.constant 0 : i32
    return %c0_i32, %c0_i32_0 : i32, i32
  }
  func.func @transform_4(%arg0: i32) -> (i32, i32) {
    %c0_i32 = arith.constant 0 : i32
    %c0_i32_0 = arith.constant 0 : i32
    %c0_i32_1 = arith.constant 0 : i32
    return %c0_i32, %c0_i32_0 : i32, i32
  }
  func.func @transform_5(%arg0: i32) -> (i32, i32) {
    %c0_i32 = arith.constant 0 : i32
    %c0_i32_0 = arith.constant 0 : i32
    %c0_i32_1 = arith.constant 0 : i32
    return %c0_i32, %c0_i32_0 : i32, i32
  }
  func.func @transform_6(%arg0: i32) -> (i32, i32) {
    %c0_i32 = arith.constant 0 : i32
    %c0_i32_0 = arith.constant 0 : i32
    %c0_i32_1 = arith.constant 0 : i32
    return %c0_i32, %c0_i32_0 : i32, i32
  }
  func.func @transform_7(%arg0: i32) -> (i32, i32) {
    %c0_i32 = arith.constant 0 : i32
    %c0_i32_0 = arith.constant 0 : i32
    %c0_i32_1 = arith.constant 0 : i32
    return %c0_i32, %c0_i32_0 : i32, i32
  }
  func.func @transform_8(%arg0: i32) -> (i32, i32) {
    %c0_i32 = arith.constant 0 : i32
    %c0_i32_0 = arith.constant 0 : i32
    %c0_i32_1 = arith.constant 0 : i32
    return %c0_i32, %c0_i32_0 : i32, i32
  }
  func.func @transform_9(%arg0: i32) -> (i32, i32) {
    %c0_i32 = arith.constant 0 : i32
    %c0_i32_0 = arith.constant 0 : i32
    %c0_i32_1 = arith.constant 0 : i32
    return %c0_i32, %c0_i32_0 : i32, i32
  }
  func.func @transform_10(%arg0: i32) -> (i32, i32) {
    %c0_i32 = arith.constant 0 : i32
    %c0_i32_0 = arith.constant 0 : i32
    return %arg0, %c0_i32 : i32, i32
  }
  func.func @transform_11(%arg0: i32) -> (i32, i32) {
    %c0_i32 = arith.constant 0 : i32
    %c0_i32_0 = arith.constant 0 : i32
    return %arg0, %c0_i32 : i32, i32
  }
}

</mosaic_0001>

<llo_original>
// kernel: tpu_custom_call.1
$region0: #{tpu_custom_call.1}
  #allocation0 [shape = 'u32[]', space=smem, size = 0x4, offset = 0x4, fixed_abs, tag = 'smem constant byte address 0x4 - core index']
  #allocation1 [shape = 'u32[72,128]{1,0:T(1,128)}', space=vmem, size = 0x9000, scoped, tag = 'internal scratch']
  %s0 = inlined_call_operand.hbm [shape: bf16[8,896], index: 0, kind: input, shape index: {}]
  %s1 = inlined_call_operand.hbm [shape: f32[8,128], index: 1, kind: input, shape index: {}]
  %s2 = inlined_call_operand.hbm [shape: bf16[896,512], index: 2, kind: input, shape index: {}]
  %s3 = inlined_call_operand.hbm [shape: f32[1,512], index: 3, kind: input, shape index: {}]
  %s4 = inlined_call_operand.hbm [shape: bf16[512,256], index: 4, kind: input, shape index: {}]
  %s5 = inlined_call_operand.hbm [shape: f32[1,256], index: 5, kind: input, shape index: {}]
  %s6 = inlined_call_operand.hbm [shape: bf16[128,512], index: 6, kind: input, shape index: {}]
  %s7 = inlined_call_operand.hbm [shape: f32[1,512], index: 7, kind: input, shape index: {}]
  %s8 = inlined_call_operand.hbm [shape: bf16[512,896], index: 8, kind: input, shape index: {}]
  %s9 = inlined_call_operand.vmem [shape: f32[1,896], index: 9, kind: input, shape index: {}]
  %s10 = inlined_call_operand.hbm [shape: bf16[8,896], index: 10, kind: output, shape index: {0}]
  %s11 = inlined_call_operand.hbm [shape: f32[8,256], index: 11, kind: output, shape index: {1}]
  %12 = xla_tuple %s10, %s11
  %s13 = sld [smem:[#allocation0]]
  $region94: #{tpu_custom_call.1} parent=0
    _
  %s15 = ssub.s32 1, %s13
  %s16 = scalar_select 0, %s15, %s13
  $region1: #{tpu_custom_call.1} parent=0
    #allocation2 [shape = 'u8[14336]{0}', space=vmem, size = 0x3800, scoped, tag = 'input window, operand 0, single buffered']
    #allocation3 [shape = 's32[1]{0}', space=sflag, size = 0x4, scoped, tag = 'scoped memory for tpu_custom_call.1']
    #allocation4 [shape = 's32[1]{0}', space=sflag, size = 0x4, scoped, tag = 'scoped memory for tpu_custom_call.1']
    #allocation5 [shape = 'u8[4096]{0}', space=vmem, size = 0x1000, scoped, tag = 'input window, operand 1, single buffered']
    #allocation6 [shape = 's32[1]{0}', space=sflag, size = 0x4, scoped, tag = 'scoped memory for tpu_custom_call.1']
    #allocation7 [shape = 'u8[917504]{0}', space=vmem, size = 0xe0000, scoped, tag = 'input window, operand 2, single buffered']
    #allocation8 [shape = 'u8[2048]{0}', space=vmem, size = 0x800, scoped, tag = 'input window, operand 3, single buffered']
    #allocation9 [shape = 's32[1]{0}', space=sflag, size = 0x4, scoped, tag = 'scoped memory for tpu_custom_call.1']
    #allocation10 [shape = 'u8[262144]{0}', space=vmem, size = 0x40000, scoped, tag = 'input window, operand 4, single buffered']
    #allocation11 [shape = 'u8[1024]{0}', space=vmem, size = 0x400, scoped, tag = 'input window, operand 5, single buffered']
    #allocation12 [shape = 's32[1]{0}', space=sflag, size = 0x4, scoped, tag = 'scoped memory for tpu_custom_call.1']
    #allocation13 [shape = 'u8[131072]{0}', space=vmem, size = 0x20000, scoped, tag = 'input window, operand 6, single buffered']
    #allocation14 [shape = 'u8[2048]{0}', space=vmem, size = 0x800, scoped, tag = 'input window, operand 7, single buffered']
    #allocation15 [shape = 's32[1]{0}', space=sflag, size = 0x4, scoped, tag = 'scoped memory for tpu_custom_call.1']
    #allocation16 [shape = 'u8[917504]{0}', space=vmem, size = 0xe0000, scoped, tag = 'input window, operand 8, single buffered']
    #allocation17 [shape = 'u8[14336]{0}', space=vmem, size = 0x3800, scoped, tag = 'output window, operand 0, single buffered']
    #allocation18 [shape = 'u8[8192]{0}', space=vmem, size = 0x2000, scoped, tag = 'output window, operand 1, single buffered']
    #allocation19 [shape = 's32[1]{0}', space=sflag, size = 0x4, scoped, tag = 'scoped memory for tpu_custom_call.1']
    %17 = vsyncpa [#allocation3], 0
    %18 = vsyncpa [#allocation6], 0
    %19 = vsyncpa [#allocation9], 0
    %20 = vsyncpa [#allocation12], 0
    %21 = vsyncpa [#allocation15], 0
    %22 = vsyncpa [#allocation4], 0
    %23 = vsyncpa [#allocation19], 0
    // Predicated region
    $region2: #{tpu_custom_call.1} parent=1 // pred_check
      _
    $region3: #{tpu_custom_call.1} parent=1 // pred_check_branch
      %25 = sbr.rel (0) target = $region5
    $region4: #{tpu_custom_call.1} parent=1 // pred_region
      %27 = vsyncadd [#allocation3], 0
      %s29 = sshll.u32 %s0, 4
      %s30 = int_to_ptr.hbm [resolvable:$true] %s29
      %s31 = sshll.u32 [#allocation2], 4
      %s32 = int_to_ptr.vmem [resolvable:$true] %s31
      %34 = dma.hbm_to_vmem [thread:$0]  %s30, 448, %s32, [#allocation3]
    $region5: #{tpu_custom_call.1} parent=1 // pred_fallthru
      _
    // Predicated region
    $region6: #{tpu_custom_call.1} parent=1 // pred_check
      _
    $region7: #{tpu_custom_call.1} parent=1 // pred_check_branch
      %36 = sbr.rel (0) target = $region9
    $region8: #{tpu_custom_call.1} parent=1 // pred_region
      %38 = vsyncadd [#allocation6], 0
      %s40 = sshll.u32 %s1, 4
      %s41 = int_to_ptr.hbm [resolvable:$true] %s40
      %s42 = sshll.u32 [#allocation5], 4
      %s43 = int_to_ptr.vmem [resolvable:$true] %s42
      %45 = dma.hbm_to_vmem [thread:$0]  %s41, 128, %s43, [#allocation6]
    $region9: #{tpu_custom_call.1} parent=1 // pred_fallthru
      _
    // Predicated region
    $region10: #{tpu_custom_call.1} parent=1 // pred_check
      _
    $region11: #{tpu_custom_call.1} parent=1 // pred_check_branch
      %47 = sbr.rel (0) target = $region13
    $region12: #{tpu_custom_call.1} parent=1 // pred_region
      %49 = vsyncadd [#allocation6], 0
      %s50 = sshll.u32 %s2, 4
      %s51 = int_to_ptr.hbm [resolvable:$true] %s50
      %s52 = sshll.u32 [#allocation7], 4
      %s53 = int_to_ptr.vmem [resolvable:$true] %s52
      %58 = dma.hbm_to_vmem [thread:$0]  %s51, 28672, %s53, [#allocation6], 256, 256, 16
    $region13: #{tpu_custom_call.1} parent=1 // pred_fallthru
      _
    // Predicated region
    $region14: #{tpu_custom_call.1} parent=1 // pred_check
      _
    $region15: #{tpu_custom_call.1} parent=1 // pred_check_branch
      %60 = sbr.rel (0) target = $region17
    $region16: #{tpu_custom_call.1} parent=1 // pred_region
      %62 = vsyncadd [#allocation9], 0
      %s64 = sshll.u32 %s3, 4
      %s65 = int_to_ptr.hbm [resolvable:$true] %s64
      %s66 = sshll.u32 [#allocation8], 4
      %s67 = int_to_ptr.vmem [resolvable:$true] %s66
      %69 = dma.hbm_to_vmem [thread:$0]  %s65, 64, %s67, [#allocation9]
    $region17: #{tpu_custom_call.1} parent=1 // pred_fallthru
      _
    // Predicated region
    $region18: #{tpu_custom_call.1} parent=1 // pred_check
      _
    $region19: #{tpu_custom_call.1} parent=1 // pred_check_branch
      %71 = sbr.rel (0) target = $region21
    $region20: #{tpu_custom_call.1} parent=1 // pred_region
      %73 = vsyncadd [#allocation9], 0
      %s74 = sshll.u32 %s4, 4
      %s75 = int_to_ptr.hbm [resolvable:$true] %s74
      %s76 = sshll.u32 [#allocation10], 4
      %s77 = int_to_ptr.vmem [resolvable:$true] %s76
      %82 = dma.hbm_to_vmem [thread:$0]  %s75, 8192, %s77, [#allocation9], 128, 128, 8
    $region21: #{tpu_custom_call.1} parent=1 // pred_fallthru
      _
    // Predicated region
    $region22: #{tpu_custom_call.1} parent=1 // pred_check
      _
    $region23: #{tpu_custom_call.1} parent=1 // pred_check_branch
      %84 = sbr.rel (0) target = $region25
    $region24: #{tpu_custom_call.1} parent=1 // pred_region
      %86 = vsyncadd [#allocation12], 0
      %s88 = sshll.u32 %s5, 4
      %s89 = int_to_ptr.hbm [resolvable:$true] %s88
      %s90 = sshll.u32 [#allocation11], 4
      %s91 = int_to_ptr.vmem [resolvable:$true] %s90
      %93 = dma.hbm_to_vmem [thread:$0]  %s89, 32, %s91, [#allocation12]
    $region25: #{tpu_custom_call.1} parent=1 // pred_fallthru
      _
    // Predicated region
    $region26: #{tpu_custom_call.1} parent=1 // pred_check
      _
    $region27: #{tpu_custom_call.1} parent=1 // pred_check_branch
      %95 = sbr.rel (0) target = $region29
    $region28: #{tpu_custom_call.1} parent=1 // pred_region
      %97 = vsyncadd [#allocation12], 0
      %s98 = sshll.u32 %s6, 4
      %s99 = int_to_ptr.hbm [resolvable:$true] %s98
      %s100 = sshll.u32 [#allocation13], 4
      %s101 = int_to_ptr.vmem [resolvable:$true] %s100
      %106 = dma.hbm_to_vmem [thread:$0]  %s99, 4096, %s101, [#allocation12], 256, 256, 16
    $region29: #{tpu_custom_call.1} parent=1 // pred_fallthru
      _
    // Predicated region
    $region30: #{tpu_custom_call.1} parent=1 // pred_check
      _
    $region31: #{tpu_custom_call.1} parent=1 // pred_check_branch
      %108 = sbr.rel (0) target = $region33
    $region32: #{tpu_custom_call.1} parent=1 // pred_region
      %110 = vsyncadd [#allocation15], 0
      %s112 = sshll.u32 %s7, 4
      %s113 = int_to_ptr.hbm [resolvable:$true] %s112
      %s114 = sshll.u32 [#allocation14], 4
      %s115 = int_to_ptr.vmem [resolvable:$true] %s114
      %117 = dma.hbm_to_vmem [thread:$0]  %s113, 64, %s115, [#allocation15]
    $region33: #{tpu_custom_call.1} parent=1 // pred_fallthru
      _
    // Predicated region
    $region34: #{tpu_custom_call.1} parent=1 // pred_check
      _
    $region35: #{tpu_custom_call.1} parent=1 // pred_check_branch
      %119 = sbr.rel (0) target = $region37
    $region36: #{tpu_custom_call.1} parent=1 // pred_region
      %121 = vsyncadd [#allocation15], 0
      %s122 = sshll.u32 %s8, 4
      %s123 = int_to_ptr.hbm [resolvable:$true] %s122
      %s124 = sshll.u32 [#allocation16], 4
      %s125 = int_to_ptr.vmem [resolvable:$true] %s124
      %130 = dma.hbm_to_vmem [thread:$0]  %s123, 28672, %s125, [#allocation15], 448, 448, 28
    $region37: #{tpu_custom_call.1} parent=1 // pred_fallthru
      _
    // Predicated region
    $region38: #{tpu_custom_call.1} parent=1 // pred_check
      _
    $region39: #{tpu_custom_call.1} parent=1 // pred_check_branch
      %132 = sbr.rel (0) target = $region41
    $region40: #{tpu_custom_call.1} parent=1 // pred_region
      _
    $region41: #{tpu_custom_call.1} parent=1 // pred_fallthru
      _
    // Predicated region
    $region42: #{tpu_custom_call.1} parent=1 // pred_check
      _
    $region43: #{tpu_custom_call.1} parent=1 // pred_check_branch
      %134 = sbr.rel (0) target = $region45
    $region44: #{tpu_custom_call.1} parent=1 // pred_region
      %136 = dma.done [#allocation3], 448
    $region45: #{tpu_custom_call.1} parent=1 // pred_fallthru
      _
    // Predicated region
    $region46: #{tpu_custom_call.1} parent=1 // pred_check
      _
    $region47: #{tpu_custom_call.1} parent=1 // pred_check_branch
      %138 = sbr.rel (0) target = $region49
    $region48: #{tpu_custom_call.1} parent=1 // pred_region
      %140 = dma.done [#allocation6], 128
    $region49: #{tpu_custom_call.1} parent=1 // pred_fallthru
      _
    // Predicated region
    $region50: #{tpu_custom_call.1} parent=1 // pred_check
      _
    $region51: #{tpu_custom_call.1} parent=1 // pred_check_branch
      %142 = sbr.rel (0) target = $region53
    $region52: #{tpu_custom_call.1} parent=1 // pred_region
      %144 = dma.done [#allocation6], 28672
    $region53: #{tpu_custom_call.1} parent=1 // pred_fallthru
      _
    // Predicated region
    $region54: #{tpu_custom_call.1} parent=1 // pred_check
      _
    $region55: #{tpu_custom_call.1} parent=1 // pred_check_branch
      %146 = sbr.rel (0) target = $region57
    $region56: #{tpu_custom_call.1} parent=1 // pred_region
      %148 = dma.done [#allocation9], 64
    $region57: #{tpu_custom_call.1} parent=1 // pred_fallthru
      _
    // Predicated region
    $region58: #{tpu_custom_call.1} parent=1 // pred_check
      _
    $region59: #{tpu_custom_call.1} parent=1 // pred_check_branch
      %150 = sbr.rel (0) target = $region61
    $region60: #{tpu_custom_call.1} parent=1 // pred_region
      %152 = dma.done [#allocation9], 8192
    $region61: #{tpu_custom_call.1} parent=1 // pred_fallthru
      _
    // Predicated region
    $region62: #{tpu_custom_call.1} parent=1 // pred_check
      _
    $region63: #{tpu_custom_call.1} parent=1 // pred_check_branch
      %154 = sbr.rel (0) target = $region65
    $region64: #{tpu_custom_call.1} parent=1 // pred_region
      %156 = dma.done [#allocation12], 32
    $region65: #{tpu_custom_call.1} parent=1 // pred_fallthru
      _
    // Predicated region
    $region66: #{tpu_custom_call.1} parent=1 // pred_check
      _
    $region67: #{tpu_custom_call.1} parent=1 // pred_check_branch
      %158 = sbr.rel (0) target = $region69
    $region68: #{tpu_custom_call.1} parent=1 // pred_region
      %160 = dma.done [#allocation12], 4096
    $region69: #{tpu_custom_call.1} parent=1 // pred_fallthru
      _
    // Predicated region
    $region70: #{tpu_custom_call.1} parent=1 // pred_check
      _
    $region71: #{tpu_custom_call.1} parent=1 // pred_check_branch
      %162 = sbr.rel (0) target = $region73
    $region72: #{tpu_custom_call.1} parent=1 // pred_region
      %164 = dma.done [#allocation15], 64
    $region73: #{tpu_custom_call.1} parent=1 // pred_fallthru
      _
    // Predicated region
    $region74: #{tpu_custom_call.1} parent=1 // pred_check
      _
    $region75: #{tpu_custom_call.1} parent=1 // pred_check_branch
      %166 = sbr.rel (0) target = $region77
    $region76: #{tpu_custom_call.1} parent=1 // pred_region
      %168 = dma.done [#allocation15], 28672
    $region77: #{tpu_custom_call.1} parent=1 // pred_fallthru
      _
    %v169 = vld [vmem:[#allocation2] sm:$0xff]
    %v170 = vld [vmem:[#allocation2 + $0x8] sm:$0xff]
    %v171 = vld [vmem:[#allocation2 + $0x10] sm:$0xff]
    %v172 = vld [vmem:[#allocation2 + $0x18] sm:$0xf]
    %v173 = vld [vmem:[#allocation7] sm:$0xff]
    %v174 = vld [vmem:[#allocation7 + $0x8] sm:$0xff]
    %v175 = vld [vmem:[#allocation7 + $0x10] sm:$0xff]
    %v176 = vld [vmem:[#allocation7 + $0x18] sm:$0xff]
    %v177 = vld [vmem:[#allocation7 + $0x20] sm:$0xff]
    %v178 = vld [vmem:[#allocation7 + $0x28] sm:$0xff]
    %v179 = vld [vmem:[#allocation7 + $0x30] sm:$0xff]
    %v180 = vld [vmem:[#allocation7 + $0x38] sm:$0xff]
    %v181 = vld [vmem:[#allocation7 + $0x40] sm:$0xff]
    %v182 = vld [vmem:[#allocation7 + $0x48] sm:$0xff]
    %v183 = vld [vmem:[#allocation7 + $0x50] sm:$0xff]
    %v184 = vld [vmem:[#allocation7 + $0x58] sm:$0xff]
    %v185 = vld [vmem:[#allocation7 + $0x60] sm:$0xff]
    %v186 = vld [vmem:[#allocation7 + $0x68] sm:$0xff]
    %v187 = vld [vmem:[#allocation7 + $0x70] sm:$0xff]
    %v188 = vld [vmem:[#allocation7 + $0x78] sm:$0xff]
    %v189 = vld [vmem:[#allocation7 + $0x80] sm:$0xff]
    %v190 = vld [vmem:[#allocation7 + $0x88] sm:$0xff]
    %v191 = vld [vmem:[#allocation7 + $0x90] sm:$0xff]
    %v192 = vld [vmem:[#allocation7 + $0x98] sm:$0xff]
    %v193 = vld [vmem:[#allocation7 + $0xa0] sm:$0xff]
    %v194 = vld [vmem:[#allocation7 + $0xa8] sm:$0xff]
    %v195 = vld [vmem:[#allocation7 + $0xb0] sm:$0xff]
    %v196 = vld [vmem:[#allocation7 + $0xb8] sm:$0xff]
    %v197 = vld [vmem:[#allocation7 + $0xc0] sm:$0xff]
    %v198 = vld [vmem:[#allocation7 + $0xc8] sm:$0xff]
    %v199 = vld [vmem:[#allocation7 + $0xd0] sm:$0xff]
    %v200 = vld [vmem:[#allocation7 + $0xd8] sm:$0xff]
    %v201 = vld [vmem:[#allocation7 + $0xe0] sm:$0xff]
    %v202 = vld [vmem:[#allocation7 + $0xe8] sm:$0xff]
    %v203 = vld [vmem:[#allocation7 + $0xf0] sm:$0xff]
    %v204 = vld [vmem:[#allocation7 + $0xf8] sm:$0xff]
    %v205 = vld [vmem:[#allocation7 + $0x100] sm:$0xff]
    %v206 = vld [vmem:[#allocation7 + $0x108] sm:$0xff]
    %v207 = vld [vmem:[#allocation7 + $0x110] sm:$0xff]
    %v208 = vld [vmem:[#allocation7 + $0x118] sm:$0xff]
    %v209 = vld [vmem:[#allocation7 + $0x120] sm:$0xff]
    %v210 = vld [vmem:[#allocation7 + $0x128] sm:$0xff]
    %v211 = vld [vmem:[#allocation7 + $0x130] sm:$0xff]
    %v212 = vld [vmem:[#allocation7 + $0x138] sm:$0xff]
    %v213 = vld [vmem:[#allocation7 + $0x140] sm:$0xff]
    %v214 = vld [vmem:[#allocation7 + $0x148] sm:$0xff]
    %v215 = vld [vmem:[#allocation7 + $0x150] sm:$0xff]
    %v216 = vld [vmem:[#allocation7 + $0x158] sm:$0xff]
    %v217 = vld [vmem:[#allocation7 + $0x160] sm:$0xff]
    %v218 = vld [vmem:[#allocation7 + $0x168] sm:$0xff]
    %v219 = vld [vmem:[#allocation7 + $0x170] sm:$0xff]
    %v220 = vld [vmem:[#allocation7 + $0x178] sm:$0xff]
    %v221 = vld [vmem:[#allocation7 + $0x180] sm:$0xff]
    %v222 = vld [vmem:[#allocation7 + $0x188] sm:$0xff]
    %v223 = vld [vmem:[#allocation7 + $0x190] sm:$0xff]
    %v224 = vld [vmem:[#allocation7 + $0x198] sm:$0xff]
    %v225 = vld [vmem:[#allocation7 + $0x1a0] sm:$0xff]
    %v226 = vld [vmem:[#allocation7 + $0x1a8] sm:$0xff]
    %v227 = vld [vmem:[#allocation7 + $0x1b0] sm:$0xff]
    %v228 = vld [vmem:[#allocation7 + $0x1b8] sm:$0xff]
    %v229 = vld [vmem:[#allocation7 + $0x1c0] sm:$0xff]
    %v230 = vld [vmem:[#allocation7 + $0x1c8] sm:$0xff]
    %v231 = vld [vmem:[#allocation7 + $0x1d0] sm:$0xff]
    %v232 = vld [vmem:[#allocation7 + $0x1d8] sm:$0xff]
    %v233 = vld [vmem:[#allocation7 + $0x1e0] sm:$0xff]
    %v234 = vld [vmem:[#allocation7 + $0x1e8] sm:$0xff]
    %v235 = vld [vmem:[#allocation7 + $0x1f0] sm:$0xff]
    %v236 = vld [vmem:[#allocation7 + $0x1f8] sm:$0xff]
    %v237 = vld [vmem:[#allocation7 + $0x200] sm:$0xff]
    %v238 = vld [vmem:[#allocation7 + $0x208] sm:$0xff]
    %v239 = vld [vmem:[#allocation7 + $0x210] sm:$0xff]
    %v240 = vld [vmem:[#allocation7 + $0x218] sm:$0xff]
    %v241 = vld [vmem:[#allocation7 + $0x220] sm:$0xff]
    %v242 = vld [vmem:[#allocation7 + $0x228] sm:$0xff]
    %v243 = vld [vmem:[#allocation7 + $0x230] sm:$0xff]
    %v244 = vld [vmem:[#allocation7 + $0x238] sm:$0xff]
    %v245 = vld [vmem:[#allocation7 + $0x240] sm:$0xff]
    %v246 = vld [vmem:[#allocation7 + $0x248] sm:$0xff]
    %v247 = vld [vmem:[#allocation7 + $0x250] sm:$0xff]
    %v248 = vld [vmem:[#allocation7 + $0x258] sm:$0xff]
    %v249 = vld [vmem:[#allocation7 + $0x260] sm:$0xff]
    %v250 = vld [vmem:[#allocation7 + $0x268] sm:$0xff]
    %v251 = vld [vmem:[#allocation7 + $0x270] sm:$0xff]
    %v252 = vld [vmem:[#allocation7 + $0x278] sm:$0xff]
    %v253 = vld [vmem:[#allocation7 + $0x280] sm:$0xff]
    %v254 = vld [vmem:[#allocation7 + $0x288] sm:$0xff]
    %v255 = vld [vmem:[#allocation7 + $0x290] sm:$0xff]
    %v256 = vld [vmem:[#allocation7 + $0x298] sm:$0xff]
    %v257 = vld [vmem:[#allocation7 + $0x2a0] sm:$0xff]
    %v258 = vld [vmem:[#allocation7 + $0x2a8] sm:$0xff]
    %v259 = vld [vmem:[#allocation7 + $0x2b0] sm:$0xff]
    %v260 = vld [vmem:[#allocation7 + $0x2b8] sm:$0xff]
    %v261 = vld [vmem:[#allocation7 + $0x2c0] sm:$0xff]
    %v262 = vld [vmem:[#allocation7 + $0x2c8] sm:$0xff]
    %v263 = vld [vmem:[#allocation7 + $0x2d0] sm:$0xff]
    %v264 = vld [vmem:[#allocation7 + $0x2d8] sm:$0xff]
    %v265 = vld [vmem:[#allocation7 + $0x2e0] sm:$0xff]
    %v266 = vld [vmem:[#allocation7 + $0x2e8] sm:$0xff]
    %v267 = vld [vmem:[#allocation7 + $0x2f0] sm:$0xff]
    %v268 = vld [vmem:[#allocation7 + $0x2f8] sm:$0xff]
    %v269 = vld [vmem:[#allocation7 + $0x300] sm:$0xff]
    %v270 = vld [vmem:[#allocation7 + $0x308] sm:$0xff]
    %v271 = vld [vmem:[#allocation7 + $0x310] sm:$0xff]
    %v272 = vld [vmem:[#allocation7 + $0x318] sm:$0xff]
    %v273 = vld [vmem:[#allocation7 + $0x320] sm:$0xff]
    %v274 = vld [vmem:[#allocation7 + $0x328] sm:$0xff]
    %v275 = vld [vmem:[#allocation7 + $0x330] sm:$0xff]
    %v276 = vld [vmem:[#allocation7 + $0x338] sm:$0xff]
    %v277 = vld [vmem:[#allocation7 + $0x340] sm:$0xff]
    %v278 = vld [vmem:[#allocation7 + $0x348] sm:$0xff]
    %v279 = vld [vmem:[#allocation7 + $0x350] sm:$0xff]
    %v280 = vld [vmem:[#allocation7 + $0x358] sm:$0xff]
    %v281 = vld [vmem:[#allocation7 + $0x360] sm:$0xff]
    %v282 = vld [vmem:[#allocation7 + $0x368] sm:$0xff]
    %v283 = vld [vmem:[#allocation7 + $0x370] sm:$0xff]
    %v284 = vld [vmem:[#allocation7 + $0x378] sm:$0xff]
    %v285 = vld [vmem:[#allocation7 + $0x380] sm:$0xff]
    %v286 = vld [vmem:[#allocation7 + $0x388] sm:$0xff]
    %v287 = vld [vmem:[#allocation7 + $0x390] sm:$0xff]
    %v288 = vld [vmem:[#allocation7 + $0x398] sm:$0xff]
    %v289 = vld [vmem:[#allocation7 + $0x3a0] sm:$0xff]
    %v290 = vld [vmem:[#allocation7 + $0x3a8] sm:$0xff]
    %v291 = vld [vmem:[#allocation7 + $0x3b0] sm:$0xff]
    %v292 = vld [vmem:[#allocation7 + $0x3b8] sm:$0xff]
    %v293 = vld [vmem:[#allocation7 + $0x3c0] sm:$0xff]
    %v294 = vld [vmem:[#allocation7 + $0x3c8] sm:$0xff]
    %v295 = vld [vmem:[#allocation7 + $0x3d0] sm:$0xff]
    %v296 = vld [vmem:[#allocation7 + $0x3d8] sm:$0xff]
    %v297 = vld [vmem:[#allocation7 + $0x3e0] sm:$0xff]
    %v298 = vld [vmem:[#allocation7 + $0x3e8] sm:$0xff]
    %v299 = vld [vmem:[#allocation7 + $0x3f0] sm:$0xff]
    %v300 = vld [vmem:[#allocation7 + $0x3f8] sm:$0xff]
    %v301 = vld [vmem:[#allocation7 + $0x400] sm:$0xff]
    %v302 = vld [vmem:[#allocation7 + $0x408] sm:$0xff]
    %v303 = vld [vmem:[#allocation7 + $0x410] sm:$0xff]
    %v304 = vld [vmem:[#allocation7 + $0x418] sm:$0xff]
    %v305 = vld [vmem:[#allocation7 + $0x420] sm:$0xff]
    %v306 = vld [vmem:[#allocation7 + $0x428] sm:$0xff]
    %v307 = vld [vmem:[#allocation7 + $0x430] sm:$0xff]
    %v308 = vld [vmem:[#allocation7 + $0x438] sm:$0xff]
    %v309 = vld [vmem:[#allocation7 + $0x440] sm:$0xff]
    %v310 = vld [vmem:[#allocation7 + $0x448] sm:$0xff]
    %v311 = vld [vmem:[#allocation7 + $0x450] sm:$0xff]
    %v312 = vld [vmem:[#allocation7 + $0x458] sm:$0xff]
    %v313 = vld [vmem:[#allocation7 + $0x460] sm:$0xff]
    %v314 = vld [vmem:[#allocation7 + $0x468] sm:$0xff]
    %v315 = vld [vmem:[#allocation7 + $0x470] sm:$0xff]
    %v316 = vld [vmem:[#allocation7 + $0x478] sm:$0xff]
    %v317 = vld [vmem:[#allocation7 + $0x480] sm:$0xff]
    %v318 = vld [vmem:[#allocation7 + $0x488] sm:$0xff]
    %v319 = vld [vmem:[#allocation7 + $0x490] sm:$0xff]
    %v320 = vld [vmem:[#allocation7 + $0x498] sm:$0xff]
    %v321 = vld [vmem:[#allocation7 + $0x4a0] sm:$0xff]
    %v322 = vld [vmem:[#allocation7 + $0x4a8] sm:$0xff]
    %v323 = vld [vmem:[#allocation7 + $0x4b0] sm:$0xff]
    %v324 = vld [vmem:[#allocation7 + $0x4b8] sm:$0xff]
    %v325 = vld [vmem:[#allocation7 + $0x4c0] sm:$0xff]
    %v326 = vld [vmem:[#allocation7 + $0x4c8] sm:$0xff]
    %v327 = vld [vmem:[#allocation7 + $0x4d0] sm:$0xff]
    %v328 = vld [vmem:[#allocation7 + $0x4d8] sm:$0xff]
    %v329 = vld [vmem:[#allocation7 + $0x4e0] sm:$0xff]
    %v330 = vld [vmem:[#allocation7 + $0x4e8] sm:$0xff]
    %v331 = vld [vmem:[#allocation7 + $0x4f0] sm:$0xff]
    %v332 = vld [vmem:[#allocation7 + $0x4f8] sm:$0xff]
    %v333 = vld [vmem:[#allocation7 + $0x500] sm:$0xff]
    %v334 = vld [vmem:[#allocation7 + $0x508] sm:$0xff]
    %v335 = vld [vmem:[#allocation7 + $0x510] sm:$0xff]
    %v336 = vld [vmem:[#allocation7 + $0x518] sm:$0xff]
    %v337 = vld [vmem:[#allocation7 + $0x520] sm:$0xff]
    %v338 = vld [vmem:[#allocation7 + $0x528] sm:$0xff]
    %v339 = vld [vmem:[#allocation7 + $0x530] sm:$0xff]
    %v340 = vld [vmem:[#allocation7 + $0x538] sm:$0xff]
    %v341 = vld [vmem:[#allocation7 + $0x540] sm:$0xff]
    %v342 = vld [vmem:[#allocation7 + $0x548] sm:$0xff]
    %v343 = vld [vmem:[#allocation7 + $0x550] sm:$0xff]
    %v344 = vld [vmem:[#allocation7 + $0x558] sm:$0xff]
    %v345 = vld [vmem:[#allocation7 + $0x560] sm:$0xff]
    %v346 = vld [vmem:[#allocation7 + $0x568] sm:$0xff]
    %v347 = vld [vmem:[#allocation7 + $0x570] sm:$0xff]
    %v348 = vld [vmem:[#allocation7 + $0x578] sm:$0xff]
    %v349 = vld [vmem:[#allocation7 + $0x580] sm:$0xff]
    %v350 = vld [vmem:[#allocation7 + $0x588] sm:$0xff]
    %v351 = vld [vmem:[#allocation7 + $0x590] sm:$0xff]
    %v352 = vld [vmem:[#allocation7 + $0x598] sm:$0xff]
    %v353 = vld [vmem:[#allocation7 + $0x5a0] sm:$0xff]
    %v354 = vld [vmem:[#allocation7 + $0x5a8] sm:$0xff]
    %v355 = vld [vmem:[#allocation7 + $0x5b0] sm:$0xff]
    %v356 = vld [vmem:[#allocation7 + $0x5b8] sm:$0xff]
    %v357 = vld [vmem:[#allocation7 + $0x5c0] sm:$0xff]
    %v358 = vld [vmem:[#allocation7 + $0x5c8] sm:$0xff]
    %v359 = vld [vmem:[#allocation7 + $0x5d0] sm:$0xff]
    %v360 = vld [vmem:[#allocation7 + $0x5d8] sm:$0xff]
    %v361 = vld [vmem:[#allocation7 + $0x5e0] sm:$0xff]
    %v362 = vld [vmem:[#allocation7 + $0x5e8] sm:$0xff]
    %v363 = vld [vmem:[#allocation7 + $0x5f0] sm:$0xff]
    %v364 = vld [vmem:[#allocation7 + $0x5f8] sm:$0xff]
    %v365 = vld [vmem:[#allocation7 + $0x600] sm:$0xff]
    %v366 = vld [vmem:[#allocation7 + $0x608] sm:$0xff]
    %v367 = vld [vmem:[#allocation7 + $0x610] sm:$0xff]
    %v368 = vld [vmem:[#allocation7 + $0x618] sm:$0xff]
    %v369 = vld [vmem:[#allocation7 + $0x620] sm:$0xff]
    %v370 = vld [vmem:[#allocation7 + $0x628] sm:$0xff]
    %v371 = vld [vmem:[#allocation7 + $0x630] sm:$0xff]
    %v372 = vld [vmem:[#allocation7 + $0x638] sm:$0xff]
    %v373 = vld [vmem:[#allocation7 + $0x640] sm:$0xff]
    %v374 = vld [vmem:[#allocation7 + $0x648] sm:$0xff]
    %v375 = vld [vmem:[#allocation7 + $0x650] sm:$0xff]
    %v376 = vld [vmem:[#allocation7 + $0x658] sm:$0xff]
    %v377 = vld [vmem:[#allocation7 + $0x660] sm:$0xff]
    %v378 = vld [vmem:[#allocation7 + $0x668] sm:$0xff]
    %v379 = vld [vmem:[#allocation7 + $0x670] sm:$0xff]
    %v380 = vld [vmem:[#allocation7 + $0x678] sm:$0xff]
    %v381 = vld [vmem:[#allocation7 + $0x680] sm:$0xff]
    %v382 = vld [vmem:[#allocation7 + $0x688] sm:$0xff]
    %v383 = vld [vmem:[#allocation7 + $0x690] sm:$0xff]
    %v384 = vld [vmem:[#allocation7 + $0x698] sm:$0xff]
    %v385 = vld [vmem:[#allocation7 + $0x6a0] sm:$0xff]
    %v386 = vld [vmem:[#allocation7 + $0x6a8] sm:$0xff]
    %v387 = vld [vmem:[#allocation7 + $0x6b0] sm:$0xff]
    %v388 = vld [vmem:[#allocation7 + $0x6b8] sm:$0xff]
    %v389 = vld [vmem:[#allocation7 + $0x6c0] sm:$0xff]
    %v390 = vld [vmem:[#allocation7 + $0x6c8] sm:$0xff]
    %v391 = vld [vmem:[#allocation7 + $0x6d0] sm:$0xff]
    %v392 = vld [vmem:[#allocation7 + $0x6d8] sm:$0xff]
    %v393 = vld [vmem:[#allocation7 + $0x6e0] sm:$0xff]
    %v394 = vld [vmem:[#allocation7 + $0x6e8] sm:$0xff]
    %v395 = vld [vmem:[#allocation7 + $0x6f0] sm:$0xff]
    %v396 = vld [vmem:[#allocation7 + $0x6f8] sm:$0xff]
    %v397 = vld [vmem:[#allocation8] sm:$0xf]
    %v399 = vperm.slane %v397, 0
    %v400 = vperm.slane %v397, 1
    %v401 = vperm.slane %v397, 2
    %v402 = vperm.slane %v397, 3
    %v411 = vunpack.c.l.b16 %v169
    %v412 = vunpack.c.h.b16 %v169
    %v413 = vunpack.c.l.b16 %v170
    %v414 = vunpack.c.h.b16 %v170
    %v415 = vunpack.c.l.b16 %v171
    %v416 = vunpack.c.h.b16 %v171
    %v417 = vunpack.c.l.b16 %v172
    %v418 = vpack.c.b16 %v411, %v411
    %v419 = vpack.c.b16 %v412, %v412
    %v420 = vpack.c.b16 %v413, %v413
    %v421 = vpack.c.b16 %v414, %v414
    %v422 = vpack.c.b16 %v415, %v415
    %v423 = vpack.c.b16 %v416, %v416
    %v424 = vpack.c.b16 %v417, %v417
    %v656 = vunpack.c.l.b16 %v173
    %v657 = vunpack.c.h.b16 %v173
    %v658 = vunpack.c.l.b16 %v174
    %v659 = vunpack.c.h.b16 %v174
    %v660 = vunpack.c.l.b16 %v175
    %v661 = vunpack.c.h.b16 %v175
    %v662 = vunpack.c.l.b16 %v176
    %v663 = vunpack.c.h.b16 %v176
    %v664 = vunpack.c.l.b16 %v177
    %v665 = vunpack.c.h.b16 %v177
    %v666 = vunpack.c.l.b16 %v178
    %v667 = vunpack.c.h.b16 %v178
    %v668 = vunpack.c.l.b16 %v179
    %v669 = vunpack.c.h.b16 %v179
    %v670 = vunpack.c.l.b16 %v180
    %v671 = vunpack.c.h.b16 %v180
    %v672 = vunpack.c.l.b16 %v181
    %v673 = vunpack.c.h.b16 %v181
    %v674 = vunpack.c.l.b16 %v182
    %v675 = vunpack.c.h.b16 %v182
    %v676 = vunpack.c.l.b16 %v183
    %v677 = vunpack.c.h.b16 %v183
    %v678 = vunpack.c.l.b16 %v184
    %v679 = vunpack.c.h.b16 %v184
    %v680 = vunpack.c.l.b16 %v185
    %v681 = vunpack.c.h.b16 %v185
    %v682 = vunpack.c.l.b16 %v186
    %v683 = vunpack.c.h.b16 %v186
    %v684 = vunpack.c.l.b16 %v187
    %v685 = vunpack.c.h.b16 %v187
    %v686 = vunpack.c.l.b16 %v188
    %v687 = vunpack.c.h.b16 %v188
    %v688 = vunpack.c.l.b16 %v189
    %v689 = vunpack.c.h.b16 %v189
    %v690 = vunpack.c.l.b16 %v190
    %v691 = vunpack.c.h.b16 %v190
    %v692 = vunpack.c.l.b16 %v191
    %v693 = vunpack.c.h.b16 %v191
    %v694 = vunpack.c.l.b16 %v192
    %v695 = vunpack.c.h.b16 %v192
    %v696 = vunpack.c.l.b16 %v193
    %v697 = vunpack.c.h.b16 %v193
    %v698 = vunpack.c.l.b16 %v194
    %v699 = vunpack.c.h.b16 %v194
    %v700 = vunpack.c.l.b16 %v195
    %v701 = vunpack.c.h.b16 %v195
    %v702 = vunpack.c.l.b16 %v196
    %v703 = vunpack.c.h.b16 %v196
    %v704 = vunpack.c.l.b16 %v197
    %v705 = vunpack.c.h.b16 %v197
    %v706 = vunpack.c.l.b16 %v198
    %v707 = vunpack.c.h.b16 %v198
    %v708 = vunpack.c.l.b16 %v199
    %v709 = vunpack.c.h.b16 %v199
    %v710 = vunpack.c.l.b16 %v200
    %v711 = vunpack.c.h.b16 %v200
    %v712 = vunpack.c.l.b16 %v201
    %v713 = vunpack.c.h.b16 %v201
    %v714 = vunpack.c.l.b16 %v202
    %v715 = vunpack.c.h.b16 %v202
    %v716 = vunpack.c.l.b16 %v203
    %v717 = vunpack.c.h.b16 %v203
    %v718 = vunpack.c.l.b16 %v204
    %v719 = vunpack.c.h.b16 %v204
    %v720 = vunpack.c.l.b16 %v205
    %v721 = vunpack.c.h.b16 %v205
    %v722 = vunpack.c.l.b16 %v206
    %v723 = vunpack.c.h.b16 %v206
    %v724 = vunpack.c.l.b16 %v207
    %v725 = vunpack.c.h.b16 %v207
    %v726 = vunpack.c.l.b16 %v208
    %v727 = vunpack.c.h.b16 %v208
    %v728 = vunpack.c.l.b16 %v209
    %v729 = vunpack.c.h.b16 %v209
    %v730 = vunpack.c.l.b16 %v210
    %v731 = vunpack.c.h.b16 %v210
    %v732 = vunpack.c.l.b16 %v211
    %v733 = vunpack.c.h.b16 %v211
    %v734 = vunpack.c.l.b16 %v212
    %v735 = vunpack.c.h.b16 %v212
    %v736 = vunpack.c.l.b16 %v213
    %v737 = vunpack.c.h.b16 %v213
    %v738 = vunpack.c.l.b16 %v214
    %v739 = vunpack.c.h.b16 %v214
    %v740 = vunpack.c.l.b16 %v215
    %v741 = vunpack.c.h.b16 %v215
    %v742 = vunpack.c.l.b16 %v216
    %v743 = vunpack.c.h.b16 %v216
    %v744 = vunpack.c.l.b16 %v217
    %v745 = vunpack.c.h.b16 %v217
    %v746 = vunpack.c.l.b16 %v218
    %v747 = vunpack.c.h.b16 %v218
    %v748 = vunpack.c.l.b16 %v219
    %v749 = vunpack.c.h.b16 %v219
    %v750 = vunpack.c.l.b16 %v220
    %v751 = vunpack.c.h.b16 %v220
    %v752 = vunpack.c.l.b16 %v221
    %v753 = vunpack.c.h.b16 %v221
    %v754 = vunpack.c.l.b16 %v222
    %v755 = vunpack.c.h.b16 %v222
    %v756 = vunpack.c.l.b16 %v223
    %v757 = vunpack.c.h.b16 %v223
    %v758 = vunpack.c.l.b16 %v224
    %v759 = vunpack.c.h.b16 %v224
    %v760 = vunpack.c.l.b16 %v225
    %v761 = vunpack.c.h.b16 %v225
    %v762 = vunpack.c.l.b16 %v226
    %v763 = vunpack.c.h.b16 %v226
    %v764 = vunpack.c.l.b16 %v227
    %v765 = vunpack.c.h.b16 %v227
    %v766 = vunpack.c.l.b16 %v228
    %v767 = vunpack.c.h.b16 %v228
    %v768 = vunpack.c.l.b16 %v229
    %v769 = vunpack.c.h.b16 %v229
    %v770 = vunpack.c.l.b16 %v230
    %v771 = vunpack.c.h.b16 %v230
    %v772 = vunpack.c.l.b16 %v231
    %v773 = vunpack.c.h.b16 %v231
    %v774 = vunpack.c.l.b16 %v232
    %v775 = vunpack.c.h.b16 %v232
    %v776 = vunpack.c.l.b16 %v233
    %v777 = vunpack.c.h.b16 %v233
    %v778 = vunpack.c.l.b16 %v234
    %v779 = vunpack.c.h.b16 %v234
    %v780 = vunpack.c.l.b16 %v235
    %v781 = vunpack.c.h.b16 %v235
    %v782 = vunpack.c.l.b16 %v236
    %v783 = vunpack.c.h.b16 %v236
    %v784 = vunpack.c.l.b16 %v237
    %v785 = vunpack.c.h.b16 %v237
    %v786 = vunpack.c.l.b16 %v238
    %v787 = vunpack.c.h.b16 %v238
    %v788 = vunpack.c.l.b16 %v239
    %v789 = vunpack.c.h.b16 %v239
    %v790 = vunpack.c.l.b16 %v240
    %v791 = vunpack.c.h.b16 %v240
    %v792 = vunpack.c.l.b16 %v241
    %v793 = vunpack.c.h.b16 %v241
    %v794 = vunpack.c.l.b16 %v242
    %v795 = vunpack.c.h.b16 %v242
    %v796 = vunpack.c.l.b16 %v243
    %v797 = vunpack.c.h.b16 %v243
    %v798 = vunpack.c.l.b16 %v244
    %v799 = vunpack.c.h.b16 %v244
    %v800 = vunpack.c.l.b16 %v245
    %v801 = vunpack.c.h.b16 %v245
    %v802 = vunpack.c.l.b16 %v246
    %v803 = vunpack.c.h.b16 %v246
    %v804 = vunpack.c.l.b16 %v247
    %v805 = vunpack.c.h.b16 %v247
    %v806 = vunpack.c.l.b16 %v248
    %v807 = vunpack.c.h.b16 %v248
    %v808 = vunpack.c.l.b16 %v249
    %v809 = vunpack.c.h.b16 %v249
    %v810 = vunpack.c.l.b16 %v250
    %v811 = vunpack.c.h.b16 %v250
    %v812 = vunpack.c.l.b16 %v251
    %v813 = vunpack.c.h.b16 %v251
    %v814 = vunpack.c.l.b16 %v252
    %v815 = vunpack.c.h.b16 %v252
    %v816 = vunpack.c.l.b16 %v253
    %v817 = vunpack.c.h.b16 %v253
    %v818 = vunpack.c.l.b16 %v254
    %v819 = vunpack.c.h.b16 %v254
    %v820 = vunpack.c.l.b16 %v255
    %v821 = vunpack.c.h.b16 %v255
    %v822 = vunpack.c.l.b16 %v256
    %v823 = vunpack.c.h.b16 %v256
    %v824 = vunpack.c.l.b16 %v257
    %v825 = vunpack.c.h.b16 %v257
    %v826 = vunpack.c.l.b16 %v258
    %v827 = vunpack.c.h.b16 %v258
    %v828 = vunpack.c.l.b16 %v259
    %v829 = vunpack.c.h.b16 %v259
    %v830 = vunpack.c.l.b16 %v260
    %v831 = vunpack.c.h.b16 %v260
    %v832 = vunpack.c.l.b16 %v261
    %v833 = vunpack.c.h.b16 %v261
    %v834 = vunpack.c.l.b16 %v262
    %v835 = vunpack.c.h.b16 %v262
    %v836 = vunpack.c.l.b16 %v263
    %v837 = vunpack.c.h.b16 %v263
    %v838 = vunpack.c.l.b16 %v264
    %v839 = vunpack.c.h.b16 %v264
    %v840 = vunpack.c.l.b16 %v265
    %v841 = vunpack.c.h.b16 %v265
    %v842 = vunpack.c.l.b16 %v266
    %v843 = vunpack.c.h.b16 %v266
    %v844 = vunpack.c.l.b16 %v267
    %v845 = vunpack.c.h.b16 %v267
    %v846 = vunpack.c.l.b16 %v268
    %v847 = vunpack.c.h.b16 %v268
    %v848 = vunpack.c.l.b16 %v269
    %v849 = vunpack.c.h.b16 %v269
    %v850 = vunpack.c.l.b16 %v270
    %v851 = vunpack.c.h.b16 %v270
    %v852 = vunpack.c.l.b16 %v271
    %v853 = vunpack.c.h.b16 %v271
    %v854 = vunpack.c.l.b16 %v272
    %v855 = vunpack.c.h.b16 %v272
    %v856 = vunpack.c.l.b16 %v273
    %v857 = vunpack.c.h.b16 %v273
    %v858 = vunpack.c.l.b16 %v274
    %v859 = vunpack.c.h.b16 %v274
    %v860 = vunpack.c.l.b16 %v275
    %v861 = vunpack.c.h.b16 %v275
    %v862 = vunpack.c.l.b16 %v276
    %v863 = vunpack.c.h.b16 %v276
    %v864 = vunpack.c.l.b16 %v277
    %v865 = vunpack.c.h.b16 %v277
    %v866 = vunpack.c.l.b16 %v278
    %v867 = vunpack.c.h.b16 %v278
    %v868 = vunpack.c.l.b16 %v279
    %v869 = vunpack.c.h.b16 %v279
    %v870 = vunpack.c.l.b16 %v280
    %v871 = vunpack.c.h.b16 %v280
    %v872 = vunpack.c.l.b16 %v281
    %v873 = vunpack.c.h.b16 %v281
    %v874 = vunpack.c.l.b16 %v282
    %v875 = vunpack.c.h.b16 %v282
    %v876 = vunpack.c.l.b16 %v283
    %v877 = vunpack.c.h.b16 %v283
    %v878 = vunpack.c.l.b16 %v284
    %v879 = vunpack.c.h.b16 %v284
    %v880 = vunpack.c.l.b16 %v285
    %v881 = vunpack.c.h.b16 %v285
    %v882 = vunpack.c.l.b16 %v286
    %v883 = vunpack.c.h.b16 %v286
    %v884 = vunpack.c.l.b16 %v287
    %v885 = vunpack.c.h.b16 %v287
    %v886 = vunpack.c.l.b16 %v288
    %v887 = vunpack.c.h.b16 %v288
    %v888 = vunpack.c.l.b16 %v289
    %v889 = vunpack.c.h.b16 %v289
    %v890 = vunpack.c.l.b16 %v290
    %v891 = vunpack.c.h.b16 %v290
    %v892 = vunpack.c.l.b16 %v291
    %v893 = vunpack.c.h.b16 %v291
    %v894 = vunpack.c.l.b16 %v292
    %v895 = vunpack.c.h.b16 %v292
    %v896 = vunpack.c.l.b16 %v293
    %v897 = vunpack.c.h.b16 %v293
    %v898 = vunpack.c.l.b16 %v294
    %v899 = vunpack.c.h.b16 %v294
    %v900 = vunpack.c.l.b16 %v295
    %v901 = vunpack.c.h.b16 %v295
    %v902 = vunpack.c.l.b16 %v296
    %v903 = vunpack.c.h.b16 %v296
    %v904 = vunpack.c.l.b16 %v297
    %v905 = vunpack.c.h.b16 %v297
    %v906 = vunpack.c.l.b16 %v298
    %v907 = vunpack.c.h.b16 %v298
    %v908 = vunpack.c.l.b16 %v299
    %v909 = vunpack.c.h.b16 %v299
    %v910 = vunpack.c.l.b16 %v300
    %v911 = vunpack.c.h.b16 %v300
    %v912 = vunpack.c.l.b16 %v301
    %v913 = vunpack.c.h.b16 %v301
    %v914 = vunpack.c.l.b16 %v302
    %v915 = vunpack.c.h.b16 %v302
    %v916 = vunpack.c.l.b16 %v303
    %v917 = vunpack.c.h.b16 %v303
    %v918 = vunpack.c.l.b16 %v304
    %v919 = vunpack.c.h.b16 %v304
    %v920 = vunpack.c.l.b16 %v305
    %v921 = vunpack.c.h.b16 %v305
    %v922 = vunpack.c.l.b16 %v306
    %v923 = vunpack.c.h.b16 %v306
    %v924 = vunpack.c.l.b16 %v307
    %v925 = vunpack.c.h.b16 %v307
    %v926 = vunpack.c.l.b16 %v308
    %v927 = vunpack.c.h.b16 %v308
    %v928 = vunpack.c.l.b16 %v309
    %v929 = vunpack.c.h.b16 %v309
    %v930 = vunpack.c.l.b16 %v310
    %v931 = vunpack.c.h.b16 %v310
    %v932 = vunpack.c.l.b16 %v311
    %v933 = vunpack.c.h.b16 %v311
    %v934 = vunpack.c.l.b16 %v312
    %v935 = vunpack.c.h.b16 %v312
    %v936 = vunpack.c.l.b16 %v313
    %v937 = vunpack.c.h.b16 %v313
    %v938 = vunpack.c.l.b16 %v314
    %v939 = vunpack.c.h.b16 %v314
    %v940 = vunpack.c.l.b16 %v315
    %v941 = vunpack.c.h.b16 %v315
    %v942 = vunpack.c.l.b16 %v316
    %v943 = vunpack.c.h.b16 %v316
    %v944 = vunpack.c.l.b16 %v317
    %v945 = vunpack.c.h.b16 %v317
    %v946 = vunpack.c.l.b16 %v318
    %v947 = vunpack.c.h.b16 %v318
    %v948 = vunpack.c.l.b16 %v319
    %v949 = vunpack.c.h.b16 %v319
    %v950 = vunpack.c.l.b16 %v320
    %v951 = vunpack.c.h.b16 %v320
    %v952 = vunpack.c.l.b16 %v321
    %v953 = vunpack.c.h.b16 %v321
    %v954 = vunpack.c.l.b16 %v322
    %v955 = vunpack.c.h.b16 %v322
    %v956 = vunpack.c.l.b16 %v323
    %v957 = vunpack.c.h.b16 %v323
    %v958 = vunpack.c.l.b16 %v324
    %v959 = vunpack.c.h.b16 %v324
    %v960 = vunpack.c.l.b16 %v325
    %v961 = vunpack.c.h.b16 %v325
    %v962 = vunpack.c.l.b16 %v326
    %v963 = vunpack.c.h.b16 %v326
    %v964 = vunpack.c.l.b16 %v327
    %v965 = vunpack.c.h.b16 %v327
    %v966 = vunpack.c.l.b16 %v328
    %v967 = vunpack.c.h.b16 %v328
    %v968 = vunpack.c.l.b16 %v329
    %v969 = vunpack.c.h.b16 %v329
    %v970 = vunpack.c.l.b16 %v330
    %v971 = vunpack.c.h.b16 %v330
    %v972 = vunpack.c.l.b16 %v331
    %v973 = vunpack.c.h.b16 %v331
    %v974 = vunpack.c.l.b16 %v332
    %v975 = vunpack.c.h.b16 %v332
    %v976 = vunpack.c.l.b16 %v333
    %v977 = vunpack.c.h.b16 %v333
    %v978 = vunpack.c.l.b16 %v334
    %v979 = vunpack.c.h.b16 %v334
    %v980 = vunpack.c.l.b16 %v335
    %v981 = vunpack.c.h.b16 %v335
    %v982 = vunpack.c.l.b16 %v336
    %v983 = vunpack.c.h.b16 %v336
    %v984 = vunpack.c.l.b16 %v337
    %v985 = vunpack.c.h.b16 %v337
    %v986 = vunpack.c.l.b16 %v338
    %v987 = vunpack.c.h.b16 %v338
    %v988 = vunpack.c.l.b16 %v339
    %v989 = vunpack.c.h.b16 %v339
    %v990 = vunpack.c.l.b16 %v340
    %v991 = vunpack.c.h.b16 %v340
    %v992 = vunpack.c.l.b16 %v341
    %v993 = vunpack.c.h.b16 %v341
    %v994 = vunpack.c.l.b16 %v342
    %v995 = vunpack.c.h.b16 %v342
    %v996 = vunpack.c.l.b16 %v343
    %v997 = vunpack.c.h.b16 %v343
    %v998 = vunpack.c.l.b16 %v344
    %v999 = vunpack.c.h.b16 %v344
    %v1000 = vunpack.c.l.b16 %v345
    %v1001 = vunpack.c.h.b16 %v345
    %v1002 = vunpack.c.l.b16 %v346
    %v1003 = vunpack.c.h.b16 %v346
    %v1004 = vunpack.c.l.b16 %v347
    %v1005 = vunpack.c.h.b16 %v347
    %v1006 = vunpack.c.l.b16 %v348
    %v1007 = vunpack.c.h.b16 %v348
    %v1008 = vunpack.c.l.b16 %v349
    %v1009 = vunpack.c.h.b16 %v349
    %v1010 = vunpack.c.l.b16 %v350
    %v1011 = vunpack.c.h.b16 %v350
    %v1012 = vunpack.c.l.b16 %v351
    %v1013 = vunpack.c.h.b16 %v351
    %v1014 = vunpack.c.l.b16 %v352
    %v1015 = vunpack.c.h.b16 %v352
    %v1016 = vunpack.c.l.b16 %v353
    %v1017 = vunpack.c.h.b16 %v353
    %v1018 = vunpack.c.l.b16 %v354
    %v1019 = vunpack.c.h.b16 %v354
    %v1020 = vunpack.c.l.b16 %v355
    %v1021 = vunpack.c.h.b16 %v355
    %v1022 = vunpack.c.l.b16 %v356
    %v1023 = vunpack.c.h.b16 %v356
    %v1024 = vunpack.c.l.b16 %v357
    %v1025 = vunpack.c.h.b16 %v357
    %v1026 = vunpack.c.l.b16 %v358
    %v1027 = vunpack.c.h.b16 %v358
    %v1028 = vunpack.c.l.b16 %v359
    %v1029 = vunpack.c.h.b16 %v359
    %v1030 = vunpack.c.l.b16 %v360
    %v1031 = vunpack.c.h.b16 %v360
    %v1032 = vunpack.c.l.b16 %v361
    %v1033 = vunpack.c.h.b16 %v361
    %v1034 = vunpack.c.l.b16 %v362
    %v1035 = vunpack.c.h.b16 %v362
    %v1036 = vunpack.c.l.b16 %v363
    %v1037 = vunpack.c.h.b16 %v363
    %v1038 = vunpack.c.l.b16 %v364
    %v1039 = vunpack.c.h.b16 %v364
    %v1040 = vunpack.c.l.b16 %v365
    %v1041 = vunpack.c.h.b16 %v365
    %v1042 = vunpack.c.l.b16 %v366
    %v1043 = vunpack.c.h.b16 %v366
    %v1044 = vunpack.c.l.b16 %v367
    %v1045 = vunpack.c.h.b16 %v367
    %v1046 = vunpack.c.l.b16 %v368
    %v1047 = vunpack.c.h.b16 %v368
    %v1048 = vunpack.c.l.b16 %v369
    %v1049 = vunpack.c.h.b16 %v369
    %v1050 = vunpack.c.l.b16 %v370
    %v1051 = vunpack.c.h.b16 %v370
    %v1052 = vunpack.c.l.b16 %v371
    %v1053 = vunpack.c.h.b16 %v371
    %v1054 = vunpack.c.l.b16 %v372
    %v1055 = vunpack.c.h.b16 %v372
    %v1056 = vunpack.c.l.b16 %v373
    %v1057 = vunpack.c.h.b16 %v373
    %v1058 = vunpack.c.l.b16 %v374
    %v1059 = vunpack.c.h.b16 %v374
    %v1060 = vunpack.c.l.b16 %v375
    %v1061 = vunpack.c.h.b16 %v375
    %v1062 = vunpack.c.l.b16 %v376
    %v1063 = vunpack.c.h.b16 %v376
    %v1064 = vunpack.c.l.b16 %v377
    %v1065 = vunpack.c.h.b16 %v377
    %v1066 = vunpack.c.l.b16 %v378
    %v1067 = vunpack.c.h.b16 %v378
    %v1068 = vunpack.c.l.b16 %v379
    %v1069 = vunpack.c.h.b16 %v379
    %v1070 = vunpack.c.l.b16 %v380
    %v1071 = vunpack.c.h.b16 %v380
    %v1072 = vunpack.c.l.b16 %v381
    %v1073 = vunpack.c.h.b16 %v381
    %v1074 = vunpack.c.l.b16 %v382
    %v1075 = vunpack.c.h.b16 %v382
    %v1076 = vunpack.c.l.b16 %v383
    %v1077 = vunpack.c.h.b16 %v383
    %v1078 = vunpack.c.l.b16 %v384
    %v1079 = vunpack.c.h.b16 %v384
    %v1080 = vunpack.c.l.b16 %v385
    %v1081 = vunpack.c.h.b16 %v385
    %v1082 = vunpack.c.l.b16 %v386
    %v1083 = vunpack.c.h.b16 %v386
    %v1084 = vunpack.c.l.b16 %v387
    %v1085 = vunpack.c.h.b16 %v387
    %v1086 = vunpack.c.l.b16 %v388
    %v1087 = vunpack.c.h.b16 %v388
    %v1088 = vunpack.c.l.b16 %v389
    %v1089 = vunpack.c.h.b16 %v389
    %v1090 = vunpack.c.l.b16 %v390
    %v1091 = vunpack.c.h.b16 %v390
    %v1092 = vunpack.c.l.b16 %v391
    %v1093 = vunpack.c.h.b16 %v391
    %v1094 = vunpack.c.l.b16 %v392
    %v1095 = vunpack.c.h.b16 %v392
    %v1096 = vunpack.c.l.b16 %v393
    %v1097 = vunpack.c.h.b16 %v393
    %v1098 = vunpack.c.l.b16 %v394
    %v1099 = vunpack.c.h.b16 %v394
    %v1100 = vunpack.c.l.b16 %v395
    %v1101 = vunpack.c.h.b16 %v395
    %v1102 = vunpack.c.l.b16 %v396
    %v1103 = vunpack.c.h.b16 %v396
    %v1104 = vpack.c.b16 %v660, %v656
    %v1105 = vpack.c.b16 %v661, %v657
    %v1106 = vpack.c.b16 %v662, %v658
    %v1107 = vpack.c.b16 %v663, %v659
    %v1108 = vpack.c.b16 %v668, %v664
    %v1109 = vpack.c.b16 %v669, %v665
    %v1110 = vpack.c.b16 %v670, %v666
    %v1111 = vpack.c.b16 %v671, %v667
    %v1112 = vpack.c.b16 %v676, %v672
    %v1113 = vpack.c.b16 %v677, %v673
    %v1114 = vpack.c.b16 %v678, %v674
    %v1115 = vpack.c.b16 %v679, %v675
    %v1116 = vpack.c.b16 %v684, %v680
    %v1117 = vpack.c.b16 %v685, %v681
    %v1118 = vpack.c.b16 %v686, %v682
    %v1119 = vpack.c.b16 %v687, %v683
    %v1120 = vpack.c.b16 %v692, %v688
    %v1121 = vpack.c.b16 %v693, %v689
    %v1122 = vpack.c.b16 %v694, %v690
    %v1123 = vpack.c.b16 %v695, %v691
    %v1124 = vpack.c.b16 %v700, %v696
    %v1125 = vpack.c.b16 %v701, %v697
    %v1126 = vpack.c.b16 %v702, %v698
    %v1127 = vpack.c.b16 %v703, %v699
    %v1128 = vpack.c.b16 %v708, %v704
    %v1129 = vpack.c.b16 %v709, %v705
    %v1130 = vpack.c.b16 %v710, %v706
    %v1131 = vpack.c.b16 %v711, %v707
    %v1132 = vpack.c.b16 %v716, %v712
    %v1133 = vpack.c.b16 %v717, %v713
    %v1134 = vpack.c.b16 %v718, %v714
    %v1135 = vpack.c.b16 %v719, %v715
    %v1136 = vpack.c.b16 %v724, %v720
    %v1137 = vpack.c.b16 %v725, %v721
    %v1138 = vpack.c.b16 %v726, %v722
    %v1139 = vpack.c.b16 %v727, %v723
    %v1140 = vpack.c.b16 %v732, %v728
    %v1141 = vpack.c.b16 %v733, %v729
    %v1142 = vpack.c.b16 %v734, %v730
    %v1143 = vpack.c.b16 %v735, %v731
    %v1144 = vpack.c.b16 %v740, %v736
    %v1145 = vpack.c.b16 %v741, %v737
    %v1146 = vpack.c.b16 %v742, %v738
    %v1147 = vpack.c.b16 %v743, %v739
    %v1148 = vpack.c.b16 %v748, %v744
    %v1149 = vpack.c.b16 %v749, %v745
    %v1150 = vpack.c.b16 %v750, %v746
    %v1151 = vpack.c.b16 %v751, %v747
    %v1152 = vpack.c.b16 %v756, %v752
    %v1153 = vpack.c.b16 %v757, %v753
    %v1154 = vpack.c.b16 %v758, %v754
    %v1155 = vpack.c.b16 %v759, %v755
    %v1156 = vpack.c.b16 %v764, %v760
    %v1157 = vpack.c.b16 %v765, %v761
    %v1158 = vpack.c.b16 %v766, %v762
    %v1159 = vpack.c.b16 %v767, %v763
    %v1160 = vpack.c.b16 %v772, %v768
    %v1161 = vpack.c.b16 %v773, %v769
    %v1162 = vpack.c.b16 %v774, %v770
    %v1163 = vpack.c.b16 %v775, %v771
    %v1164 = vpack.c.b16 %v780, %v776
    %v1165 = vpack.c.b16 %v781, %v777
    %v1166 = vpack.c.b16 %v782, %v778
    %v1167 = vpack.c.b16 %v783, %v779
    %v1168 = vpack.c.b16 %v788, %v784
    %v1169 = vpack.c.b16 %v789, %v785
    %v1170 = vpack.c.b16 %v790, %v786
    %v1171 = vpack.c.b16 %v791, %v787
    %v1172 = vpack.c.b16 %v796, %v792
    %v1173 = vpack.c.b16 %v797, %v793
    %v1174 = vpack.c.b16 %v798, %v794
    %v1175 = vpack.c.b16 %v799, %v795
    %v1176 = vpack.c.b16 %v804, %v800
    %v1177 = vpack.c.b16 %v805, %v801
    %v1178 = vpack.c.b16 %v806, %v802
    %v1179 = vpack.c.b16 %v807, %v803
    %v1180 = vpack.c.b16 %v812, %v808
    %v1181 = vpack.c.b16 %v813, %v809
    %v1182 = vpack.c.b16 %v814, %v810
    %v1183 = vpack.c.b16 %v815, %v811
    %v1184 = vpack.c.b16 %v820, %v816
    %v1185 = vpack.c.b16 %v821, %v817
    %v1186 = vpack.c.b16 %v822, %v818
    %v1187 = vpack.c.b16 %v823, %v819
    %v1188 = vpack.c.b16 %v828, %v824
    %v1189 = vpack.c.b16 %v829, %v825
    %v1190 = vpack.c.b16 %v830, %v826
    %v1191 = vpack.c.b16 %v831, %v827
    %v1192 = vpack.c.b16 %v836, %v832
    %v1193 = vpack.c.b16 %v837, %v833
    %v1194 = vpack.c.b16 %v838, %v834
    %v1195 = vpack.c.b16 %v839, %v835
    %v1196 = vpack.c.b16 %v844, %v840
    %v1197 = vpack.c.b16 %v845, %v841
    %v1198 = vpack.c.b16 %v846, %v842
    %v1199 = vpack.c.b16 %v847, %v843
    %v1200 = vpack.c.b16 %v852, %v848
    %v1201 = vpack.c.b16 %v853, %v849
    %v1202 = vpack.c.b16 %v854, %v850
    %v1203 = vpack.c.b16 %v855, %v851
    %v1204 = vpack.c.b16 %v860, %v856
    %v1205 = vpack.c.b16 %v861, %v857
    %v1206 = vpack.c.b16 %v862, %v858
    %v1207 = vpack.c.b16 %v863, %v859
    %v1208 = vpack.c.b16 %v868, %v864
    %v1209 = vpack.c.b16 %v869, %v865
    %v1210 = vpack.c.b16 %v870, %v866
    %v1211 = vpack.c.b16 %v871, %v867
    %v1212 = vpack.c.b16 %v876, %v872
    %v1213 = vpack.c.b16 %v877, %v873
    %v1214 = vpack.c.b16 %v878, %v874
    %v1215 = vpack.c.b16 %v879, %v875
    %v1216 = vpack.c.b16 %v884, %v880
    %v1217 = vpack.c.b16 %v885, %v881
    %v1218 = vpack.c.b16 %v886, %v882
    %v1219 = vpack.c.b16 %v887, %v883
    %v1220 = vpack.c.b16 %v892, %v888
    %v1221 = vpack.c.b16 %v893, %v889
    %v1222 = vpack.c.b16 %v894, %v890
    %v1223 = vpack.c.b16 %v895, %v891
    %v1224 = vpack.c.b16 %v900, %v896
    %v1225 = vpack.c.b16 %v901, %v897
    %v1226 = vpack.c.b16 %v902, %v898
    %v1227 = vpack.c.b16 %v903, %v899
    %v1228 = vpack.c.b16 %v908, %v904
    %v1229 = vpack.c.b16 %v909, %v905
    %v1230 = vpack.c.b16 %v910, %v906
    %v1231 = vpack.c.b16 %v911, %v907
    %v1232 = vpack.c.b16 %v916, %v912
    %v1233 = vpack.c.b16 %v917, %v913
    %v1234 = vpack.c.b16 %v918, %v914
    %v1235 = vpack.c.b16 %v919, %v915
    %v1236 = vpack.c.b16 %v924, %v920
    %v1237 = vpack.c.b16 %v925, %v921
    %v1238 = vpack.c.b16 %v926, %v922
    %v1239 = vpack.c.b16 %v927, %v923
    %v1240 = vpack.c.b16 %v932, %v928
    %v1241 = vpack.c.b16 %v933, %v929
    %v1242 = vpack.c.b16 %v934, %v930
    %v1243 = vpack.c.b16 %v935, %v931
    %v1244 = vpack.c.b16 %v940, %v936
    %v1245 = vpack.c.b16 %v941, %v937
    %v1246 = vpack.c.b16 %v942, %v938
    %v1247 = vpack.c.b16 %v943, %v939
    %v1248 = vpack.c.b16 %v948, %v944
    %v1249 = vpack.c.b16 %v949, %v945
    %v1250 = vpack.c.b16 %v950, %v946
    %v1251 = vpack.c.b16 %v951, %v947
    %v1252 = vpack.c.b16 %v956, %v952
    %v1253 = vpack.c.b16 %v957, %v953
    %v1254 = vpack.c.b16 %v958, %v954
    %v1255 = vpack.c.b16 %v959, %v955
    %v1256 = vpack.c.b16 %v964, %v960
    %v1257 = vpack.c.b16 %v965, %v961
    %v1258 = vpack.c.b16 %v966, %v962
    %v1259 = vpack.c.b16 %v967, %v963
    %v1260 = vpack.c.b16 %v972, %v968
    %v1261 = vpack.c.b16 %v973, %v969
    %v1262 = vpack.c.b16 %v974, %v970
    %v1263 = vpack.c.b16 %v975, %v971
    %v1264 = vpack.c.b16 %v980, %v976
    %v1265 = vpack.c.b16 %v981, %v977
    %v1266 = vpack.c.b16 %v982, %v978
    %v1267 = vpack.c.b16 %v983, %v979
    %v1268 = vpack.c.b16 %v988, %v984
    %v1269 = vpack.c.b16 %v989, %v985
    %v1270 = vpack.c.b16 %v990, %v986
    %v1271 = vpack.c.b16 %v991, %v987
    %v1272 = vpack.c.b16 %v996, %v992
    %v1273 = vpack.c.b16 %v997, %v993
    %v1274 = vpack.c.b16 %v998, %v994
    %v1275 = vpack.c.b16 %v999, %v995
    %v1276 = vpack.c.b16 %v1004, %v1000
    %v1277 = vpack.c.b16 %v1005, %v1001
    %v1278 = vpack.c.b16 %v1006, %v1002
    %v1279 = vpack.c.b16 %v1007, %v1003
    %v1280 = vpack.c.b16 %v1012, %v1008
    %v1281 = vpack.c.b16 %v1013, %v1009
    %v1282 = vpack.c.b16 %v1014, %v1010
    %v1283 = vpack.c.b16 %v1015, %v1011
    %v1284 = vpack.c.b16 %v1020, %v1016
    %v1285 = vpack.c.b16 %v1021, %v1017
    %v1286 = vpack.c.b16 %v1022, %v1018
    %v1287 = vpack.c.b16 %v1023, %v1019
    %v1288 = vpack.c.b16 %v1028, %v1024
    %v1289 = vpack.c.b16 %v1029, %v1025
    %v1290 = vpack.c.b16 %v1030, %v1026
    %v1291 = vpack.c.b16 %v1031, %v1027
    %v1292 = vpack.c.b16 %v1036, %v1032
    %v1293 = vpack.c.b16 %v1037, %v1033
    %v1294 = vpack.c.b16 %v1038, %v1034
    %v1295 = vpack.c.b16 %v1039, %v1035
    %v1296 = vpack.c.b16 %v1044, %v1040
    %v1297 = vpack.c.b16 %v1045, %v1041
    %v1298 = vpack.c.b16 %v1046, %v1042
    %v1299 = vpack.c.b16 %v1047, %v1043
    %v1300 = vpack.c.b16 %v1052, %v1048
    %v1301 = vpack.c.b16 %v1053, %v1049
    %v1302 = vpack.c.b16 %v1054, %v1050
    %v1303 = vpack.c.b16 %v1055, %v1051
    %v1304 = vpack.c.b16 %v1060, %v1056
    %v1305 = vpack.c.b16 %v1061, %v1057
    %v1306 = vpack.c.b16 %v1062, %v1058
    %v1307 = vpack.c.b16 %v1063, %v1059
    %v1308 = vpack.c.b16 %v1068, %v1064
    %v1309 = vpack.c.b16 %v1069, %v1065
    %v1310 = vpack.c.b16 %v1070, %v1066
    %v1311 = vpack.c.b16 %v1071, %v1067
    %v1312 = vpack.c.b16 %v1076, %v1072
    %v1313 = vpack.c.b16 %v1077, %v1073
    %v1314 = vpack.c.b16 %v1078, %v1074
    %v1315 = vpack.c.b16 %v1079, %v1075
    %v1316 = vpack.c.b16 %v1084, %v1080
    %v1317 = vpack.c.b16 %v1085, %v1081
    %v1318 = vpack.c.b16 %v1086, %v1082
    %v1319 = vpack.c.b16 %v1087, %v1083
    %v1320 = vpack.c.b16 %v1092, %v1088
    %v1321 = vpack.c.b16 %v1093, %v1089
    %v1322 = vpack.c.b16 %v1094, %v1090
    %v1323 = vpack.c.b16 %v1095, %v1091
    %v1324 = vpack.c.b16 %v1100, %v1096
    %v1325 = vpack.c.b16 %v1101, %v1097
    %v1326 = vpack.c.b16 %v1102, %v1098
    %v1327 = vpack.c.b16 %v1103, %v1099
    %1552 = vmatpush.bf16.msra.mxu0 %v1132
    %1553 = vmatpush.bf16.msra.mxu0 %v1128
    %1554 = vmatpush.bf16.msra.mxu0 %v1124
    %1555 = vmatpush.bf16.msra.mxu0 %v1120
    %1556 = vmatpush.bf16.msra.mxu0 %v1116
    %1557 = vmatpush.bf16.msra.mxu0 %v1112
    %1558 = vmatpush.bf16.msra.mxu0 %v1108
    %1559 = vmatpush.bf16.msra.mxu0 %v1104
    %1560 = vmatmul.bf16.gmra.mxu0 %v418
    %v1561 = vpop.f32.mrf.mxu0
    %v1562 = vadd.f32 %v399, %v1561
    %v1563 = vpop.f32.mrf.mxu0
    %1564 = vdwg.mxu0
    %1565 = vmatpush.bf16.msra.mxu0 %v1164
    %1566 = vmatpush.bf16.msra.mxu0 %v1160
    %1567 = vmatpush.bf16.msra.mxu0 %v1156
    %1568 = vmatpush.bf16.msra.mxu0 %v1152
    %1569 = vmatpush.bf16.msra.mxu0 %v1148
    %1570 = vmatpush.bf16.msra.mxu0 %v1144
    %1571 = vmatpush.bf16.msra.mxu0 %v1140
    %1572 = vmatpush.bf16.msra.mxu0 %v1136
    %1573 = vmatmul.bf16.gmra.mxu0 %v419
    %v1574 = vpop.f32.mrf.mxu0
    %v1575 = vadd.f32 %v1562, %v1574
    %v1576 = vpop.f32.mrf.mxu0
    %1577 = vdwg.mxu0
    %1578 = vmatpush.bf16.msra.mxu0 %v1196
    %1579 = vmatpush.bf16.msra.mxu0 %v1192
    %1580 = vmatpush.bf16.msra.mxu0 %v1188
    %1581 = vmatpush.bf16.msra.mxu0 %v1184
    %1582 = vmatpush.bf16.msra.mxu0 %v1180
    %1583 = vmatpush.bf16.msra.mxu0 %v1176
    %1584 = vmatpush.bf16.msra.mxu0 %v1172
    %1585 = vmatpush.bf16.msra.mxu0 %v1168
    %1586 = vmatmul.bf16.gmra.mxu0 %v420
    %v1587 = vpop.f32.mrf.mxu0
    %v1588 = vadd.f32 %v1575, %v1587
    %v1589 = vpop.f32.mrf.mxu0
    %1590 = vdwg.mxu0
    %1591 = vmatpush.bf16.msra.mxu0 %v1228
    %1592 = vmatpush.bf16.msra.mxu0 %v1224
    %1593 = vmatpush.bf16.msra.mxu0 %v1220
    %1594 = vmatpush.bf16.msra.mxu0 %v1216
    %1595 = vmatpush.bf16.msra.mxu0 %v1212
    %1596 = vmatpush.bf16.msra.mxu0 %v1208
    %1597 = vmatpush.bf16.msra.mxu0 %v1204
    %1598 = vmatpush.bf16.msra.mxu0 %v1200
    %1599 = vmatmul.bf16.gmra.mxu0 %v421
    %v1600 = vpop.f32.mrf.mxu0
    %v1601 = vadd.f32 %v1588, %v1600
    %v1602 = vpop.f32.mrf.mxu0
    %1603 = vdwg.mxu0
    %1604 = vmatpush.bf16.msra.mxu0 %v1260
    %1605 = vmatpush.bf16.msra.mxu0 %v1256
    %1606 = vmatpush.bf16.msra.mxu0 %v1252
    %1607 = vmatpush.bf16.msra.mxu0 %v1248
    %1608 = vmatpush.bf16.msra.mxu0 %v1244
    %1609 = vmatpush.bf16.msra.mxu0 %v1240
    %1610 = vmatpush.bf16.msra.mxu0 %v1236
    %1611 = vmatpush.bf16.msra.mxu0 %v1232
    %1612 = vmatmul.bf16.gmra.mxu0 %v422
    %v1613 = vpop.f32.mrf.mxu0
    %v1614 = vadd.f32 %v1601, %v1613
    %v1615 = vpop.f32.mrf.mxu0
    %1616 = vdwg.mxu0
    %1617 = vmatpush.bf16.msra.mxu0 %v1292
    %1618 = vmatpush.bf16.msra.mxu0 %v1288
    %1619 = vmatpush.bf16.msra.mxu0 %v1284
    %1620 = vmatpush.bf16.msra.mxu0 %v1280
    %1621 = vmatpush.bf16.msra.mxu0 %v1276
    %1622 = vmatpush.bf16.msra.mxu0 %v1272
    %1623 = vmatpush.bf16.msra.mxu0 %v1268
    %1624 = vmatpush.bf16.msra.mxu0 %v1264
    %1625 = vmatmul.bf16.gmra.mxu0 %v423
    %v1626 = vpop.f32.mrf.mxu0
    %v1627 = vadd.f32 %v1614, %v1626
    %v1628 = vpop.f32.mrf.mxu0
    %1629 = vdwg.mxu0
    %1630 = vmatpush.bf16.msra.mxu0 %v1324
    %1631 = vmatpush.bf16.msra.mxu0 %v1320
    %1632 = vmatpush.bf16.msra.mxu0 %v1316
    %1633 = vmatpush.bf16.msra.mxu0 %v1312
    %1634 = vmatpush.bf16.msra.mxu0 %v1308
    %1635 = vmatpush.bf16.msra.mxu0 %v1304
    %1636 = vmatpush.bf16.msra.mxu0 %v1300
    %1637 = vmatpush.bf16.msra.mxu0 %v1296
    %1638 = vmatmul.bf16.gmra.mxu0 %v424
    %v1639 = vpop.f32.mrf.mxu0
    %v1640 = vadd.f32 %v1627, %v1639
    %v1641 = vpop.f32.mrf.mxu0
    %1642 = vdwg.mxu0
    %1643 = vmatpush.bf16.msra.mxu0 %v1133
    %1644 = vmatpush.bf16.msra.mxu0 %v1129
    %1645 = vmatpush.bf16.msra.mxu0 %v1125
    %1646 = vmatpush.bf16.msra.mxu0 %v1121
    %1647 = vmatpush.bf16.msra.mxu0 %v1117
    %1648 = vmatpush.bf16.msra.mxu0 %v1113
    %1649 = vmatpush.bf16.msra.mxu0 %v1109
    %1650 = vmatpush.bf16.msra.mxu0 %v1105
    %1651 = vmatmul.bf16.gmra.mxu0 %v418
    %v1652 = vpop.f32.mrf.mxu0
    %v1653 = vadd.f32 %v400, %v1652
    %v1654 = vpop.f32.mrf.mxu0
    %1655 = vdwg.mxu0
    %1656 = vmatpush.bf16.msra.mxu0 %v1165
    %1657 = vmatpush.bf16.msra.mxu0 %v1161
    %1658 = vmatpush.bf16.msra.mxu0 %v1157
    %1659 = vmatpush.bf16.msra.mxu0 %v1153
    %1660 = vmatpush.bf16.msra.mxu0 %v1149
    %1661 = vmatpush.bf16.msra.mxu0 %v1145
    %1662 = vmatpush.bf16.msra.mxu0 %v1141
    %1663 = vmatpush.bf16.msra.mxu0 %v1137
    %1664 = vmatmul.bf16.gmra.mxu0 %v419
    %v1665 = vpop.f32.mrf.mxu0
    %v1666 = vadd.f32 %v1653, %v1665
    %v1667 = vpop.f32.mrf.mxu0
    %1668 = vdwg.mxu0
    %1669 = vmatpush.bf16.msra.mxu0 %v1197
    %1670 = vmatpush.bf16.msra.mxu0 %v1193
    %1671 = vmatpush.bf16.msra.mxu0 %v1189
    %1672 = vmatpush.bf16.msra.mxu0 %v1185
    %1673 = vmatpush.bf16.msra.mxu0 %v1181
    %1674 = vmatpush.bf16.msra.mxu0 %v1177
    %1675 = vmatpush.bf16.msra.mxu0 %v1173
    %1676 = vmatpush.bf16.msra.mxu0 %v1169
    %1677 = vmatmul.bf16.gmra.mxu0 %v420
    %v1678 = vpop.f32.mrf.mxu0
    %v1679 = vadd.f32 %v1666, %v1678
    %v1680 = vpop.f32.mrf.mxu0
    %1681 = vdwg.mxu0
    %1682 = vmatpush.bf16.msra.mxu0 %v1229
    %1683 = vmatpush.bf16.msra.mxu0 %v1225
    %1684 = vmatpush.bf16.msra.mxu0 %v1221
    %1685 = vmatpush.bf16.msra.mxu0 %v1217
    %1686 = vmatpush.bf16.msra.mxu0 %v1213
    %1687 = vmatpush.bf16.msra.mxu0 %v1209
    %1688 = vmatpush.bf16.msra.mxu0 %v1205
    %1689 = vmatpush.bf16.msra.mxu0 %v1201
    %1690 = vmatmul.bf16.gmra.mxu0 %v421
    %v1691 = vpop.f32.mrf.mxu0
    %v1692 = vadd.f32 %v1679, %v1691
    %v1693 = vpop.f32.mrf.mxu0
    %1694 = vdwg.mxu0
    %1695 = vmatpush.bf16.msra.mxu0 %v1261
    %1696 = vmatpush.bf16.msra.mxu0 %v1257
    %1697 = vmatpush.bf16.msra.mxu0 %v1253
    %1698 = vmatpush.bf16.msra.mxu0 %v1249
    %1699 = vmatpush.bf16.msra.mxu0 %v1245
    %1700 = vmatpush.bf16.msra.mxu0 %v1241
    %1701 = vmatpush.bf16.msra.mxu0 %v1237
    %1702 = vmatpush.bf16.msra.mxu0 %v1233
    %1703 = vmatmul.bf16.gmra.mxu0 %v422
    %v1704 = vpop.f32.mrf.mxu0
    %v1705 = vadd.f32 %v1692, %v1704
    %v1706 = vpop.f32.mrf.mxu0
    %1707 = vdwg.mxu0
    %1708 = vmatpush.bf16.msra.mxu0 %v1293
    %1709 = vmatpush.bf16.msra.mxu0 %v1289
    %1710 = vmatpush.bf16.msra.mxu0 %v1285
    %1711 = vmatpush.bf16.msra.mxu0 %v1281
    %1712 = vmatpush.bf16.msra.mxu0 %v1277
    %1713 = vmatpush.bf16.msra.mxu0 %v1273
    %1714 = vmatpush.bf16.msra.mxu0 %v1269
    %1715 = vmatpush.bf16.msra.mxu0 %v1265
    %1716 = vmatmul.bf16.gmra.mxu0 %v423
    %v1717 = vpop.f32.mrf.mxu0
    %v1718 = vadd.f32 %v1705, %v1717
    %v1719 = vpop.f32.mrf.mxu0
    %1720 = vdwg.mxu0
    %1721 = vmatpush.bf16.msra.mxu0 %v1325
    %1722 = vmatpush.bf16.msra.mxu0 %v1321
    %1723 = vmatpush.bf16.msra.mxu0 %v1317
    %1724 = vmatpush.bf16.msra.mxu0 %v1313
    %1725 = vmatpush.bf16.msra.mxu0 %v1309
    %1726 = vmatpush.bf16.msra.mxu0 %v1305
    %1727 = vmatpush.bf16.msra.mxu0 %v1301
    %1728 = vmatpush.bf16.msra.mxu0 %v1297
    %1729 = vmatmul.bf16.gmra.mxu0 %v424
    %v1730 = vpop.f32.mrf.mxu0
    %v1731 = vadd.f32 %v1718, %v1730
    %v1732 = vpop.f32.mrf.mxu0
    %1733 = vdwg.mxu0
    %1734 = vmatpush.bf16.msra.mxu0 %v1134
    %1735 = vmatpush.bf16.msra.mxu0 %v1130
    %1736 = vmatpush.bf16.msra.mxu0 %v1126
    %1737 = vmatpush.bf16.msra.mxu0 %v1122
    %1738 = vmatpush.bf16.msra.mxu0 %v1118
    %1739 = vmatpush.bf16.msra.mxu0 %v1114
    %1740 = vmatpush.bf16.msra.mxu0 %v1110
    %1741 = vmatpush.bf16.msra.mxu0 %v1106
    %1742 = vmatmul.bf16.gmra.mxu0 %v418
    %v1743 = vpop.f32.mrf.mxu0
    %v1744 = vadd.f32 %v401, %v1743
    %v1745 = vpop.f32.mrf.mxu0
    %1746 = vdwg.mxu0
    %1747 = vmatpush.bf16.msra.mxu0 %v1166
    %1748 = vmatpush.bf16.msra.mxu0 %v1162
    %1749 = vmatpush.bf16.msra.mxu0 %v1158
    %1750 = vmatpush.bf16.msra.mxu0 %v1154
    %1751 = vmatpush.bf16.msra.mxu0 %v1150
    %1752 = vmatpush.bf16.msra.mxu0 %v1146
    %1753 = vmatpush.bf16.msra.mxu0 %v1142
    %1754 = vmatpush.bf16.msra.mxu0 %v1138
    %1755 = vmatmul.bf16.gmra.mxu0 %v419
    %v1756 = vpop.f32.mrf.mxu0
    %v1757 = vadd.f32 %v1744, %v1756
    %v1758 = vpop.f32.mrf.mxu0
    %1759 = vdwg.mxu0
    %1760 = vmatpush.bf16.msra.mxu0 %v1198
    %1761 = vmatpush.bf16.msra.mxu0 %v1194
    %1762 = vmatpush.bf16.msra.mxu0 %v1190
    %1763 = vmatpush.bf16.msra.mxu0 %v1186
    %1764 = vmatpush.bf16.msra.mxu0 %v1182
    %1765 = vmatpush.bf16.msra.mxu0 %v1178
    %1766 = vmatpush.bf16.msra.mxu0 %v1174
    %1767 = vmatpush.bf16.msra.mxu0 %v1170
    %1768 = vmatmul.bf16.gmra.mxu0 %v420
    %v1769 = vpop.f32.mrf.mxu0
    %v1770 = vadd.f32 %v1757, %v1769
    %v1771 = vpop.f32.mrf.mxu0
    %1772 = vdwg.mxu0
    %1773 = vmatpush.bf16.msra.mxu0 %v1230
    %1774 = vmatpush.bf16.msra.mxu0 %v1226
    %1775 = vmatpush.bf16.msra.mxu0 %v1222
    %1776 = vmatpush.bf16.msra.mxu0 %v1218
    %1777 = vmatpush.bf16.msra.mxu0 %v1214
    %1778 = vmatpush.bf16.msra.mxu0 %v1210
    %1779 = vmatpush.bf16.msra.mxu0 %v1206
    %1780 = vmatpush.bf16.msra.mxu0 %v1202
    %1781 = vmatmul.bf16.gmra.mxu0 %v421
    %v1782 = vpop.f32.mrf.mxu0
    %v1783 = vadd.f32 %v1770, %v1782
    %v1784 = vpop.f32.mrf.mxu0
    %1785 = vdwg.mxu0
    %1786 = vmatpush.bf16.msra.mxu0 %v1262
    %1787 = vmatpush.bf16.msra.mxu0 %v1258
    %1788 = vmatpush.bf16.msra.mxu0 %v1254
    %1789 = vmatpush.bf16.msra.mxu0 %v1250
    %1790 = vmatpush.bf16.msra.mxu0 %v1246
    %1791 = vmatpush.bf16.msra.mxu0 %v1242
    %1792 = vmatpush.bf16.msra.mxu0 %v1238
    %1793 = vmatpush.bf16.msra.mxu0 %v1234
    %1794 = vmatmul.bf16.gmra.mxu0 %v422
    %v1795 = vpop.f32.mrf.mxu0
    %v1796 = vadd.f32 %v1783, %v1795
    %v1797 = vpop.f32.mrf.mxu0
    %1798 = vdwg.mxu0
    %1799 = vmatpush.bf16.msra.mxu0 %v1294
    %1800 = vmatpush.bf16.msra.mxu0 %v1290
    %1801 = vmatpush.bf16.msra.mxu0 %v1286
    %1802 = vmatpush.bf16.msra.mxu0 %v1282
    %1803 = vmatpush.bf16.msra.mxu0 %v1278
    %1804 = vmatpush.bf16.msra.mxu0 %v1274
    %1805 = vmatpush.bf16.msra.mxu0 %v1270
    %1806 = vmatpush.bf16.msra.mxu0 %v1266
    %1807 = vmatmul.bf16.gmra.mxu0 %v423
    %v1808 = vpop.f32.mrf.mxu0
    %v1809 = vadd.f32 %v1796, %v1808
    %v1810 = vpop.f32.mrf.mxu0
    %1811 = vdwg.mxu0
    %1812 = vmatpush.bf16.msra.mxu0 %v1326
    %1813 = vmatpush.bf16.msra.mxu0 %v1322
    %1814 = vmatpush.bf16.msra.mxu0 %v1318
    %1815 = vmatpush.bf16.msra.mxu0 %v1314
    %1816 = vmatpush.bf16.msra.mxu0 %v1310
    %1817 = vmatpush.bf16.msra.mxu0 %v1306
    %1818 = vmatpush.bf16.msra.mxu0 %v1302
    %1819 = vmatpush.bf16.msra.mxu0 %v1298
    %1820 = vmatmul.bf16.gmra.mxu0 %v424
    %v1821 = vpop.f32.mrf.mxu0
    %v1822 = vadd.f32 %v1809, %v1821
    %v1823 = vpop.f32.mrf.mxu0
    %1824 = vdwg.mxu0
    %1825 = vmatpush.bf16.msra.mxu0 %v1135
    %1826 = vmatpush.bf16.msra.mxu0 %v1131
    %1827 = vmatpush.bf16.msra.mxu0 %v1127
    %1828 = vmatpush.bf16.msra.mxu0 %v1123
    %1829 = vmatpush.bf16.msra.mxu0 %v1119
    %1830 = vmatpush.bf16.msra.mxu0 %v1115
    %1831 = vmatpush.bf16.msra.mxu0 %v1111
    %1832 = vmatpush.bf16.msra.mxu0 %v1107
    %1833 = vmatmul.bf16.gmra.mxu0 %v418
    %v1834 = vpop.f32.mrf.mxu0
    %v1835 = vadd.f32 %v402, %v1834
    %v1836 = vpop.f32.mrf.mxu0
    %1837 = vdwg.mxu0
    %1838 = vmatpush.bf16.msra.mxu0 %v1167
    %1839 = vmatpush.bf16.msra.mxu0 %v1163
    %1840 = vmatpush.bf16.msra.mxu0 %v1159
    %1841 = vmatpush.bf16.msra.mxu0 %v1155
    %1842 = vmatpush.bf16.msra.mxu0 %v1151
    %1843 = vmatpush.bf16.msra.mxu0 %v1147
    %1844 = vmatpush.bf16.msra.mxu0 %v1143
    %1845 = vmatpush.bf16.msra.mxu0 %v1139
    %1846 = vmatmul.bf16.gmra.mxu0 %v419
    %v1847 = vpop.f32.mrf.mxu0
    %v1848 = vadd.f32 %v1835, %v1847
    %v1849 = vpop.f32.mrf.mxu0
    %1850 = vdwg.mxu0
    %1851 = vmatpush.bf16.msra.mxu0 %v1199
    %1852 = vmatpush.bf16.msra.mxu0 %v1195
    %1853 = vmatpush.bf16.msra.mxu0 %v1191
    %1854 = vmatpush.bf16.msra.mxu0 %v1187
    %1855 = vmatpush.bf16.msra.mxu0 %v1183
    %1856 = vmatpush.bf16.msra.mxu0 %v1179
    %1857 = vmatpush.bf16.msra.mxu0 %v1175
    %1858 = vmatpush.bf16.msra.mxu0 %v1171
    %1859 = vmatmul.bf16.gmra.mxu0 %v420
    %v1860 = vpop.f32.mrf.mxu0
    %v1861 = vadd.f32 %v1848, %v1860
    %v1862 = vpop.f32.mrf.mxu0
    %1863 = vdwg.mxu0
    %1864 = vmatpush.bf16.msra.mxu0 %v1231
    %1865 = vmatpush.bf16.msra.mxu0 %v1227
    %1866 = vmatpush.bf16.msra.mxu0 %v1223
    %1867 = vmatpush.bf16.msra.mxu0 %v1219
    %1868 = vmatpush.bf16.msra.mxu0 %v1215
    %1869 = vmatpush.bf16.msra.mxu0 %v1211
    %1870 = vmatpush.bf16.msra.mxu0 %v1207
    %1871 = vmatpush.bf16.msra.mxu0 %v1203
    %1872 = vmatmul.bf16.gmra.mxu0 %v421
    %v1873 = vpop.f32.mrf.mxu0
    %v1874 = vadd.f32 %v1861, %v1873
    %v1875 = vpop.f32.mrf.mxu0
    %1876 = vdwg.mxu0
    %1877 = vmatpush.bf16.msra.mxu0 %v1263
    %1878 = vmatpush.bf16.msra.mxu0 %v1259
    %1879 = vmatpush.bf16.msra.mxu0 %v1255
    %1880 = vmatpush.bf16.msra.mxu0 %v1251
    %1881 = vmatpush.bf16.msra.mxu0 %v1247
    %1882 = vmatpush.bf16.msra.mxu0 %v1243
    %1883 = vmatpush.bf16.msra.mxu0 %v1239
    %1884 = vmatpush.bf16.msra.mxu0 %v1235
    %1885 = vmatmul.bf16.gmra.mxu0 %v422
    %v1886 = vpop.f32.mrf.mxu0
    %v1887 = vadd.f32 %v1874, %v1886
    %v1888 = vpop.f32.mrf.mxu0
    %1889 = vdwg.mxu0
    %1890 = vmatpush.bf16.msra.mxu0 %v1295
    %1891 = vmatpush.bf16.msra.mxu0 %v1291
    %1892 = vmatpush.bf16.msra.mxu0 %v1287
    %1893 = vmatpush.bf16.msra.mxu0 %v1283
    %1894 = vmatpush.bf16.msra.mxu0 %v1279
    %1895 = vmatpush.bf16.msra.mxu0 %v1275
    %1896 = vmatpush.bf16.msra.mxu0 %v1271
    %1897 = vmatpush.bf16.msra.mxu0 %v1267
    %1898 = vmatmul.bf16.gmra.mxu0 %v423
    %v1899 = vpop.f32.mrf.mxu0
    %v1900 = vadd.f32 %v1887, %v1899
    %v1901 = vpop.f32.mrf.mxu0
    %1902 = vdwg.mxu0
    %1903 = vmatpush.bf16.msra.mxu0 %v1327
    %1904 = vmatpush.bf16.msra.mxu0 %v1323
    %1905 = vmatpush.bf16.msra.mxu0 %v1319
    %1906 = vmatpush.bf16.msra.mxu0 %v1315
    %1907 = vmatpush.bf16.msra.mxu0 %v1311
    %1908 = vmatpush.bf16.msra.mxu0 %v1307
    %1909 = vmatpush.bf16.msra.mxu0 %v1303
    %1910 = vmatpush.bf16.msra.mxu0 %v1299
    %1911 = vmatmul.bf16.gmra.mxu0 %v424
    %v1912 = vpop.f32.mrf.mxu0
    %v1913 = vadd.f32 %v1900, %v1912
    %v1914 = vpop.f32.mrf.mxu0
    %1915 = vdwg.mxu0
    %v1916 = vmax.f32 %v1640, 0.0
    %v1917 = vmax.f32 %v1731, 0.0
    %v1918 = vmax.f32 %v1822, 0.0
    %v1919 = vmax.f32 %v1913, 0.0
    %v1920 = vpack.c.bf16 %v1916, %v1916
    %v1921 = vpack.c.bf16 %v1917, %v1917
    %v1922 = vpack.c.bf16 %v1918, %v1918
    %v1923 = vpack.c.bf16 %v1919, %v1919
    %v1924 = vld [vmem:[#allocation10] sm:$0xff]
    %v1925 = vld [vmem:[#allocation10 + $0x8] sm:$0xff]
    %v1926 = vld [vmem:[#allocation10 + $0x10] sm:$0xff]
    %v1927 = vld [vmem:[#allocation10 + $0x18] sm:$0xff]
    %v1928 = vld [vmem:[#allocation10 + $0x20] sm:$0xff]
    %v1929 = vld [vmem:[#allocation10 + $0x28] sm:$0xff]
    %v1930 = vld [vmem:[#allocation10 + $0x30] sm:$0xff]
    %v1931 = vld [vmem:[#allocation10 + $0x38] sm:$0xff]
    %v1932 = vld [vmem:[#allocation10 + $0x40] sm:$0xff]
    %v1933 = vld [vmem:[#allocation10 + $0x48] sm:$0xff]
    %v1934 = vld [vmem:[#allocation10 + $0x50] sm:$0xff]
    %v1935 = vld [vmem:[#allocation10 + $0x58] sm:$0xff]
    %v1936 = vld [vmem:[#allocation10 + $0x60] sm:$0xff]
    %v1937 = vld [vmem:[#allocation10 + $0x68] sm:$0xff]
    %v1938 = vld [vmem:[#allocation10 + $0x70] sm:$0xff]
    %v1939 = vld [vmem:[#allocation10 + $0x78] sm:$0xff]
    %v1940 = vld [vmem:[#allocation10 + $0x80] sm:$0xff]
    %v1941 = vld [vmem:[#allocation10 + $0x88] sm:$0xff]
    %v1942 = vld [vmem:[#allocation10 + $0x90] sm:$0xff]
    %v1943 = vld [vmem:[#allocation10 + $0x98] sm:$0xff]
    %v1944 = vld [vmem:[#allocation10 + $0xa0] sm:$0xff]
    %v1945 = vld [vmem:[#allocation10 + $0xa8] sm:$0xff]
    %v1946 = vld [vmem:[#allocation10 + $0xb0] sm:$0xff]
    %v1947 = vld [vmem:[#allocation10 + $0xb8] sm:$0xff]
    %v1948 = vld [vmem:[#allocation10 + $0xc0] sm:$0xff]
    %v1949 = vld [vmem:[#allocation10 + $0xc8] sm:$0xff]
    %v1950 = vld [vmem:[#allocation10 + $0xd0] sm:$0xff]
    %v1951 = vld [vmem:[#allocation10 + $0xd8] sm:$0xff]
    %v1952 = vld [vmem:[#allocation10 + $0xe0] sm:$0xff]
    %v1953 = vld [vmem:[#allocation10 + $0xe8] sm:$0xff]
    %v1954 = vld [vmem:[#allocation10 + $0xf0] sm:$0xff]
    %v1955 = vld [vmem:[#allocation10 + $0xf8] sm:$0xff]
    %v1956 = vld [vmem:[#allocation10 + $0x100] sm:$0xff]
    %v1957 = vld [vmem:[#allocation10 + $0x108] sm:$0xff]
    %v1958 = vld [vmem:[#allocation10 + $0x110] sm:$0xff]
    %v1959 = vld [vmem:[#allocation10 + $0x118] sm:$0xff]
    %v1960 = vld [vmem:[#allocation10 + $0x120] sm:$0xff]
    %v1961 = vld [vmem:[#allocation10 + $0x128] sm:$0xff]
    %v1962 = vld [vmem:[#allocation10 + $0x130] sm:$0xff]
    %v1963 = vld [vmem:[#allocation10 + $0x138] sm:$0xff]
    %v1964 = vld [vmem:[#allocation10 + $0x140] sm:$0xff]
    %v1965 = vld [vmem:[#allocation10 + $0x148] sm:$0xff]
    %v1966 = vld [vmem:[#allocation10 + $0x150] sm:$0xff]
    %v1967 = vld [vmem:[#allocation10 + $0x158] sm:$0xff]
    %v1968 = vld [vmem:[#allocation10 + $0x160] sm:$0xff]
    %v1969 = vld [vmem:[#allocation10 + $0x168] sm:$0xff]
    %v1970 = vld [vmem:[#allocation10 + $0x170] sm:$0xff]
    %v1971 = vld [vmem:[#allocation10 + $0x178] sm:$0xff]
    %v1972 = vld [vmem:[#allocation10 + $0x180] sm:$0xff]
    %v1973 = vld [vmem:[#allocation10 + $0x188] sm:$0xff]
    %v1974 = vld [vmem:[#allocation10 + $0x190] sm:$0xff]
    %v1975 = vld [vmem:[#allocation10 + $0x198] sm:$0xff]
    %v1976 = vld [vmem:[#allocation10 + $0x1a0] sm:$0xff]
    %v1977 = vld [vmem:[#allocation10 + $0x1a8] sm:$0xff]
    %v1978 = vld [vmem:[#allocation10 + $0x1b0] sm:$0xff]
    %v1979 = vld [vmem:[#allocation10 + $0x1b8] sm:$0xff]
    %v1980 = vld [vmem:[#allocation10 + $0x1c0] sm:$0xff]
    %v1981 = vld [vmem:[#allocation10 + $0x1c8] sm:$0xff]
    %v1982 = vld [vmem:[#allocation10 + $0x1d0] sm:$0xff]
    %v1983 = vld [vmem:[#allocation10 + $0x1d8] sm:$0xff]
    %v1984 = vld [vmem:[#allocation10 + $0x1e0] sm:$0xff]
    %v1985 = vld [vmem:[#allocation10 + $0x1e8] sm:$0xff]
    %v1986 = vld [vmem:[#allocation10 + $0x1f0] sm:$0xff]
    %v1987 = vld [vmem:[#allocation10 + $0x1f8] sm:$0xff]
    %v1988 = vld [vmem:[#allocation11] sm:$0x3]
    %v1990 = vperm.slane %v1988, 0
    %v1991 = vperm.slane %v1988, 1
    %v2058 = vunpack.c.l.b16 %v1924
    %v2059 = vunpack.c.h.b16 %v1924
    %v2060 = vunpack.c.l.b16 %v1925
    %v2061 = vunpack.c.h.b16 %v1925
    %v2062 = vunpack.c.l.b16 %v1926
    %v2063 = vunpack.c.h.b16 %v1926
    %v2064 = vunpack.c.l.b16 %v1927
    %v2065 = vunpack.c.h.b16 %v1927
    %v2066 = vunpack.c.l.b16 %v1928
    %v2067 = vunpack.c.h.b16 %v1928
    %v2068 = vunpack.c.l.b16 %v1929
    %v2069 = vunpack.c.h.b16 %v1929
    %v2070 = vunpack.c.l.b16 %v1930
    %v2071 = vunpack.c.h.b16 %v1930
    %v2072 = vunpack.c.l.b16 %v1931
    %v2073 = vunpack.c.h.b16 %v1931
    %v2074 = vunpack.c.l.b16 %v1932
    %v2075 = vunpack.c.h.b16 %v1932
    %v2076 = vunpack.c.l.b16 %v1933
    %v2077 = vunpack.c.h.b16 %v1933
    %v2078 = vunpack.c.l.b16 %v1934
    %v2079 = vunpack.c.h.b16 %v1934
    %v2080 = vunpack.c.l.b16 %v1935
    %v2081 = vunpack.c.h.b16 %v1935
    %v2082 = vunpack.c.l.b16 %v1936
    %v2083 = vunpack.c.h.b16 %v1936
    %v2084 = vunpack.c.l.b16 %v1937
    %v2085 = vunpack.c.h.b16 %v1937
    %v2086 = vunpack.c.l.b16 %v1938
    %v2087 = vunpack.c.h.b16 %v1938
    %v2088 = vunpack.c.l.b16 %v1939
    %v2089 = vunpack.c.h.b16 %v1939
    %v2090 = vunpack.c.l.b16 %v1940
    %v2091 = vunpack.c.h.b16 %v1940
    %v2092 = vunpack.c.l.b16 %v1941
    %v2093 = vunpack.c.h.b16 %v1941
    %v2094 = vunpack.c.l.b16 %v1942
    %v2095 = vunpack.c.h.b16 %v1942
    %v2096 = vunpack.c.l.b16 %v1943
    %v2097 = vunpack.c.h.b16 %v1943
    %v2098 = vunpack.c.l.b16 %v1944
    %v2099 = vunpack.c.h.b16 %v1944
    %v2100 = vunpack.c.l.b16 %v1945
    %v2101 = vunpack.c.h.b16 %v1945
    %v2102 = vunpack.c.l.b16 %v1946
    %v2103 = vunpack.c.h.b16 %v1946
    %v2104 = vunpack.c.l.b16 %v1947
    %v2105 = vunpack.c.h.b16 %v1947
    %v2106 = vunpack.c.l.b16 %v1948
    %v2107 = vunpack.c.h.b16 %v1948
    %v2108 = vunpack.c.l.b16 %v1949
    %v2109 = vunpack.c.h.b16 %v1949
    %v2110 = vunpack.c.l.b16 %v1950
    %v2111 = vunpack.c.h.b16 %v1950
    %v2112 = vunpack.c.l.b16 %v1951
    %v2113 = vunpack.c.h.b16 %v1951
    %v2114 = vunpack.c.l.b16 %v1952
    %v2115 = vunpack.c.h.b16 %v1952
    %v2116 = vunpack.c.l.b16 %v1953
    %v2117 = vunpack.c.h.b16 %v1953
    %v2118 = vunpack.c.l.b16 %v1954
    %v2119 = vunpack.c.h.b16 %v1954
    %v2120 = vunpack.c.l.b16 %v1955
    %v2121 = vunpack.c.h.b16 %v1955
    %v2122 = vunpack.c.l.b16 %v1956
    %v2123 = vunpack.c.h.b16 %v1956
    %v2124 = vunpack.c.l.b16 %v1957
    %v2125 = vunpack.c.h.b16 %v1957
    %v2126 = vunpack.c.l.b16 %v1958
    %v2127 = vunpack.c.h.b16 %v1958
    %v2128 = vunpack.c.l.b16 %v1959
    %v2129 = vunpack.c.h.b16 %v1959
    %v2130 = vunpack.c.l.b16 %v1960
    %v2131 = vunpack.c.h.b16 %v1960
    %v2132 = vunpack.c.l.b16 %v1961
    %v2133 = vunpack.c.h.b16 %v1961
    %v2134 = vunpack.c.l.b16 %v1962
    %v2135 = vunpack.c.h.b16 %v1962
    %v2136 = vunpack.c.l.b16 %v1963
    %v2137 = vunpack.c.h.b16 %v1963
    %v2138 = vunpack.c.l.b16 %v1964
    %v2139 = vunpack.c.h.b16 %v1964
    %v2140 = vunpack.c.l.b16 %v1965
    %v2141 = vunpack.c.h.b16 %v1965
    %v2142 = vunpack.c.l.b16 %v1966
    %v2143 = vunpack.c.h.b16 %v1966
    %v2144 = vunpack.c.l.b16 %v1967
    %v2145 = vunpack.c.h.b16 %v1967
    %v2146 = vunpack.c.l.b16 %v1968
    %v2147 = vunpack.c.h.b16 %v1968
    %v2148 = vunpack.c.l.b16 %v1969
    %v2149 = vunpack.c.h.b16 %v1969
    %v2150 = vunpack.c.l.b16 %v1970
    %v2151 = vunpack.c.h.b16 %v1970
    %v2152 = vunpack.c.l.b16 %v1971
    %v2153 = vunpack.c.h.b16 %v1971
    %v2154 = vunpack.c.l.b16 %v1972
    %v2155 = vunpack.c.h.b16 %v1972
    %v2156 = vunpack.c.l.b16 %v1973
    %v2157 = vunpack.c.h.b16 %v1973
    %v2158 = vunpack.c.l.b16 %v1974
    %v2159 = vunpack.c.h.b16 %v1974
    %v2160 = vunpack.c.l.b16 %v1975
    %v2161 = vunpack.c.h.b16 %v1975
    %v2162 = vunpack.c.l.b16 %v1976
    %v2163 = vunpack.c.h.b16 %v1976
    %v2164 = vunpack.c.l.b16 %v1977
    %v2165 = vunpack.c.h.b16 %v1977
    %v2166 = vunpack.c.l.b16 %v1978
    %v2167 = vunpack.c.h.b16 %v1978
    %v2168 = vunpack.c.l.b16 %v1979
    %v2169 = vunpack.c.h.b16 %v1979
    %v2170 = vunpack.c.l.b16 %v1980
    %v2171 = vunpack.c.h.b16 %v1980
    %v2172 = vunpack.c.l.b16 %v1981
    %v2173 = vunpack.c.h.b16 %v1981
    %v2174 = vunpack.c.l.b16 %v1982
    %v2175 = vunpack.c.h.b16 %v1982
    %v2176 = vunpack.c.l.b16 %v1983
    %v2177 = vunpack.c.h.b16 %v1983
    %v2178 = vunpack.c.l.b16 %v1984
    %v2179 = vunpack.c.h.b16 %v1984
    %v2180 = vunpack.c.l.b16 %v1985
    %v2181 = vunpack.c.h.b16 %v1985
    %v2182 = vunpack.c.l.b16 %v1986
    %v2183 = vunpack.c.h.b16 %v1986
    %v2184 = vunpack.c.l.b16 %v1987
    %v2185 = vunpack.c.h.b16 %v1987
    %v2186 = vpack.c.b16 %v2060, %v2058
    %v2187 = vpack.c.b16 %v2061, %v2059
    %v2188 = vpack.c.b16 %v2064, %v2062
    %v2189 = vpack.c.b16 %v2065, %v2063
    %v2190 = vpack.c.b16 %v2068, %v2066
    %v2191 = vpack.c.b16 %v2069, %v2067
    %v2192 = vpack.c.b16 %v2072, %v2070
    %v2193 = vpack.c.b16 %v2073, %v2071
    %v2194 = vpack.c.b16 %v2076, %v2074
    %v2195 = vpack.c.b16 %v2077, %v2075
    %v2196 = vpack.c.b16 %v2080, %v2078
    %v2197 = vpack.c.b16 %v2081, %v2079
    %v2198 = vpack.c.b16 %v2084, %v2082
    %v2199 = vpack.c.b16 %v2085, %v2083
    %v2200 = vpack.c.b16 %v2088, %v2086
    %v2201 = vpack.c.b16 %v2089, %v2087
    %v2202 = vpack.c.b16 %v2092, %v2090
    %v2203 = vpack.c.b16 %v2093, %v2091
    %v2204 = vpack.c.b16 %v2096, %v2094
    %v2205 = vpack.c.b16 %v2097, %v2095
    %v2206 = vpack.c.b16 %v2100, %v2098
    %v2207 = vpack.c.b16 %v2101, %v2099
    %v2208 = vpack.c.b16 %v2104, %v2102
    %v2209 = vpack.c.b16 %v2105, %v2103
    %v2210 = vpack.c.b16 %v2108, %v2106
    %v2211 = vpack.c.b16 %v2109, %v2107
    %v2212 = vpack.c.b16 %v2112, %v2110
    %v2213 = vpack.c.b16 %v2113, %v2111
    %v2214 = vpack.c.b16 %v2116, %v2114
    %v2215 = vpack.c.b16 %v2117, %v2115
    %v2216 = vpack.c.b16 %v2120, %v2118
    %v2217 = vpack.c.b16 %v2121, %v2119
    %v2218 = vpack.c.b16 %v2124, %v2122
    %v2219 = vpack.c.b16 %v2125, %v2123
    %v2220 = vpack.c.b16 %v2128, %v2126
    %v2221 = vpack.c.b16 %v2129, %v2127
    %v2222 = vpack.c.b16 %v2132, %v2130
    %v2223 = vpack.c.b16 %v2133, %v2131
    %v2224 = vpack.c.b16 %v2136, %v2134
    %v2225 = vpack.c.b16 %v2137, %v2135
    %v2226 = vpack.c.b16 %v2140, %v2138
    %v2227 = vpack.c.b16 %v2141, %v2139
    %v2228 = vpack.c.b16 %v2144, %v2142
    %v2229 = vpack.c.b16 %v2145, %v2143
    %v2230 = vpack.c.b16 %v2148, %v2146
    %v2231 = vpack.c.b16 %v2149, %v2147
    %v2232 = vpack.c.b16 %v2152, %v2150
    %v2233 = vpack.c.b16 %v2153, %v2151
    %v2234 = vpack.c.b16 %v2156, %v2154
    %v2235 = vpack.c.b16 %v2157, %v2155
    %v2236 = vpack.c.b16 %v2160, %v2158
    %v2237 = vpack.c.b16 %v2161, %v2159
    %v2238 = vpack.c.b16 %v2164, %v2162
    %v2239 = vpack.c.b16 %v2165, %v2163
    %v2240 = vpack.c.b16 %v2168, %v2166
    %v2241 = vpack.c.b16 %v2169, %v2167
    %v2242 = vpack.c.b16 %v2172, %v2170
    %v2243 = vpack.c.b16 %v2173, %v2171
    %v2244 = vpack.c.b16 %v2176, %v2174
    %v2245 = vpack.c.b16 %v2177, %v2175
    %v2246 = vpack.c.b16 %v2180, %v2178
    %v2247 = vpack.c.b16 %v2181, %v2179
    %v2248 = vpack.c.b16 %v2184, %v2182
    %v2249 = vpack.c.b16 %v2185, %v2183
    %2314 = vmatpush.bf16.msra.mxu0 %v2200
    %2315 = vmatpush.bf16.msra.mxu0 %v2198
    %2316 = vmatpush.bf16.msra.mxu0 %v2196
    %2317 = vmatpush.bf16.msra.mxu0 %v2194
    %2318 = vmatpush.bf16.msra.mxu0 %v2192
    %2319 = vmatpush.bf16.msra.mxu0 %v2190
    %2320 = vmatpush.bf16.msra.mxu0 %v2188
    %2321 = vmatpush.bf16.msra.mxu0 %v2186
    %2322 = vmatmul.bf16.gmra.mxu0 %v1920
    %v2323 = vpop.f32.mrf.mxu0
    %v2324 = vadd.f32 %v1990, %v2323
    %v2325 = vpop.f32.mrf.mxu0
    %2326 = vdwg.mxu0
    %2327 = vmatpush.bf16.msra.mxu0 %v2216
    %2328 = vmatpush.bf16.msra.mxu0 %v2214
    %2329 = vmatpush.bf16.msra.mxu0 %v2212
    %2330 = vmatpush.bf16.msra.mxu0 %v2210
    %2331 = vmatpush.bf16.msra.mxu0 %v2208
    %2332 = vmatpush.bf16.msra.mxu0 %v2206
    %2333 = vmatpush.bf16.msra.mxu0 %v2204
    %2334 = vmatpush.bf16.msra.mxu0 %v2202
    %2335 = vmatmul.bf16.gmra.mxu0 %v1921
    %v2336 = vpop.f32.mrf.mxu0
    %v2337 = vadd.f32 %v2324, %v2336
    %v2338 = vpop.f32.mrf.mxu0
    %2339 = vdwg.mxu0
    %2340 = vmatpush.bf16.msra.mxu0 %v2232
    %2341 = vmatpush.bf16.msra.mxu0 %v2230
    %2342 = vmatpush.bf16.msra.mxu0 %v2228
    %2343 = vmatpush.bf16.msra.mxu0 %v2226
    %2344 = vmatpush.bf16.msra.mxu0 %v2224
    %2345 = vmatpush.bf16.msra.mxu0 %v2222
    %2346 = vmatpush.bf16.msra.mxu0 %v2220
    %2347 = vmatpush.bf16.msra.mxu0 %v2218
    %2348 = vmatmul.bf16.gmra.mxu0 %v1922
    %v2349 = vpop.f32.mrf.mxu0
    %v2350 = vadd.f32 %v2337, %v2349
    %v2351 = vpop.f32.mrf.mxu0
    %2352 = vdwg.mxu0
    %2353 = vmatpush.bf16.msra.mxu0 %v2248
    %2354 = vmatpush.bf16.msra.mxu0 %v2246
    %2355 = vmatpush.bf16.msra.mxu0 %v2244
    %2356 = vmatpush.bf16.msra.mxu0 %v2242
    %2357 = vmatpush.bf16.msra.mxu0 %v2240
    %2358 = vmatpush.bf16.msra.mxu0 %v2238
    %2359 = vmatpush.bf16.msra.mxu0 %v2236
    %2360 = vmatpush.bf16.msra.mxu0 %v2234
    %2361 = vmatmul.bf16.gmra.mxu0 %v1923
    %v2362 = vpop.f32.mrf.mxu0
    %v2363 = vadd.f32 %v2350, %v2362
    %v2364 = vpop.f32.mrf.mxu0
    %2365 = vdwg.mxu0
    %2366 = vmatpush.bf16.msra.mxu0 %v2201
    %2367 = vmatpush.bf16.msra.mxu0 %v2199
    %2368 = vmatpush.bf16.msra.mxu0 %v2197
    %2369 = vmatpush.bf16.msra.mxu0 %v2195
    %2370 = vmatpush.bf16.msra.mxu0 %v2193
    %2371 = vmatpush.bf16.msra.mxu0 %v2191
    %2372 = vmatpush.bf16.msra.mxu0 %v2189
    %2373 = vmatpush.bf16.msra.mxu0 %v2187
    %2374 = vmatmul.bf16.gmra.mxu0 %v1920
    %v2375 = vpop.f32.mrf.mxu0
    %v2376 = vadd.f32 %v1991, %v2375
    %v2377 = vpop.f32.mrf.mxu0
    %2378 = vdwg.mxu0
    %2379 = vmatpush.bf16.msra.mxu0 %v2217
    %2380 = vmatpush.bf16.msra.mxu0 %v2215
    %2381 = vmatpush.bf16.msra.mxu0 %v2213
    %2382 = vmatpush.bf16.msra.mxu0 %v2211
    %2383 = vmatpush.bf16.msra.mxu0 %v2209
    %2384 = vmatpush.bf16.msra.mxu0 %v2207
    %2385 = vmatpush.bf16.msra.mxu0 %v2205
    %2386 = vmatpush.bf16.msra.mxu0 %v2203
    %2387 = vmatmul.bf16.gmra.mxu0 %v1921
    %v2388 = vpop.f32.mrf.mxu0
    %v2389 = vadd.f32 %v2376, %v2388
    %v2390 = vpop.f32.mrf.mxu0
    %2391 = vdwg.mxu0
    %2392 = vmatpush.bf16.msra.mxu0 %v2233
    %2393 = vmatpush.bf16.msra.mxu0 %v2231
    %2394 = vmatpush.bf16.msra.mxu0 %v2229
    %2395 = vmatpush.bf16.msra.mxu0 %v2227
    %2396 = vmatpush.bf16.msra.mxu0 %v2225
    %2397 = vmatpush.bf16.msra.mxu0 %v2223
    %2398 = vmatpush.bf16.msra.mxu0 %v2221
    %2399 = vmatpush.bf16.msra.mxu0 %v2219
    %2400 = vmatmul.bf16.gmra.mxu0 %v1922
    %v2401 = vpop.f32.mrf.mxu0
    %v2402 = vadd.f32 %v2389, %v2401
    %v2403 = vpop.f32.mrf.mxu0
    %2404 = vdwg.mxu0
    %2405 = vmatpush.bf16.msra.mxu0 %v2249
    %2406 = vmatpush.bf16.msra.mxu0 %v2247
    %2407 = vmatpush.bf16.msra.mxu0 %v2245
    %2408 = vmatpush.bf16.msra.mxu0 %v2243
    %2409 = vmatpush.bf16.msra.mxu0 %v2241
    %2410 = vmatpush.bf16.msra.mxu0 %v2239
    %2411 = vmatpush.bf16.msra.mxu0 %v2237
    %2412 = vmatpush.bf16.msra.mxu0 %v2235
    %2413 = vmatmul.bf16.gmra.mxu0 %v1923
    %v2414 = vpop.f32.mrf.mxu0
    %v2415 = vadd.f32 %v2402, %v2414
    %v2416 = vpop.f32.mrf.mxu0
    %2417 = vdwg.mxu0
    %v2418 = vmul.f32 %v2415, 0.5
    %v2419 = vmul.f32 %v2418, 1.442695
    %v2420 = vpow.pop %v2419
    %v2421 = vld [vmem:[#allocation5] sm:$0xff]
    %v2422 = vmul.f32 %v2421, %v2420
    %v2423 = vadd.f32 %v2363, %v2422
    %v2424 = vpack.c.bf16 %v2423, %v2423
    %v2425 = vld [vmem:[#allocation13] sm:$0xff]
    %v2426 = vld [vmem:[#allocation13 + $0x8] sm:$0xff]
    %v2427 = vld [vmem:[#allocation13 + $0x10] sm:$0xff]
    %v2428 = vld [vmem:[#allocation13 + $0x18] sm:$0xff]
    %v2429 = vld [vmem:[#allocation13 + $0x20] sm:$0xff]
    %v2430 = vld [vmem:[#allocation13 + $0x28] sm:$0xff]
    %v2431 = vld [vmem:[#allocation13 + $0x30] sm:$0xff]
    %v2432 = vld [vmem:[#allocation13 + $0x38] sm:$0xff]
    %v2433 = vld [vmem:[#allocation13 + $0x40] sm:$0xff]
    %v2434 = vld [vmem:[#allocation13 + $0x48] sm:$0xff]
    %v2435 = vld [vmem:[#allocation13 + $0x50] sm:$0xff]
    %v2436 = vld [vmem:[#allocation13 + $0x58] sm:$0xff]
    %v2437 = vld [vmem:[#allocation13 + $0x60] sm:$0xff]
    %v2438 = vld [vmem:[#allocation13 + $0x68] sm:$0xff]
    %v2439 = vld [vmem:[#allocation13 + $0x70] sm:$0xff]
    %v2440 = vld [vmem:[#allocation13 + $0x78] sm:$0xff]
    %v2441 = vld [vmem:[#allocation13 + $0x80] sm:$0xff]
    %v2442 = vld [vmem:[#allocation13 + $0x88] sm:$0xff]
    %v2443 = vld [vmem:[#allocation13 + $0x90] sm:$0xff]
    %v2444 = vld [vmem:[#allocation13 + $0x98] sm:$0xff]
    %v2445 = vld [vmem:[#allocation13 + $0xa0] sm:$0xff]
    %v2446 = vld [vmem:[#allocation13 + $0xa8] sm:$0xff]
    %v2447 = vld [vmem:[#allocation13 + $0xb0] sm:$0xff]
    %v2448 = vld [vmem:[#allocation13 + $0xb8] sm:$0xff]
    %v2449 = vld [vmem:[#allocation13 + $0xc0] sm:$0xff]
    %v2450 = vld [vmem:[#allocation13 + $0xc8] sm:$0xff]
    %v2451 = vld [vmem:[#allocation13 + $0xd0] sm:$0xff]
    %v2452 = vld [vmem:[#allocation13 + $0xd8] sm:$0xff]
    %v2453 = vld [vmem:[#allocation13 + $0xe0] sm:$0xff]
    %v2454 = vld [vmem:[#allocation13 + $0xe8] sm:$0xff]
    %v2455 = vld [vmem:[#allocation13 + $0xf0] sm:$0xff]
    %v2456 = vld [vmem:[#allocation13 + $0xf8] sm:$0xff]
    %v2457 = vld [vmem:[#allocation14] sm:$0xf]
    %v2459 = vperm.slane %v2457, 0
    %v2460 = vperm.slane %v2457, 1
    %v2461 = vperm.slane %v2457, 2
    %v2462 = vperm.slane %v2457, 3
    %v2499 = vunpack.c.l.b16 %v2425
    %v2500 = vunpack.c.h.b16 %v2425
    %v2501 = vunpack.c.l.b16 %v2426
    %v2502 = vunpack.c.h.b16 %v2426
    %v2503 = vunpack.c.l.b16 %v2427
    %v2504 = vunpack.c.h.b16 %v2427
    %v2505 = vunpack.c.l.b16 %v2428
    %v2506 = vunpack.c.h.b16 %v2428
    %v2507 = vunpack.c.l.b16 %v2429
    %v2508 = vunpack.c.h.b16 %v2429
    %v2509 = vunpack.c.l.b16 %v2430
    %v2510 = vunpack.c.h.b16 %v2430
    %v2511 = vunpack.c.l.b16 %v2431
    %v2512 = vunpack.c.h.b16 %v2431
    %v2513 = vunpack.c.l.b16 %v2432
    %v2514 = vunpack.c.h.b16 %v2432
    %v2515 = vunpack.c.l.b16 %v2433
    %v2516 = vunpack.c.h.b16 %v2433
    %v2517 = vunpack.c.l.b16 %v2434
    %v2518 = vunpack.c.h.b16 %v2434
    %v2519 = vunpack.c.l.b16 %v2435
    %v2520 = vunpack.c.h.b16 %v2435
    %v2521 = vunpack.c.l.b16 %v2436
    %v2522 = vunpack.c.h.b16 %v2436
    %v2523 = vunpack.c.l.b16 %v2437
    %v2524 = vunpack.c.h.b16 %v2437
    %v2525 = vunpack.c.l.b16 %v2438
    %v2526 = vunpack.c.h.b16 %v2438
    %v2527 = vunpack.c.l.b16 %v2439
    %v2528 = vunpack.c.h.b16 %v2439
    %v2529 = vunpack.c.l.b16 %v2440
    %v2530 = vunpack.c.h.b16 %v2440
    %v2531 = vunpack.c.l.b16 %v2441
    %v2532 = vunpack.c.h.b16 %v2441
    %v2533 = vunpack.c.l.b16 %v2442
    %v2534 = vunpack.c.h.b16 %v2442
    %v2535 = vunpack.c.l.b16 %v2443
    %v2536 = vunpack.c.h.b16 %v2443
    %v2537 = vunpack.c.l.b16 %v2444
    %v2538 = vunpack.c.h.b16 %v2444
    %v2539 = vunpack.c.l.b16 %v2445
    %v2540 = vunpack.c.h.b16 %v2445
    %v2541 = vunpack.c.l.b16 %v2446
    %v2542 = vunpack.c.h.b16 %v2446
    %v2543 = vunpack.c.l.b16 %v2447
    %v2544 = vunpack.c.h.b16 %v2447
    %v2545 = vunpack.c.l.b16 %v2448
    %v2546 = vunpack.c.h.b16 %v2448
    %v2547 = vunpack.c.l.b16 %v2449
    %v2548 = vunpack.c.h.b16 %v2449
    %v2549 = vunpack.c.l.b16 %v2450
    %v2550 = vunpack.c.h.b16 %v2450
    %v2551 = vunpack.c.l.b16 %v2451
    %v2552 = vunpack.c.h.b16 %v2451
    %v2553 = vunpack.c.l.b16 %v2452
    %v2554 = vunpack.c.h.b16 %v2452
    %v2555 = vunpack.c.l.b16 %v2453
    %v2556 = vunpack.c.h.b16 %v2453
    %v2557 = vunpack.c.l.b16 %v2454
    %v2558 = vunpack.c.h.b16 %v2454
    %v2559 = vunpack.c.l.b16 %v2455
    %v2560 = vunpack.c.h.b16 %v2455
    %v2561 = vunpack.c.l.b16 %v2456
    %v2562 = vunpack.c.h.b16 %v2456
    %v2563 = vpack.c.b16 %v2503, %v2499
    %v2564 = vpack.c.b16 %v2504, %v2500
    %v2565 = vpack.c.b16 %v2505, %v2501
    %v2566 = vpack.c.b16 %v2506, %v2502
    %v2567 = vpack.c.b16 %v2511, %v2507
    %v2568 = vpack.c.b16 %v2512, %v2508
    %v2569 = vpack.c.b16 %v2513, %v2509
    %v2570 = vpack.c.b16 %v2514, %v2510
    %v2571 = vpack.c.b16 %v2519, %v2515
    %v2572 = vpack.c.b16 %v2520, %v2516
    %v2573 = vpack.c.b16 %v2521, %v2517
    %v2574 = vpack.c.b16 %v2522, %v2518
    %v2575 = vpack.c.b16 %v2527, %v2523
    %v2576 = vpack.c.b16 %v2528, %v2524
    %v2577 = vpack.c.b16 %v2529, %v2525
    %v2578 = vpack.c.b16 %v2530, %v2526
    %v2579 = vpack.c.b16 %v2535, %v2531
    %v2580 = vpack.c.b16 %v2536, %v2532
    %v2581 = vpack.c.b16 %v2537, %v2533
    %v2582 = vpack.c.b16 %v2538, %v2534
    %v2583 = vpack.c.b16 %v2543, %v2539
    %v2584 = vpack.c.b16 %v2544, %v2540
    %v2585 = vpack.c.b16 %v2545, %v2541
    %v2586 = vpack.c.b16 %v2546, %v2542
    %v2587 = vpack.c.b16 %v2551, %v2547
    %v2588 = vpack.c.b16 %v2552, %v2548
    %v2589 = vpack.c.b16 %v2553, %v2549
    %v2590 = vpack.c.b16 %v2554, %v2550
    %v2591 = vpack.c.b16 %v2559, %v2555
    %v2592 = vpack.c.b16 %v2560, %v2556
    %v2593 = vpack.c.b16 %v2561, %v2557
    %v2594 = vpack.c.b16 %v2562, %v2558
    %2627 = vmatpush.bf16.msra.mxu0 %v2591
    %2628 = vmatpush.bf16.msra.mxu0 %v2587
    %2629 = vmatpush.bf16.msra.mxu0 %v2583
    %2630 = vmatpush.bf16.msra.mxu0 %v2579
    %2631 = vmatpush.bf16.msra.mxu0 %v2575
    %2632 = vmatpush.bf16.msra.mxu0 %v2571
    %2633 = vmatpush.bf16.msra.mxu0 %v2567
    %2634 = vmatpush.bf16.msra.mxu0 %v2563
    %2635 = vmatmul.bf16.gmra.mxu0 %v2424
    %v2636 = vpop.f32.mrf.mxu0
    %v2637 = vadd.f32 %v2459, %v2636
    %v2638 = vpop.f32.mrf.mxu0
    %2639 = vdwg.mxu0
    %2640 = vmatpush.bf16.msra.mxu0 %v2592
    %2641 = vmatpush.bf16.msra.mxu0 %v2588
    %2642 = vmatpush.bf16.msra.mxu0 %v2584
    %2643 = vmatpush.bf16.msra.mxu0 %v2580
    %2644 = vmatpush.bf16.msra.mxu0 %v2576
    %2645 = vmatpush.bf16.msra.mxu0 %v2572
    %2646 = vmatpush.bf16.msra.mxu0 %v2568
    %2647 = vmatpush.bf16.msra.mxu0 %v2564
    %2648 = vmatmul.bf16.gmra.mxu0 %v2424
    %v2649 = vpop.f32.mrf.mxu0
    %v2650 = vadd.f32 %v2460, %v2649
    %v2651 = vpop.f32.mrf.mxu0
    %2652 = vdwg.mxu0
    %2653 = vmatpush.bf16.msra.mxu0 %v2593
    %2654 = vmatpush.bf16.msra.mxu0 %v2589
    %2655 = vmatpush.bf16.msra.mxu0 %v2585
    %2656 = vmatpush.bf16.msra.mxu0 %v2581
    %2657 = vmatpush.bf16.msra.mxu0 %v2577
    %2658 = vmatpush.bf16.msra.mxu0 %v2573
    %2659 = vmatpush.bf16.msra.mxu0 %v2569
    %2660 = vmatpush.bf16.msra.mxu0 %v2565
    %2661 = vmatmul.bf16.gmra.mxu0 %v2424
    %v2662 = vpop.f32.mrf.mxu0
    %v2663 = vadd.f32 %v2461, %v2662
    %v2664 = vpop.f32.mrf.mxu0
    %2665 = vdwg.mxu0
    %2666 = vmatpush.bf16.msra.mxu0 %v2594
    %2667 = vmatpush.bf16.msra.mxu0 %v2590
    %2668 = vmatpush.bf16.msra.mxu0 %v2586
    %2669 = vmatpush.bf16.msra.mxu0 %v2582
    %2670 = vmatpush.bf16.msra.mxu0 %v2578
    %2671 = vmatpush.bf16.msra.mxu0 %v2574
    %2672 = vmatpush.bf16.msra.mxu0 %v2570
    %2673 = vmatpush.bf16.msra.mxu0 %v2566
    %2674 = vmatmul.bf16.gmra.mxu0 %v2424
    %v2675 = vpop.f32.mrf.mxu0
    %v2676 = vadd.f32 %v2462, %v2675
    %v2677 = vpop.f32.mrf.mxu0
    %2678 = vdwg.mxu0
    %v2679 = vmax.f32 %v2637, 0.0
    %v2680 = vmax.f32 %v2650, 0.0
    %v2681 = vmax.f32 %v2663, 0.0
    %v2682 = vmax.f32 %v2676, 0.0
    %v2683 = vpack.c.bf16 %v2679, %v2679
    %v2684 = vpack.c.bf16 %v2680, %v2680
    %v2685 = vpack.c.bf16 %v2681, %v2681
    %v2686 = vpack.c.bf16 %v2682, %v2682
    %v2687 = vld [vmem:[#allocation16] sm:$0xff]
    %v2688 = vld [vmem:[#allocation16 + $0x8] sm:$0xff]
    %v2689 = vld [vmem:[#allocation16 + $0x10] sm:$0xff]
    %v2690 = vld [vmem:[#allocation16 + $0x18] sm:$0xf]
    %v2691 = vld [vmem:[#allocation16 + $0x1c] sm:$0xff]
    %v2692 = vld [vmem:[#allocation16 + $0x24] sm:$0xff]
    %v2693 = vld [vmem:[#allocation16 + $0x2c] sm:$0xff]
    %v2694 = vld [vmem:[#allocation16 + $0x34] sm:$0xf]
    %v2695 = vld [vmem:[#allocation16 + $0x38] sm:$0xff]
    %v2696 = vld [vmem:[#allocation16 + $0x40] sm:$0xff]
    %v2697 = vld [vmem:[#allocation16 + $0x48] sm:$0xff]
    %v2698 = vld [vmem:[#allocation16 + $0x50] sm:$0xf]
    %v2699 = vld [vmem:[#allocation16 + $0x54] sm:$0xff]
    %v2700 = vld [vmem:[#allocation16 + $0x5c] sm:$0xff]
    %v2701 = vld [vmem:[#allocation16 + $0x64] sm:$0xff]
    %v2702 = vld [vmem:[#allocation16 + $0x6c] sm:$0xf]
    %v2703 = vld [vmem:[#allocation16 + $0x70] sm:$0xff]
    %v2704 = vld [vmem:[#allocation16 + $0x78] sm:$0xff]
    %v2705 = vld [vmem:[#allocation16 + $0x80] sm:$0xff]
    %v2706 = vld [vmem:[#allocation16 + $0x88] sm:$0xf]
    %v2707 = vld [vmem:[#allocation16 + $0x8c] sm:$0xff]
    %v2708 = vld [vmem:[#allocation16 + $0x94] sm:$0xff]
    %v2709 = vld [vmem:[#allocation16 + $0x9c] sm:$0xff]
    %v2710 = vld [vmem:[#allocation16 + $0xa4] sm:$0xf]
    %v2711 = vld [vmem:[#allocation16 + $0xa8] sm:$0xff]
    %v2712 = vld [vmem:[#allocation16 + $0xb0] sm:$0xff]
    %v2713 = vld [vmem:[#allocation16 + $0xb8] sm:$0xff]
    %v2714 = vld [vmem:[#allocation16 + $0xc0] sm:$0xf]
    %v2715 = vld [vmem:[#allocation16 + $0xc4] sm:$0xff]
    %v2716 = vld [vmem:[#allocation16 + $0xcc] sm:$0xff]
    %v2717 = vld [vmem:[#allocation16 + $0xd4] sm:$0xff]
    %v2718 = vld [vmem:[#allocation16 + $0xdc] sm:$0xf]
    %v2719 = vld [vmem:[#allocation16 + $0xe0] sm:$0xff]
    %v2720 = vld [vmem:[#allocation16 + $0xe8] sm:$0xff]
    %v2721 = vld [vmem:[#allocation16 + $0xf0] sm:$0xff]
    %v2722 = vld [vmem:[#allocation16 + $0xf8] sm:$0xf]
    %v2723 = vld [vmem:[#allocation16 + $0xfc] sm:$0xff]
    %v2724 = vld [vmem:[#allocation16 + $0x104] sm:$0xff]
    %v2725 = vld [vmem:[#allocation16 + $0x10c] sm:$0xff]
    %v2726 = vld [vmem:[#allocation16 + $0x114] sm:$0xf]
    %v2727 = vld [vmem:[#allocation16 + $0x118] sm:$0xff]
    %v2728 = vld [vmem:[#allocation16 + $0x120] sm:$0xff]
    %v2729 = vld [vmem:[#allocation16 + $0x128] sm:$0xff]
    %v2730 = vld [vmem:[#allocation16 + $0x130] sm:$0xf]
    %v2731 = vld [vmem:[#allocation16 + $0x134] sm:$0xff]
    %v2732 = vld [vmem:[#allocation16 + $0x13c] sm:$0xff]
    %v2733 = vld [vmem:[#allocation16 + $0x144] sm:$0xff]
    %v2734 = vld [vmem:[#allocation16 + $0x14c] sm:$0xf]
    %v2735 = vld [vmem:[#allocation16 + $0x150] sm:$0xff]
    %v2736 = vld [vmem:[#allocation16 + $0x158] sm:$0xff]
    %v2737 = vld [vmem:[#allocation16 + $0x160] sm:$0xff]
    %v2738 = vld [vmem:[#allocation16 + $0x168] sm:$0xf]
    %v2739 = vld [vmem:[#allocation16 + $0x16c] sm:$0xff]
    %v2740 = vld [vmem:[#allocation16 + $0x174] sm:$0xff]
    %v2741 = vld [vmem:[#allocation16 + $0x17c] sm:$0xff]
    %v2742 = vld [vmem:[#allocation16 + $0x184] sm:$0xf]
    %v2743 = vld [vmem:[#allocation16 + $0x188] sm:$0xff]
    %v2744 = vld [vmem:[#allocation16 + $0x190] sm:$0xff]
    %v2745 = vld [vmem:[#allocation16 + $0x198] sm:$0xff]
    %v2746 = vld [vmem:[#allocation16 + $0x1a0] sm:$0xf]
    %v2747 = vld [vmem:[#allocation16 + $0x1a4] sm:$0xff]
    %v2748 = vld [vmem:[#allocation16 + $0x1ac] sm:$0xff]
    %v2749 = vld [vmem:[#allocation16 + $0x1b4] sm:$0xff]
    %v2750 = vld [vmem:[#allocation16 + $0x1bc] sm:$0xf]
    %v2751 = vld [vmem:[#allocation16 + $0x1c0] sm:$0xff]
    %v2752 = vld [vmem:[#allocation16 + $0x1c8] sm:$0xff]
    %v2753 = vld [vmem:[#allocation16 + $0x1d0] sm:$0xff]
    %v2754 = vld [vmem:[#allocation16 + $0x1d8] sm:$0xf]
    %v2755 = vld [vmem:[#allocation16 + $0x1dc] sm:$0xff]
    %v2756 = vld [vmem:[#allocation16 + $0x1e4] sm:$0xff]
    %v2757 = vld [vmem:[#allocation16 + $0x1ec] sm:$0xff]
    %v2758 = vld [vmem:[#allocation16 + $0x1f4] sm:$0xf]
    %v2759 = vld [vmem:[#allocation16 + $0x1f8] sm:$0xff]
    %v2760 = vld [vmem:[#allocation16 + $0x200] sm:$0xff]
    %v2761 = vld [vmem:[#allocation16 + $0x208] sm:$0xff]
    %v2762 = vld [vmem:[#allocation16 + $0x210] sm:$0xf]
    %v2763 = vld [vmem:[#allocation16 + $0x214] sm:$0xff]
    %v2764 = vld [vmem:[#allocation16 + $0x21c] sm:$0xff]
    %v2765 = vld [vmem:[#allocation16 + $0x224] sm:$0xff]
    %v2766 = vld [vmem:[#allocation16 + $0x22c] sm:$0xf]
    %v2767 = vld [vmem:[#allocation16 + $0x230] sm:$0xff]
    %v2768 = vld [vmem:[#allocation16 + $0x238] sm:$0xff]
    %v2769 = vld [vmem:[#allocation16 + $0x240] sm:$0xff]
    %v2770 = vld [vmem:[#allocation16 + $0x248] sm:$0xf]
    %v2771 = vld [vmem:[#allocation16 + $0x24c] sm:$0xff]
    %v2772 = vld [vmem:[#allocation16 + $0x254] sm:$0xff]
    %v2773 = vld [vmem:[#allocation16 + $0x25c] sm:$0xff]
    %v2774 = vld [vmem:[#allocation16 + $0x264] sm:$0xf]
    %v2775 = vld [vmem:[#allocation16 + $0x268] sm:$0xff]
    %v2776 = vld [vmem:[#allocation16 + $0x270] sm:$0xff]
    %v2777 = vld [vmem:[#allocation16 + $0x278] sm:$0xff]
    %v2778 = vld [vmem:[#allocation16 + $0x280] sm:$0xf]
    %v2779 = vld [vmem:[#allocation16 + $0x284] sm:$0xff]
    %v2780 = vld [vmem:[#allocation16 + $0x28c] sm:$0xff]
    %v2781 = vld [vmem:[#allocation16 + $0x294] sm:$0xff]
    %v2782 = vld [vmem:[#allocation16 + $0x29c] sm:$0xf]
    %v2783 = vld [vmem:[#allocation16 + $0x2a0] sm:$0xff]
    %v2784 = vld [vmem:[#allocation16 + $0x2a8] sm:$0xff]
    %v2785 = vld [vmem:[#allocation16 + $0x2b0] sm:$0xff]
    %v2786 = vld [vmem:[#allocation16 + $0x2b8] sm:$0xf]
    %v2787 = vld [vmem:[#allocation16 + $0x2bc] sm:$0xff]
    %v2788 = vld [vmem:[#allocation16 + $0x2c4] sm:$0xff]
    %v2789 = vld [vmem:[#allocation16 + $0x2cc] sm:$0xff]
    %v2790 = vld [vmem:[#allocation16 + $0x2d4] sm:$0xf]
    %v2791 = vld [vmem:[#allocation16 + $0x2d8] sm:$0xff]
    %v2792 = vld [vmem:[#allocation16 + $0x2e0] sm:$0xff]
    %v2793 = vld [vmem:[#allocation16 + $0x2e8] sm:$0xff]
    %v2794 = vld [vmem:[#allocation16 + $0x2f0] sm:$0xf]
    %v2795 = vld [vmem:[#allocation16 + $0x2f4] sm:$0xff]
    %v2796 = vld [vmem:[#allocation16 + $0x2fc] sm:$0xff]
    %v2797 = vld [vmem:[#allocation16 + $0x304] sm:$0xff]
    %v2798 = vld [vmem:[#allocation16 + $0x30c] sm:$0xf]
    %v2799 = vld [vmem:[#allocation16 + $0x310] sm:$0xff]
    %v2800 = vld [vmem:[#allocation16 + $0x318] sm:$0xff]
    %v2801 = vld [vmem:[#allocation16 + $0x320] sm:$0xff]
    %v2802 = vld [vmem:[#allocation16 + $0x328] sm:$0xf]
    %v2803 = vld [vmem:[#allocation16 + $0x32c] sm:$0xff]
    %v2804 = vld [vmem:[#allocation16 + $0x334] sm:$0xff]
    %v2805 = vld [vmem:[#allocation16 + $0x33c] sm:$0xff]
    %v2806 = vld [vmem:[#allocation16 + $0x344] sm:$0xf]
    %v2807 = vld [vmem:[#allocation16 + $0x348] sm:$0xff]
    %v2808 = vld [vmem:[#allocation16 + $0x350] sm:$0xff]
    %v2809 = vld [vmem:[#allocation16 + $0x358] sm:$0xff]
    %v2810 = vld [vmem:[#allocation16 + $0x360] sm:$0xf]
    %v2811 = vld [vmem:[#allocation16 + $0x364] sm:$0xff]
    %v2812 = vld [vmem:[#allocation16 + $0x36c] sm:$0xff]
    %v2813 = vld [vmem:[#allocation16 + $0x374] sm:$0xff]
    %v2814 = vld [vmem:[#allocation16 + $0x37c] sm:$0xf]
    %v2815 = vld [vmem:[#allocation16 + $0x380] sm:$0xff]
    %v2816 = vld [vmem:[#allocation16 + $0x388] sm:$0xff]
    %v2817 = vld [vmem:[#allocation16 + $0x390] sm:$0xff]
    %v2818 = vld [vmem:[#allocation16 + $0x398] sm:$0xf]
    %v2819 = vld [vmem:[#allocation16 + $0x39c] sm:$0xff]
    %v2820 = vld [vmem:[#allocation16 + $0x3a4] sm:$0xff]
    %v2821 = vld [vmem:[#allocation16 + $0x3ac] sm:$0xff]
    %v2822 = vld [vmem:[#allocation16 + $0x3b4] sm:$0xf]
    %v2823 = vld [vmem:[#allocation16 + $0x3b8] sm:$0xff]
    %v2824 = vld [vmem:[#allocation16 + $0x3c0] sm:$0xff]
    %v2825 = vld [vmem:[#allocation16 + $0x3c8] sm:$0xff]
    %v2826 = vld [vmem:[#allocation16 + $0x3d0] sm:$0xf]
    %v2827 = vld [vmem:[#allocation16 + $0x3d4] sm:$0xff]
    %v2828 = vld [vmem:[#allocation16 + $0x3dc] sm:$0xff]
    %v2829 = vld [vmem:[#allocation16 + $0x3e4] sm:$0xff]
    %v2830 = vld [vmem:[#allocation16 + $0x3ec] sm:$0xf]
    %v2831 = vld [vmem:[#allocation16 + $0x3f0] sm:$0xff]
    %v2832 = vld [vmem:[#allocation16 + $0x3f8] sm:$0xff]
    %v2833 = vld [vmem:[#allocation16 + $0x400] sm:$0xff]
    %v2834 = vld [vmem:[#allocation16 + $0x408] sm:$0xf]
    %v2835 = vld [vmem:[#allocation16 + $0x40c] sm:$0xff]
    %v2836 = vld [vmem:[#allocation16 + $0x414] sm:$0xff]
    %v2837 = vld [vmem:[#allocation16 + $0x41c] sm:$0xff]
    %v2838 = vld [vmem:[#allocation16 + $0x424] sm:$0xf]
    %v2839 = vld [vmem:[#allocation16 + $0x428] sm:$0xff]
    %v2840 = vld [vmem:[#allocation16 + $0x430] sm:$0xff]
    %v2841 = vld [vmem:[#allocation16 + $0x438] sm:$0xff]
    %v2842 = vld [vmem:[#allocation16 + $0x440] sm:$0xf]
    %v2843 = vld [vmem:[#allocation16 + $0x444] sm:$0xff]
    %v2844 = vld [vmem:[#allocation16 + $0x44c] sm:$0xff]
    %v2845 = vld [vmem:[#allocation16 + $0x454] sm:$0xff]
    %v2846 = vld [vmem:[#allocation16 + $0x45c] sm:$0xf]
    %v2847 = vld [vmem:[#allocation16 + $0x460] sm:$0xff]
    %v2848 = vld [vmem:[#allocation16 + $0x468] sm:$0xff]
    %v2849 = vld [vmem:[#allocation16 + $0x470] sm:$0xff]
    %v2850 = vld [vmem:[#allocation16 + $0x478] sm:$0xf]
    %v2851 = vld [vmem:[#allocation16 + $0x47c] sm:$0xff]
    %v2852 = vld [vmem:[#allocation16 + $0x484] sm:$0xff]
    %v2853 = vld [vmem:[#allocation16 + $0x48c] sm:$0xff]
    %v2854 = vld [vmem:[#allocation16 + $0x494] sm:$0xf]
    %v2855 = vld [vmem:[#allocation16 + $0x498] sm:$0xff]
    %v2856 = vld [vmem:[#allocation16 + $0x4a0] sm:$0xff]
    %v2857 = vld [vmem:[#allocation16 + $0x4a8] sm:$0xff]
    %v2858 = vld [vmem:[#allocation16 + $0x4b0] sm:$0xf]
    %v2859 = vld [vmem:[#allocation16 + $0x4b4] sm:$0xff]
    %v2860 = vld [vmem:[#allocation16 + $0x4bc] sm:$0xff]
    %v2861 = vld [vmem:[#allocation16 + $0x4c4] sm:$0xff]
    %v2862 = vld [vmem:[#allocation16 + $0x4cc] sm:$0xf]
    %v2863 = vld [vmem:[#allocation16 + $0x4d0] sm:$0xff]
    %v2864 = vld [vmem:[#allocation16 + $0x4d8] sm:$0xff]
    %v2865 = vld [vmem:[#allocation16 + $0x4e0] sm:$0xff]
    %v2866 = vld [vmem:[#allocation16 + $0x4e8] sm:$0xf]
    %v2867 = vld [vmem:[#allocation16 + $0x4ec] sm:$0xff]
    %v2868 = vld [vmem:[#allocation16 + $0x4f4] sm:$0xff]
    %v2869 = vld [vmem:[#allocation16 + $0x4fc] sm:$0xff]
    %v2870 = vld [vmem:[#allocation16 + $0x504] sm:$0xf]
    %v2871 = vld [vmem:[#allocation16 + $0x508] sm:$0xff]
    %v2872 = vld [vmem:[#allocation16 + $0x510] sm:$0xff]
    %v2873 = vld [vmem:[#allocation16 + $0x518] sm:$0xff]
    %v2874 = vld [vmem:[#allocation16 + $0x520] sm:$0xf]
    %v2875 = vld [vmem:[#allocation16 + $0x524] sm:$0xff]
    %v2876 = vld [vmem:[#allocation16 + $0x52c] sm:$0xff]
    %v2877 = vld [vmem:[#allocation16 + $0x534] sm:$0xff]
    %v2878 = vld [vmem:[#allocation16 + $0x53c] sm:$0xf]
    %v2879 = vld [vmem:[#allocation16 + $0x540] sm:$0xff]
    %v2880 = vld [vmem:[#allocation16 + $0x548] sm:$0xff]
    %v2881 = vld [vmem:[#allocation16 + $0x550] sm:$0xff]
    %v2882 = vld [vmem:[#allocation16 + $0x558] sm:$0xf]
    %v2883 = vld [vmem:[#allocation16 + $0x55c] sm:$0xff]
    %v2884 = vld [vmem:[#allocation16 + $0x564] sm:$0xff]
    %v2885 = vld [vmem:[#allocation16 + $0x56c] sm:$0xff]
    %v2886 = vld [vmem:[#allocation16 + $0x574] sm:$0xf]
    %v2887 = vld [vmem:[#allocation16 + $0x578] sm:$0xff]
    %v2888 = vld [vmem:[#allocation16 + $0x580] sm:$0xff]
    %v2889 = vld [vmem:[#allocation16 + $0x588] sm:$0xff]
    %v2890 = vld [vmem:[#allocation16 + $0x590] sm:$0xf]
    %v2891 = vld [vmem:[#allocation16 + $0x594] sm:$0xff]
    %v2892 = vld [vmem:[#allocation16 + $0x59c] sm:$0xff]
    %v2893 = vld [vmem:[#allocation16 + $0x5a4] sm:$0xff]
    %v2894 = vld [vmem:[#allocation16 + $0x5ac] sm:$0xf]
    %v2895 = vld [vmem:[#allocation16 + $0x5b0] sm:$0xff]
    %v2896 = vld [vmem:[#allocation16 + $0x5b8] sm:$0xff]
    %v2897 = vld [vmem:[#allocation16 + $0x5c0] sm:$0xff]
    %v2898 = vld [vmem:[#allocation16 + $0x5c8] sm:$0xf]
    %v2899 = vld [vmem:[#allocation16 + $0x5cc] sm:$0xff]
    %v2900 = vld [vmem:[#allocation16 + $0x5d4] sm:$0xff]
    %v2901 = vld [vmem:[#allocation16 + $0x5dc] sm:$0xff]
    %v2902 = vld [vmem:[#allocation16 + $0x5e4] sm:$0xf]
    %v2903 = vld [vmem:[#allocation16 + $0x5e8] sm:$0xff]
    %v2904 = vld [vmem:[#allocation16 + $0x5f0] sm:$0xff]
    %v2905 = vld [vmem:[#allocation16 + $0x5f8] sm:$0xff]
    %v2906 = vld [vmem:[#allocation16 + $0x600] sm:$0xf]
    %v2907 = vld [vmem:[#allocation16 + $0x604] sm:$0xff]
    %v2908 = vld [vmem:[#allocation16 + $0x60c] sm:$0xff]
    %v2909 = vld [vmem:[#allocation16 + $0x614] sm:$0xff]
    %v2910 = vld [vmem:[#allocation16 + $0x61c] sm:$0xf]
    %v2911 = vld [vmem:[#allocation16 + $0x620] sm:$0xff]
    %v2912 = vld [vmem:[#allocation16 + $0x628] sm:$0xff]
    %v2913 = vld [vmem:[#allocation16 + $0x630] sm:$0xff]
    %v2914 = vld [vmem:[#allocation16 + $0x638] sm:$0xf]
    %v2915 = vld [vmem:[#allocation16 + $0x63c] sm:$0xff]
    %v2916 = vld [vmem:[#allocation16 + $0x644] sm:$0xff]
    %v2917 = vld [vmem:[#allocation16 + $0x64c] sm:$0xff]
    %v2918 = vld [vmem:[#allocation16 + $0x654] sm:$0xf]
    %v2919 = vld [vmem:[#allocation16 + $0x658] sm:$0xff]
    %v2920 = vld [vmem:[#allocation16 + $0x660] sm:$0xff]
    %v2921 = vld [vmem:[#allocation16 + $0x668] sm:$0xff]
    %v2922 = vld [vmem:[#allocation16 + $0x670] sm:$0xf]
    %v2923 = vld [vmem:[#allocation16 + $0x674] sm:$0xff]
    %v2924 = vld [vmem:[#allocation16 + $0x67c] sm:$0xff]
    %v2925 = vld [vmem:[#allocation16 + $0x684] sm:$0xff]
    %v2926 = vld [vmem:[#allocation16 + $0x68c] sm:$0xf]
    %v2927 = vld [vmem:[#allocation16 + $0x690] sm:$0xff]
    %v2928 = vld [vmem:[#allocation16 + $0x698] sm:$0xff]
    %v2929 = vld [vmem:[#allocation16 + $0x6a0] sm:$0xff]
    %v2930 = vld [vmem:[#allocation16 + $0x6a8] sm:$0xf]
    %v2931 = vld [vmem:[#allocation16 + $0x6ac] sm:$0xff]
    %v2932 = vld [vmem:[#allocation16 + $0x6b4] sm:$0xff]
    %v2933 = vld [vmem:[#allocation16 + $0x6bc] sm:$0xff]
    %v2934 = vld [vmem:[#allocation16 + $0x6c4] sm:$0xf]
    %v2935 = vld [vmem:[#allocation16 + $0x6c8] sm:$0xff]
    %v2936 = vld [vmem:[#allocation16 + $0x6d0] sm:$0xff]
    %v2937 = vld [vmem:[#allocation16 + $0x6d8] sm:$0xff]
    %v2938 = vld [vmem:[#allocation16 + $0x6e0] sm:$0xf]
    %v2939 = vld [vmem:[#allocation16 + $0x6e4] sm:$0xff]
    %v2940 = vld [vmem:[#allocation16 + $0x6ec] sm:$0xff]
    %v2941 = vld [vmem:[#allocation16 + $0x6f4] sm:$0xff]
    %v2942 = vld [vmem:[#allocation16 + $0x6fc] sm:$0xf]
    %v2943 = vld [vmem:[%s9] sm:$0xff]
    %v2945 = vperm.slane %v2943, 0
    %v2946 = vperm.slane %v2943, 1
    %v2947 = vperm.slane %v2943, 2
    %v2948 = vperm.slane %v2943, 3
    %v2949 = vperm.slane %v2943, 4
    %v2950 = vperm.slane %v2943, 5
    %v2951 = vperm.slane %v2943, 6
    %v3215 = vunpack.c.l.b16 %v2687
    %v3216 = vunpack.c.h.b16 %v2687
    %v3217 = vunpack.c.l.b16 %v2688
    %v3218 = vunpack.c.h.b16 %v2688
    %v3219 = vunpack.c.l.b16 %v2689
    %v3220 = vunpack.c.h.b16 %v2689
    %v3221 = vunpack.c.l.b16 %v2690
    %v3222 = vunpack.c.l.b16 %v2691
    %v3223 = vunpack.c.h.b16 %v2691
    %v3224 = vunpack.c.l.b16 %v2692
    %v3225 = vunpack.c.h.b16 %v2692
    %v3226 = vunpack.c.l.b16 %v2693
    %v3227 = vunpack.c.h.b16 %v2693
    %v3228 = vunpack.c.l.b16 %v2694
    %v3229 = vunpack.c.l.b16 %v2695
    %v3230 = vunpack.c.h.b16 %v2695
    %v3231 = vunpack.c.l.b16 %v2696
    %v3232 = vunpack.c.h.b16 %v2696
    %v3233 = vunpack.c.l.b16 %v2697
    %v3234 = vunpack.c.h.b16 %v2697
    %v3235 = vunpack.c.l.b16 %v2698
    %v3236 = vunpack.c.l.b16 %v2699
    %v3237 = vunpack.c.h.b16 %v2699
    %v3238 = vunpack.c.l.b16 %v2700
    %v3239 = vunpack.c.h.b16 %v2700
    %v3240 = vunpack.c.l.b16 %v2701
    %v3241 = vunpack.c.h.b16 %v2701
    %v3242 = vunpack.c.l.b16 %v2702
    %v3243 = vunpack.c.l.b16 %v2703
    %v3244 = vunpack.c.h.b16 %v2703
    %v3245 = vunpack.c.l.b16 %v2704
    %v3246 = vunpack.c.h.b16 %v2704
    %v3247 = vunpack.c.l.b16 %v2705
    %v3248 = vunpack.c.h.b16 %v2705
    %v3249 = vunpack.c.l.b16 %v2706
    %v3250 = vunpack.c.l.b16 %v2707
    %v3251 = vunpack.c.h.b16 %v2707
    %v3252 = vunpack.c.l.b16 %v2708
    %v3253 = vunpack.c.h.b16 %v2708
    %v3254 = vunpack.c.l.b16 %v2709
    %v3255 = vunpack.c.h.b16 %v2709
    %v3256 = vunpack.c.l.b16 %v2710
    %v3257 = vunpack.c.l.b16 %v2711
    %v3258 = vunpack.c.h.b16 %v2711
    %v3259 = vunpack.c.l.b16 %v2712
    %v3260 = vunpack.c.h.b16 %v2712
    %v3261 = vunpack.c.l.b16 %v2713
    %v3262 = vunpack.c.h.b16 %v2713
    %v3263 = vunpack.c.l.b16 %v2714
    %v3264 = vunpack.c.l.b16 %v2715
    %v3265 = vunpack.c.h.b16 %v2715
    %v3266 = vunpack.c.l.b16 %v2716
    %v3267 = vunpack.c.h.b16 %v2716
    %v3268 = vunpack.c.l.b16 %v2717
    %v3269 = vunpack.c.h.b16 %v2717
    %v3270 = vunpack.c.l.b16 %v2718
    %v3271 = vunpack.c.l.b16 %v2719
    %v3272 = vunpack.c.h.b16 %v2719
    %v3273 = vunpack.c.l.b16 %v2720
    %v3274 = vunpack.c.h.b16 %v2720
    %v3275 = vunpack.c.l.b16 %v2721
    %v3276 = vunpack.c.h.b16 %v2721
    %v3277 = vunpack.c.l.b16 %v2722
    %v3278 = vunpack.c.l.b16 %v2723
    %v3279 = vunpack.c.h.b16 %v2723
    %v3280 = vunpack.c.l.b16 %v2724
    %v3281 = vunpack.c.h.b16 %v2724
    %v3282 = vunpack.c.l.b16 %v2725
    %v3283 = vunpack.c.h.b16 %v2725
    %v3284 = vunpack.c.l.b16 %v2726
    %v3285 = vunpack.c.l.b16 %v2727
    %v3286 = vunpack.c.h.b16 %v2727
    %v3287 = vunpack.c.l.b16 %v2728
    %v3288 = vunpack.c.h.b16 %v2728
    %v3289 = vunpack.c.l.b16 %v2729
    %v3290 = vunpack.c.h.b16 %v2729
    %v3291 = vunpack.c.l.b16 %v2730
    %v3292 = vunpack.c.l.b16 %v2731
    %v3293 = vunpack.c.h.b16 %v2731
    %v3294 = vunpack.c.l.b16 %v2732
    %v3295 = vunpack.c.h.b16 %v2732
    %v3296 = vunpack.c.l.b16 %v2733
    %v3297 = vunpack.c.h.b16 %v2733
    %v3298 = vunpack.c.l.b16 %v2734
    %v3299 = vunpack.c.l.b16 %v2735
    %v3300 = vunpack.c.h.b16 %v2735
    %v3301 = vunpack.c.l.b16 %v2736
    %v3302 = vunpack.c.h.b16 %v2736
    %v3303 = vunpack.c.l.b16 %v2737
    %v3304 = vunpack.c.h.b16 %v2737
    %v3305 = vunpack.c.l.b16 %v2738
    %v3306 = vunpack.c.l.b16 %v2739
    %v3307 = vunpack.c.h.b16 %v2739
    %v3308 = vunpack.c.l.b16 %v2740
    %v3309 = vunpack.c.h.b16 %v2740
    %v3310 = vunpack.c.l.b16 %v2741
    %v3311 = vunpack.c.h.b16 %v2741
    %v3312 = vunpack.c.l.b16 %v2742
    %v3313 = vunpack.c.l.b16 %v2743
    %v3314 = vunpack.c.h.b16 %v2743
    %v3315 = vunpack.c.l.b16 %v2744
    %v3316 = vunpack.c.h.b16 %v2744
    %v3317 = vunpack.c.l.b16 %v2745
    %v3318 = vunpack.c.h.b16 %v2745
    %v3319 = vunpack.c.l.b16 %v2746
    %v3320 = vunpack.c.l.b16 %v2747
    %v3321 = vunpack.c.h.b16 %v2747
    %v3322 = vunpack.c.l.b16 %v2748
    %v3323 = vunpack.c.h.b16 %v2748
    %v3324 = vunpack.c.l.b16 %v2749
    %v3325 = vunpack.c.h.b16 %v2749
    %v3326 = vunpack.c.l.b16 %v2750
    %v3327 = vunpack.c.l.b16 %v2751
    %v3328 = vunpack.c.h.b16 %v2751
    %v3329 = vunpack.c.l.b16 %v2752
    %v3330 = vunpack.c.h.b16 %v2752
    %v3331 = vunpack.c.l.b16 %v2753
    %v3332 = vunpack.c.h.b16 %v2753
    %v3333 = vunpack.c.l.b16 %v2754
    %v3334 = vunpack.c.l.b16 %v2755
    %v3335 = vunpack.c.h.b16 %v2755
    %v3336 = vunpack.c.l.b16 %v2756
    %v3337 = vunpack.c.h.b16 %v2756
    %v3338 = vunpack.c.l.b16 %v2757
    %v3339 = vunpack.c.h.b16 %v2757
    %v3340 = vunpack.c.l.b16 %v2758
    %v3341 = vunpack.c.l.b16 %v2759
    %v3342 = vunpack.c.h.b16 %v2759
    %v3343 = vunpack.c.l.b16 %v2760
    %v3344 = vunpack.c.h.b16 %v2760
    %v3345 = vunpack.c.l.b16 %v2761
    %v3346 = vunpack.c.h.b16 %v2761
    %v3347 = vunpack.c.l.b16 %v2762
    %v3348 = vunpack.c.l.b16 %v2763
    %v3349 = vunpack.c.h.b16 %v2763
    %v3350 = vunpack.c.l.b16 %v2764
    %v3351 = vunpack.c.h.b16 %v2764
    %v3352 = vunpack.c.l.b16 %v2765
    %v3353 = vunpack.c.h.b16 %v2765
    %v3354 = vunpack.c.l.b16 %v2766
    %v3355 = vunpack.c.l.b16 %v2767
    %v3356 = vunpack.c.h.b16 %v2767
    %v3357 = vunpack.c.l.b16 %v2768
    %v3358 = vunpack.c.h.b16 %v2768
    %v3359 = vunpack.c.l.b16 %v2769
    %v3360 = vunpack.c.h.b16 %v2769
    %v3361 = vunpack.c.l.b16 %v2770
    %v3362 = vunpack.c.l.b16 %v2771
    %v3363 = vunpack.c.h.b16 %v2771
    %v3364 = vunpack.c.l.b16 %v2772
    %v3365 = vunpack.c.h.b16 %v2772
    %v3366 = vunpack.c.l.b16 %v2773
    %v3367 = vunpack.c.h.b16 %v2773
    %v3368 = vunpack.c.l.b16 %v2774
    %v3369 = vunpack.c.l.b16 %v2775
    %v3370 = vunpack.c.h.b16 %v2775
    %v3371 = vunpack.c.l.b16 %v2776
    %v3372 = vunpack.c.h.b16 %v2776
    %v3373 = vunpack.c.l.b16 %v2777
    %v3374 = vunpack.c.h.b16 %v2777
    %v3375 = vunpack.c.l.b16 %v2778
    %v3376 = vunpack.c.l.b16 %v2779
    %v3377 = vunpack.c.h.b16 %v2779
    %v3378 = vunpack.c.l.b16 %v2780
    %v3379 = vunpack.c.h.b16 %v2780
    %v3380 = vunpack.c.l.b16 %v2781
    %v3381 = vunpack.c.h.b16 %v2781
    %v3382 = vunpack.c.l.b16 %v2782
    %v3383 = vunpack.c.l.b16 %v2783
    %v3384 = vunpack.c.h.b16 %v2783
    %v3385 = vunpack.c.l.b16 %v2784
    %v3386 = vunpack.c.h.b16 %v2784
    %v3387 = vunpack.c.l.b16 %v2785
    %v3388 = vunpack.c.h.b16 %v2785
    %v3389 = vunpack.c.l.b16 %v2786
    %v3390 = vunpack.c.l.b16 %v2787
    %v3391 = vunpack.c.h.b16 %v2787
    %v3392 = vunpack.c.l.b16 %v2788
    %v3393 = vunpack.c.h.b16 %v2788
    %v3394 = vunpack.c.l.b16 %v2789
    %v3395 = vunpack.c.h.b16 %v2789
    %v3396 = vunpack.c.l.b16 %v2790
    %v3397 = vunpack.c.l.b16 %v2791
    %v3398 = vunpack.c.h.b16 %v2791
    %v3399 = vunpack.c.l.b16 %v2792
    %v3400 = vunpack.c.h.b16 %v2792
    %v3401 = vunpack.c.l.b16 %v2793
    %v3402 = vunpack.c.h.b16 %v2793
    %v3403 = vunpack.c.l.b16 %v2794
    %v3404 = vunpack.c.l.b16 %v2795
    %v3405 = vunpack.c.h.b16 %v2795
    %v3406 = vunpack.c.l.b16 %v2796
    %v3407 = vunpack.c.h.b16 %v2796
    %v3408 = vunpack.c.l.b16 %v2797
    %v3409 = vunpack.c.h.b16 %v2797
    %v3410 = vunpack.c.l.b16 %v2798
    %v3411 = vunpack.c.l.b16 %v2799
    %v3412 = vunpack.c.h.b16 %v2799
    %v3413 = vunpack.c.l.b16 %v2800
    %v3414 = vunpack.c.h.b16 %v2800
    %v3415 = vunpack.c.l.b16 %v2801
    %v3416 = vunpack.c.h.b16 %v2801
    %v3417 = vunpack.c.l.b16 %v2802
    %v3418 = vunpack.c.l.b16 %v2803
    %v3419 = vunpack.c.h.b16 %v2803
    %v3420 = vunpack.c.l.b16 %v2804
    %v3421 = vunpack.c.h.b16 %v2804
    %v3422 = vunpack.c.l.b16 %v2805
    %v3423 = vunpack.c.h.b16 %v2805
    %v3424 = vunpack.c.l.b16 %v2806
    %v3425 = vunpack.c.l.b16 %v2807
    %v3426 = vunpack.c.h.b16 %v2807
    %v3427 = vunpack.c.l.b16 %v2808
    %v3428 = vunpack.c.h.b16 %v2808
    %v3429 = vunpack.c.l.b16 %v2809
    %v3430 = vunpack.c.h.b16 %v2809
    %v3431 = vunpack.c.l.b16 %v2810
    %v3432 = vunpack.c.l.b16 %v2811
    %v3433 = vunpack.c.h.b16 %v2811
    %v3434 = vunpack.c.l.b16 %v2812
    %v3435 = vunpack.c.h.b16 %v2812
    %v3436 = vunpack.c.l.b16 %v2813
    %v3437 = vunpack.c.h.b16 %v2813
    %v3438 = vunpack.c.l.b16 %v2814
    %v3439 = vunpack.c.l.b16 %v2815
    %v3440 = vunpack.c.h.b16 %v2815
    %v3441 = vunpack.c.l.b16 %v2816
    %v3442 = vunpack.c.h.b16 %v2816
    %v3443 = vunpack.c.l.b16 %v2817
    %v3444 = vunpack.c.h.b16 %v2817
    %v3445 = vunpack.c.l.b16 %v2818
    %v3446 = vunpack.c.l.b16 %v2819
    %v3447 = vunpack.c.h.b16 %v2819
    %v3448 = vunpack.c.l.b16 %v2820
    %v3449 = vunpack.c.h.b16 %v2820
    %v3450 = vunpack.c.l.b16 %v2821
    %v3451 = vunpack.c.h.b16 %v2821
    %v3452 = vunpack.c.l.b16 %v2822
    %v3453 = vunpack.c.l.b16 %v2823
    %v3454 = vunpack.c.h.b16 %v2823
    %v3455 = vunpack.c.l.b16 %v2824
    %v3456 = vunpack.c.h.b16 %v2824
    %v3457 = vunpack.c.l.b16 %v2825
    %v3458 = vunpack.c.h.b16 %v2825
    %v3459 = vunpack.c.l.b16 %v2826
    %v3460 = vunpack.c.l.b16 %v2827
    %v3461 = vunpack.c.h.b16 %v2827
    %v3462 = vunpack.c.l.b16 %v2828
    %v3463 = vunpack.c.h.b16 %v2828
    %v3464 = vunpack.c.l.b16 %v2829
    %v3465 = vunpack.c.h.b16 %v2829
    %v3466 = vunpack.c.l.b16 %v2830
    %v3467 = vunpack.c.l.b16 %v2831
    %v3468 = vunpack.c.h.b16 %v2831
    %v3469 = vunpack.c.l.b16 %v2832
    %v3470 = vunpack.c.h.b16 %v2832
    %v3471 = vunpack.c.l.b16 %v2833
    %v3472 = vunpack.c.h.b16 %v2833
    %v3473 = vunpack.c.l.b16 %v2834
    %v3474 = vunpack.c.l.b16 %v2835
    %v3475 = vunpack.c.h.b16 %v2835
    %v3476 = vunpack.c.l.b16 %v2836
    %v3477 = vunpack.c.h.b16 %v2836
    %v3478 = vunpack.c.l.b16 %v2837
    %v3479 = vunpack.c.h.b16 %v2837
    %v3480 = vunpack.c.l.b16 %v2838
    %v3481 = vunpack.c.l.b16 %v2839
    %v3482 = vunpack.c.h.b16 %v2839
    %v3483 = vunpack.c.l.b16 %v2840
    %v3484 = vunpack.c.h.b16 %v2840
    %v3485 = vunpack.c.l.b16 %v2841
    %v3486 = vunpack.c.h.b16 %v2841
    %v3487 = vunpack.c.l.b16 %v2842
    %v3488 = vunpack.c.l.b16 %v2843
    %v3489 = vunpack.c.h.b16 %v2843
    %v3490 = vunpack.c.l.b16 %v2844
    %v3491 = vunpack.c.h.b16 %v2844
    %v3492 = vunpack.c.l.b16 %v2845
    %v3493 = vunpack.c.h.b16 %v2845
    %v3494 = vunpack.c.l.b16 %v2846
    %v3495 = vunpack.c.l.b16 %v2847
    %v3496 = vunpack.c.h.b16 %v2847
    %v3497 = vunpack.c.l.b16 %v2848
    %v3498 = vunpack.c.h.b16 %v2848
    %v3499 = vunpack.c.l.b16 %v2849
    %v3500 = vunpack.c.h.b16 %v2849
    %v3501 = vunpack.c.l.b16 %v2850
    %v3502 = vunpack.c.l.b16 %v2851
    %v3503 = vunpack.c.h.b16 %v2851
    %v3504 = vunpack.c.l.b16 %v2852
    %v3505 = vunpack.c.h.b16 %v2852
    %v3506 = vunpack.c.l.b16 %v2853
    %v3507 = vunpack.c.h.b16 %v2853
    %v3508 = vunpack.c.l.b16 %v2854
    %v3509 = vunpack.c.l.b16 %v2855
    %v3510 = vunpack.c.h.b16 %v2855
    %v3511 = vunpack.c.l.b16 %v2856
    %v3512 = vunpack.c.h.b16 %v2856
    %v3513 = vunpack.c.l.b16 %v2857
    %v3514 = vunpack.c.h.b16 %v2857
    %v3515 = vunpack.c.l.b16 %v2858
    %v3516 = vunpack.c.l.b16 %v2859
    %v3517 = vunpack.c.h.b16 %v2859
    %v3518 = vunpack.c.l.b16 %v2860
    %v3519 = vunpack.c.h.b16 %v2860
    %v3520 = vunpack.c.l.b16 %v2861
    %v3521 = vunpack.c.h.b16 %v2861
    %v3522 = vunpack.c.l.b16 %v2862
    %v3523 = vunpack.c.l.b16 %v2863
    %v3524 = vunpack.c.h.b16 %v2863
    %v3525 = vunpack.c.l.b16 %v2864
    %v3526 = vunpack.c.h.b16 %v2864
    %v3527 = vunpack.c.l.b16 %v2865
    %v3528 = vunpack.c.h.b16 %v2865
    %v3529 = vunpack.c.l.b16 %v2866
    %v3530 = vunpack.c.l.b16 %v2867
    %v3531 = vunpack.c.h.b16 %v2867
    %v3532 = vunpack.c.l.b16 %v2868
    %v3533 = vunpack.c.h.b16 %v2868
    %v3534 = vunpack.c.l.b16 %v2869
    %v3535 = vunpack.c.h.b16 %v2869
    %v3536 = vunpack.c.l.b16 %v2870
    %v3537 = vunpack.c.l.b16 %v2871
    %v3538 = vunpack.c.h.b16 %v2871
    %v3539 = vunpack.c.l.b16 %v2872
    %v3540 = vunpack.c.h.b16 %v2872
    %v3541 = vunpack.c.l.b16 %v2873
    %v3542 = vunpack.c.h.b16 %v2873
    %v3543 = vunpack.c.l.b16 %v2874
    %v3544 = vunpack.c.l.b16 %v2875
    %v3545 = vunpack.c.h.b16 %v2875
    %v3546 = vunpack.c.l.b16 %v2876
    %v3547 = vunpack.c.h.b16 %v2876
    %v3548 = vunpack.c.l.b16 %v2877
    %v3549 = vunpack.c.h.b16 %v2877
    %v3550 = vunpack.c.l.b16 %v2878
    %v3551 = vunpack.c.l.b16 %v2879
    %v3552 = vunpack.c.h.b16 %v2879
    %v3553 = vunpack.c.l.b16 %v2880
    %v3554 = vunpack.c.h.b16 %v2880
    %v3555 = vunpack.c.l.b16 %v2881
    %v3556 = vunpack.c.h.b16 %v2881
    %v3557 = vunpack.c.l.b16 %v2882
    %v3558 = vunpack.c.l.b16 %v2883
    %v3559 = vunpack.c.h.b16 %v2883
    %v3560 = vunpack.c.l.b16 %v2884
    %v3561 = vunpack.c.h.b16 %v2884
    %v3562 = vunpack.c.l.b16 %v2885
    %v3563 = vunpack.c.h.b16 %v2885
    %v3564 = vunpack.c.l.b16 %v2886
    %v3565 = vunpack.c.l.b16 %v2887
    %v3566 = vunpack.c.h.b16 %v2887
    %v3567 = vunpack.c.l.b16 %v2888
    %v3568 = vunpack.c.h.b16 %v2888
    %v3569 = vunpack.c.l.b16 %v2889
    %v3570 = vunpack.c.h.b16 %v2889
    %v3571 = vunpack.c.l.b16 %v2890
    %v3572 = vunpack.c.l.b16 %v2891
    %v3573 = vunpack.c.h.b16 %v2891
    %v3574 = vunpack.c.l.b16 %v2892
    %v3575 = vunpack.c.h.b16 %v2892
    %v3576 = vunpack.c.l.b16 %v2893
    %v3577 = vunpack.c.h.b16 %v2893
    %v3578 = vunpack.c.l.b16 %v2894
    %v3579 = vunpack.c.l.b16 %v2895
    %v3580 = vunpack.c.h.b16 %v2895
    %v3581 = vunpack.c.l.b16 %v2896
    %v3582 = vunpack.c.h.b16 %v2896
    %v3583 = vunpack.c.l.b16 %v2897
    %v3584 = vunpack.c.h.b16 %v2897
    %v3585 = vunpack.c.l.b16 %v2898
    %v3586 = vunpack.c.l.b16 %v2899
    %v3587 = vunpack.c.h.b16 %v2899
    %v3588 = vunpack.c.l.b16 %v2900
    %v3589 = vunpack.c.h.b16 %v2900
    %v3590 = vunpack.c.l.b16 %v2901
    %v3591 = vunpack.c.h.b16 %v2901
    %v3592 = vunpack.c.l.b16 %v2902
    %v3593 = vunpack.c.l.b16 %v2903
    %v3594 = vunpack.c.h.b16 %v2903
    %v3595 = vunpack.c.l.b16 %v2904
    %v3596 = vunpack.c.h.b16 %v2904
    %v3597 = vunpack.c.l.b16 %v2905
    %v3598 = vunpack.c.h.b16 %v2905
    %v3599 = vunpack.c.l.b16 %v2906
    %v3600 = vunpack.c.l.b16 %v2907
    %v3601 = vunpack.c.h.b16 %v2907
    %v3602 = vunpack.c.l.b16 %v2908
    %v3603 = vunpack.c.h.b16 %v2908
    %v3604 = vunpack.c.l.b16 %v2909
    %v3605 = vunpack.c.h.b16 %v2909
    %v3606 = vunpack.c.l.b16 %v2910
    %v3607 = vunpack.c.l.b16 %v2911
    %v3608 = vunpack.c.h.b16 %v2911
    %v3609 = vunpack.c.l.b16 %v2912
    %v3610 = vunpack.c.h.b16 %v2912
    %v3611 = vunpack.c.l.b16 %v2913
    %v3612 = vunpack.c.h.b16 %v2913
    %v3613 = vunpack.c.l.b16 %v2914
    %v3614 = vunpack.c.l.b16 %v2915
    %v3615 = vunpack.c.h.b16 %v2915
    %v3616 = vunpack.c.l.b16 %v2916
    %v3617 = vunpack.c.h.b16 %v2916
    %v3618 = vunpack.c.l.b16 %v2917
    %v3619 = vunpack.c.h.b16 %v2917
    %v3620 = vunpack.c.l.b16 %v2918
    %v3621 = vunpack.c.l.b16 %v2919
    %v3622 = vunpack.c.h.b16 %v2919
    %v3623 = vunpack.c.l.b16 %v2920
    %v3624 = vunpack.c.h.b16 %v2920
    %v3625 = vunpack.c.l.b16 %v2921
    %v3626 = vunpack.c.h.b16 %v2921
    %v3627 = vunpack.c.l.b16 %v2922
    %v3628 = vunpack.c.l.b16 %v2923
    %v3629 = vunpack.c.h.b16 %v2923
    %v3630 = vunpack.c.l.b16 %v2924
    %v3631 = vunpack.c.h.b16 %v2924
    %v3632 = vunpack.c.l.b16 %v2925
    %v3633 = vunpack.c.h.b16 %v2925
    %v3634 = vunpack.c.l.b16 %v2926
    %v3635 = vunpack.c.l.b16 %v2927
    %v3636 = vunpack.c.h.b16 %v2927
    %v3637 = vunpack.c.l.b16 %v2928
    %v3638 = vunpack.c.h.b16 %v2928
    %v3639 = vunpack.c.l.b16 %v2929
    %v3640 = vunpack.c.h.b16 %v2929
    %v3641 = vunpack.c.l.b16 %v2930
    %v3642 = vunpack.c.l.b16 %v2931
    %v3643 = vunpack.c.h.b16 %v2931
    %v3644 = vunpack.c.l.b16 %v2932
    %v3645 = vunpack.c.h.b16 %v2932
    %v3646 = vunpack.c.l.b16 %v2933
    %v3647 = vunpack.c.h.b16 %v2933
    %v3648 = vunpack.c.l.b16 %v2934
    %v3649 = vunpack.c.l.b16 %v2935
    %v3650 = vunpack.c.h.b16 %v2935
    %v3651 = vunpack.c.l.b16 %v2936
    %v3652 = vunpack.c.h.b16 %v2936
    %v3653 = vunpack.c.l.b16 %v2937
    %v3654 = vunpack.c.h.b16 %v2937
    %v3655 = vunpack.c.l.b16 %v2938
    %v3656 = vunpack.c.l.b16 %v2939
    %v3657 = vunpack.c.h.b16 %v2939
    %v3658 = vunpack.c.l.b16 %v2940
    %v3659 = vunpack.c.h.b16 %v2940
    %v3660 = vunpack.c.l.b16 %v2941
    %v3661 = vunpack.c.h.b16 %v2941
    %v3662 = vunpack.c.l.b16 %v2942
    %v3663 = vpack.c.b16 %v3222, %v3215
    %v3664 = vpack.c.b16 %v3223, %v3216
    %v3665 = vpack.c.b16 %v3224, %v3217
    %v3666 = vpack.c.b16 %v3225, %v3218
    %v3667 = vpack.c.b16 %v3226, %v3219
    %v3668 = vpack.c.b16 %v3227, %v3220
    %v3669 = vpack.c.b16 %v3228, %v3221
    %v3670 = vpack.c.b16 %v3236, %v3229
    %v3671 = vpack.c.b16 %v3237, %v3230
    %v3672 = vpack.c.b16 %v3238, %v3231
    %v3673 = vpack.c.b16 %v3239, %v3232
    %v3674 = vpack.c.b16 %v3240, %v3233
    %v3675 = vpack.c.b16 %v3241, %v3234
    %v3676 = vpack.c.b16 %v3242, %v3235
    %v3677 = vpack.c.b16 %v3250, %v3243
    %v3678 = vpack.c.b16 %v3251, %v3244
    %v3679 = vpack.c.b16 %v3252, %v3245
    %v3680 = vpack.c.b16 %v3253, %v3246
    %v3681 = vpack.c.b16 %v3254, %v3247
    %v3682 = vpack.c.b16 %v3255, %v3248
    %v3683 = vpack.c.b16 %v3256, %v3249
    %v3684 = vpack.c.b16 %v3264, %v3257
    %v3685 = vpack.c.b16 %v3265, %v3258
    %v3686 = vpack.c.b16 %v3266, %v3259
    %v3687 = vpack.c.b16 %v3267, %v3260
    %v3688 = vpack.c.b16 %v3268, %v3261
    %v3689 = vpack.c.b16 %v3269, %v3262
    %v3690 = vpack.c.b16 %v3270, %v3263
    %v3691 = vpack.c.b16 %v3278, %v3271
    %v3692 = vpack.c.b16 %v3279, %v3272
    %v3693 = vpack.c.b16 %v3280, %v3273
    %v3694 = vpack.c.b16 %v3281, %v3274
    %v3695 = vpack.c.b16 %v3282, %v3275
    %v3696 = vpack.c.b16 %v3283, %v3276
    %v3697 = vpack.c.b16 %v3284, %v3277
    %v3698 = vpack.c.b16 %v3292, %v3285
    %v3699 = vpack.c.b16 %v3293, %v3286
    %v3700 = vpack.c.b16 %v3294, %v3287
    %v3701 = vpack.c.b16 %v3295, %v3288
    %v3702 = vpack.c.b16 %v3296, %v3289
    %v3703 = vpack.c.b16 %v3297, %v3290
    %v3704 = vpack.c.b16 %v3298, %v3291
    %v3705 = vpack.c.b16 %v3306, %v3299
    %v3706 = vpack.c.b16 %v3307, %v3300
    %v3707 = vpack.c.b16 %v3308, %v3301
    %v3708 = vpack.c.b16 %v3309, %v3302
    %v3709 = vpack.c.b16 %v3310, %v3303
    %v3710 = vpack.c.b16 %v3311, %v3304
    %v3711 = vpack.c.b16 %v3312, %v3305
    %v3712 = vpack.c.b16 %v3320, %v3313
    %v3713 = vpack.c.b16 %v3321, %v3314
    %v3714 = vpack.c.b16 %v3322, %v3315
    %v3715 = vpack.c.b16 %v3323, %v3316
    %v3716 = vpack.c.b16 %v3324, %v3317
    %v3717 = vpack.c.b16 %v3325, %v3318
    %v3718 = vpack.c.b16 %v3326, %v3319
    %v3719 = vpack.c.b16 %v3334, %v3327
    %v3720 = vpack.c.b16 %v3335, %v3328
    %v3721 = vpack.c.b16 %v3336, %v3329
    %v3722 = vpack.c.b16 %v3337, %v3330
    %v3723 = vpack.c.b16 %v3338, %v3331
    %v3724 = vpack.c.b16 %v3339, %v3332
    %v3725 = vpack.c.b16 %v3340, %v3333
    %v3726 = vpack.c.b16 %v3348, %v3341
    %v3727 = vpack.c.b16 %v3349, %v3342
    %v3728 = vpack.c.b16 %v3350, %v3343
    %v3729 = vpack.c.b16 %v3351, %v3344
    %v3730 = vpack.c.b16 %v3352, %v3345
    %v3731 = vpack.c.b16 %v3353, %v3346
    %v3732 = vpack.c.b16 %v3354, %v3347
    %v3733 = vpack.c.b16 %v3362, %v3355
    %v3734 = vpack.c.b16 %v3363, %v3356
    %v3735 = vpack.c.b16 %v3364, %v3357
    %v3736 = vpack.c.b16 %v3365, %v3358
    %v3737 = vpack.c.b16 %v3366, %v3359
    %v3738 = vpack.c.b16 %v3367, %v3360
    %v3739 = vpack.c.b16 %v3368, %v3361
    %v3740 = vpack.c.b16 %v3376, %v3369
    %v3741 = vpack.c.b16 %v3377, %v3370
    %v3742 = vpack.c.b16 %v3378, %v3371
    %v3743 = vpack.c.b16 %v3379, %v3372
    %v3744 = vpack.c.b16 %v3380, %v3373
    %v3745 = vpack.c.b16 %v3381, %v3374
    %v3746 = vpack.c.b16 %v3382, %v3375
    %v3747 = vpack.c.b16 %v3390, %v3383
    %v3748 = vpack.c.b16 %v3391, %v3384
    %v3749 = vpack.c.b16 %v3392, %v3385
    %v3750 = vpack.c.b16 %v3393, %v3386
    %v3751 = vpack.c.b16 %v3394, %v3387
    %v3752 = vpack.c.b16 %v3395, %v3388
    %v3753 = vpack.c.b16 %v3396, %v3389
    %v3754 = vpack.c.b16 %v3404, %v3397
    %v3755 = vpack.c.b16 %v3405, %v3398
    %v3756 = vpack.c.b16 %v3406, %v3399
    %v3757 = vpack.c.b16 %v3407, %v3400
    %v3758 = vpack.c.b16 %v3408, %v3401
    %v3759 = vpack.c.b16 %v3409, %v3402
    %v3760 = vpack.c.b16 %v3410, %v3403
    %v3761 = vpack.c.b16 %v3418, %v3411
    %v3762 = vpack.c.b16 %v3419, %v3412
    %v3763 = vpack.c.b16 %v3420, %v3413
    %v3764 = vpack.c.b16 %v3421, %v3414
    %v3765 = vpack.c.b16 %v3422, %v3415
    %v3766 = vpack.c.b16 %v3423, %v3416
    %v3767 = vpack.c.b16 %v3424, %v3417
    %v3768 = vpack.c.b16 %v3432, %v3425
    %v3769 = vpack.c.b16 %v3433, %v3426
    %v3770 = vpack.c.b16 %v3434, %v3427
    %v3771 = vpack.c.b16 %v3435, %v3428
    %v3772 = vpack.c.b16 %v3436, %v3429
    %v3773 = vpack.c.b16 %v3437, %v3430
    %v3774 = vpack.c.b16 %v3438, %v3431
    %v3775 = vpack.c.b16 %v3446, %v3439
    %v3776 = vpack.c.b16 %v3447, %v3440
    %v3777 = vpack.c.b16 %v3448, %v3441
    %v3778 = vpack.c.b16 %v3449, %v3442
    %v3779 = vpack.c.b16 %v3450, %v3443
    %v3780 = vpack.c.b16 %v3451, %v3444
    %v3781 = vpack.c.b16 %v3452, %v3445
    %v3782 = vpack.c.b16 %v3460, %v3453
    %v3783 = vpack.c.b16 %v3461, %v3454
    %v3784 = vpack.c.b16 %v3462, %v3455
    %v3785 = vpack.c.b16 %v3463, %v3456
    %v3786 = vpack.c.b16 %v3464, %v3457
    %v3787 = vpack.c.b16 %v3465, %v3458
    %v3788 = vpack.c.b16 %v3466, %v3459
    %v3789 = vpack.c.b16 %v3474, %v3467
    %v3790 = vpack.c.b16 %v3475, %v3468
    %v3791 = vpack.c.b16 %v3476, %v3469
    %v3792 = vpack.c.b16 %v3477, %v3470
    %v3793 = vpack.c.b16 %v3478, %v3471
    %v3794 = vpack.c.b16 %v3479, %v3472
    %v3795 = vpack.c.b16 %v3480, %v3473
    %v3796 = vpack.c.b16 %v3488, %v3481
    %v3797 = vpack.c.b16 %v3489, %v3482
    %v3798 = vpack.c.b16 %v3490, %v3483
    %v3799 = vpack.c.b16 %v3491, %v3484
    %v3800 = vpack.c.b16 %v3492, %v3485
    %v3801 = vpack.c.b16 %v3493, %v3486
    %v3802 = vpack.c.b16 %v3494, %v3487
    %v3803 = vpack.c.b16 %v3502, %v3495
    %v3804 = vpack.c.b16 %v3503, %v3496
    %v3805 = vpack.c.b16 %v3504, %v3497
    %v3806 = vpack.c.b16 %v3505, %v3498
    %v3807 = vpack.c.b16 %v3506, %v3499
    %v3808 = vpack.c.b16 %v3507, %v3500
    %v3809 = vpack.c.b16 %v3508, %v3501
    %v3810 = vpack.c.b16 %v3516, %v3509
    %v3811 = vpack.c.b16 %v3517, %v3510
    %v3812 = vpack.c.b16 %v3518, %v3511
    %v3813 = vpack.c.b16 %v3519, %v3512
    %v3814 = vpack.c.b16 %v3520, %v3513
    %v3815 = vpack.c.b16 %v3521, %v3514
    %v3816 = vpack.c.b16 %v3522, %v3515
    %v3817 = vpack.c.b16 %v3530, %v3523
    %v3818 = vpack.c.b16 %v3531, %v3524
    %v3819 = vpack.c.b16 %v3532, %v3525
    %v3820 = vpack.c.b16 %v3533, %v3526
    %v3821 = vpack.c.b16 %v3534, %v3527
    %v3822 = vpack.c.b16 %v3535, %v3528
    %v3823 = vpack.c.b16 %v3536, %v3529
    %v3824 = vpack.c.b16 %v3544, %v3537
    %v3825 = vpack.c.b16 %v3545, %v3538
    %v3826 = vpack.c.b16 %v3546, %v3539
    %v3827 = vpack.c.b16 %v3547, %v3540
    %v3828 = vpack.c.b16 %v3548, %v3541
    %v3829 = vpack.c.b16 %v3549, %v3542
    %v3830 = vpack.c.b16 %v3550, %v3543
    %v3831 = vpack.c.b16 %v3558, %v3551
    %v3832 = vpack.c.b16 %v3559, %v3552
    %v3833 = vpack.c.b16 %v3560, %v3553
    %v3834 = vpack.c.b16 %v3561, %v3554
    %v3835 = vpack.c.b16 %v3562, %v3555
    %v3836 = vpack.c.b16 %v3563, %v3556
    %v3837 = vpack.c.b16 %v3564, %v3557
    %v3838 = vpack.c.b16 %v3572, %v3565
    %v3839 = vpack.c.b16 %v3573, %v3566
    %v3840 = vpack.c.b16 %v3574, %v3567
    %v3841 = vpack.c.b16 %v3575, %v3568
    %v3842 = vpack.c.b16 %v3576, %v3569
    %v3843 = vpack.c.b16 %v3577, %v3570
    %v3844 = vpack.c.b16 %v3578, %v3571
    %v3845 = vpack.c.b16 %v3586, %v3579
    %v3846 = vpack.c.b16 %v3587, %v3580
    %v3847 = vpack.c.b16 %v3588, %v3581
    %v3848 = vpack.c.b16 %v3589, %v3582
    %v3849 = vpack.c.b16 %v3590, %v3583
    %v3850 = vpack.c.b16 %v3591, %v3584
    %v3851 = vpack.c.b16 %v3592, %v3585
    %v3852 = vpack.c.b16 %v3600, %v3593
    %v3853 = vpack.c.b16 %v3601, %v3594
    %v3854 = vpack.c.b16 %v3602, %v3595
    %v3855 = vpack.c.b16 %v3603, %v3596
    %v3856 = vpack.c.b16 %v3604, %v3597
    %v3857 = vpack.c.b16 %v3605, %v3598
    %v3858 = vpack.c.b16 %v3606, %v3599
    %v3859 = vpack.c.b16 %v3614, %v3607
    %v3860 = vpack.c.b16 %v3615, %v3608
    %v3861 = vpack.c.b16 %v3616, %v3609
    %v3862 = vpack.c.b16 %v3617, %v3610
    %v3863 = vpack.c.b16 %v3618, %v3611
    %v3864 = vpack.c.b16 %v3619, %v3612
    %v3865 = vpack.c.b16 %v3620, %v3613
    %v3866 = vpack.c.b16 %v3628, %v3621
    %v3867 = vpack.c.b16 %v3629, %v3622
    %v3868 = vpack.c.b16 %v3630, %v3623
    %v3869 = vpack.c.b16 %v3631, %v3624
    %v3870 = vpack.c.b16 %v3632, %v3625
    %v3871 = vpack.c.b16 %v3633, %v3626
    %v3872 = vpack.c.b16 %v3634, %v3627
    %v3873 = vpack.c.b16 %v3642, %v3635
    %v3874 = vpack.c.b16 %v3643, %v3636
    %v3875 = vpack.c.b16 %v3644, %v3637
    %v3876 = vpack.c.b16 %v3645, %v3638
    %v3877 = vpack.c.b16 %v3646, %v3639
    %v3878 = vpack.c.b16 %v3647, %v3640
    %v3879 = vpack.c.b16 %v3648, %v3641
    %v3880 = vpack.c.b16 %v3656, %v3649
    %v3881 = vpack.c.b16 %v3657, %v3650
    %v3882 = vpack.c.b16 %v3658, %v3651
    %v3883 = vpack.c.b16 %v3659, %v3652
    %v3884 = vpack.c.b16 %v3660, %v3653
    %v3885 = vpack.c.b16 %v3661, %v3654
    %v3886 = vpack.c.b16 %v3662, %v3655
    %4111 = vmatpush.bf16.msra.mxu0 %v3712
    %4112 = vmatpush.bf16.msra.mxu0 %v3705
    %4113 = vmatpush.bf16.msra.mxu0 %v3698
    %4114 = vmatpush.bf16.msra.mxu0 %v3691
    %4115 = vmatpush.bf16.msra.mxu0 %v3684
    %4116 = vmatpush.bf16.msra.mxu0 %v3677
    %4117 = vmatpush.bf16.msra.mxu0 %v3670
    %4118 = vmatpush.bf16.msra.mxu0 %v3663
    %4119 = vmatmul.bf16.gmra.mxu0 %v2683
    %v4120 = vpop.f32.mrf.mxu0
    %v4121 = vadd.f32 %v2945, %v4120
    %v4122 = vpop.f32.mrf.mxu0
    %4123 = vdwg.mxu0
    %4124 = vmatpush.bf16.msra.mxu0 %v3768
    %4125 = vmatpush.bf16.msra.mxu0 %v3761
    %4126 = vmatpush.bf16.msra.mxu0 %v3754
    %4127 = vmatpush.bf16.msra.mxu0 %v3747
    %4128 = vmatpush.bf16.msra.mxu0 %v3740
    %4129 = vmatpush.bf16.msra.mxu0 %v3733
    %4130 = vmatpush.bf16.msra.mxu0 %v3726
    %4131 = vmatpush.bf16.msra.mxu0 %v3719
    %4132 = vmatmul.bf16.gmra.mxu0 %v2684
    %v4133 = vpop.f32.mrf.mxu0
    %v4134 = vadd.f32 %v4121, %v4133
    %v4135 = vpop.f32.mrf.mxu0
    %4136 = vdwg.mxu0
    %4137 = vmatpush.bf16.msra.mxu0 %v3824
    %4138 = vmatpush.bf16.msra.mxu0 %v3817
    %4139 = vmatpush.bf16.msra.mxu0 %v3810
    %4140 = vmatpush.bf16.msra.mxu0 %v3803
    %4141 = vmatpush.bf16.msra.mxu0 %v3796
    %4142 = vmatpush.bf16.msra.mxu0 %v3789
    %4143 = vmatpush.bf16.msra.mxu0 %v3782
    %4144 = vmatpush.bf16.msra.mxu0 %v3775
    %4145 = vmatmul.bf16.gmra.mxu0 %v2685
    %v4146 = vpop.f32.mrf.mxu0
    %v4147 = vadd.f32 %v4134, %v4146
    %v4148 = vpop.f32.mrf.mxu0
    %4149 = vdwg.mxu0
    %4150 = vmatpush.bf16.msra.mxu0 %v3880
    %4151 = vmatpush.bf16.msra.mxu0 %v3873
    %4152 = vmatpush.bf16.msra.mxu0 %v3866
    %4153 = vmatpush.bf16.msra.mxu0 %v3859
    %4154 = vmatpush.bf16.msra.mxu0 %v3852
    %4155 = vmatpush.bf16.msra.mxu0 %v3845
    %4156 = vmatpush.bf16.msra.mxu0 %v3838
    %4157 = vmatpush.bf16.msra.mxu0 %v3831
    %4158 = vmatmul.bf16.gmra.mxu0 %v2686
    %v4159 = vpop.f32.mrf.mxu0
    %v4160 = vadd.f32 %v4147, %v4159
    %v4161 = vpop.f32.mrf.mxu0
    %4162 = vdwg.mxu0
    %4163 = vmatpush.bf16.msra.mxu0 %v3713
    %4164 = vmatpush.bf16.msra.mxu0 %v3706
    %4165 = vmatpush.bf16.msra.mxu0 %v3699
    %4166 = vmatpush.bf16.msra.mxu0 %v3692
    %4167 = vmatpush.bf16.msra.mxu0 %v3685
    %4168 = vmatpush.bf16.msra.mxu0 %v3678
    %4169 = vmatpush.bf16.msra.mxu0 %v3671
    %4170 = vmatpush.bf16.msra.mxu0 %v3664
    %4171 = vmatmul.bf16.gmra.mxu0 %v2683
    %v4172 = vpop.f32.mrf.mxu0
    %v4173 = vadd.f32 %v2946, %v4172
    %v4174 = vpop.f32.mrf.mxu0
    %4175 = vdwg.mxu0
    %4176 = vmatpush.bf16.msra.mxu0 %v3769
    %4177 = vmatpush.bf16.msra.mxu0 %v3762
    %4178 = vmatpush.bf16.msra.mxu0 %v3755
    %4179 = vmatpush.bf16.msra.mxu0 %v3748
    %4180 = vmatpush.bf16.msra.mxu0 %v3741
    %4181 = vmatpush.bf16.msra.mxu0 %v3734
    %4182 = vmatpush.bf16.msra.mxu0 %v3727
    %4183 = vmatpush.bf16.msra.mxu0 %v3720
    %4184 = vmatmul.bf16.gmra.mxu0 %v2684
    %v4185 = vpop.f32.mrf.mxu0
    %v4186 = vadd.f32 %v4173, %v4185
    %v4187 = vpop.f32.mrf.mxu0
    %4188 = vdwg.mxu0
    %4189 = vmatpush.bf16.msra.mxu0 %v3825
    %4190 = vmatpush.bf16.msra.mxu0 %v3818
    %4191 = vmatpush.bf16.msra.mxu0 %v3811
    %4192 = vmatpush.bf16.msra.mxu0 %v3804
    %4193 = vmatpush.bf16.msra.mxu0 %v3797
    %4194 = vmatpush.bf16.msra.mxu0 %v3790
    %4195 = vmatpush.bf16.msra.mxu0 %v3783
    %4196 = vmatpush.bf16.msra.mxu0 %v3776
    %4197 = vmatmul.bf16.gmra.mxu0 %v2685
    %v4198 = vpop.f32.mrf.mxu0
    %v4199 = vadd.f32 %v4186, %v4198
    %v4200 = vpop.f32.mrf.mxu0
    %4201 = vdwg.mxu0
    %4202 = vmatpush.bf16.msra.mxu0 %v3881
    %4203 = vmatpush.bf16.msra.mxu0 %v3874
    %4204 = vmatpush.bf16.msra.mxu0 %v3867
    %4205 = vmatpush.bf16.msra.mxu0 %v3860
    %4206 = vmatpush.bf16.msra.mxu0 %v3853
    %4207 = vmatpush.bf16.msra.mxu0 %v3846
    %4208 = vmatpush.bf16.msra.mxu0 %v3839
    %4209 = vmatpush.bf16.msra.mxu0 %v3832
    %4210 = vmatmul.bf16.gmra.mxu0 %v2686
    %v4211 = vpop.f32.mrf.mxu0
    %v4212 = vadd.f32 %v4199, %v4211
    %v4213 = vpop.f32.mrf.mxu0
    %4214 = vdwg.mxu0
    %4215 = vmatpush.bf16.msra.mxu0 %v3714
    %4216 = vmatpush.bf16.msra.mxu0 %v3707
    %4217 = vmatpush.bf16.msra.mxu0 %v3700
    %4218 = vmatpush.bf16.msra.mxu0 %v3693
    %4219 = vmatpush.bf16.msra.mxu0 %v3686
    %4220 = vmatpush.bf16.msra.mxu0 %v3679
    %4221 = vmatpush.bf16.msra.mxu0 %v3672
    %4222 = vmatpush.bf16.msra.mxu0 %v3665
    %4223 = vmatmul.bf16.gmra.mxu0 %v2683
    %v4224 = vpop.f32.mrf.mxu0
    %v4225 = vadd.f32 %v2947, %v4224
    %v4226 = vpop.f32.mrf.mxu0
    %4227 = vdwg.mxu0
    %4228 = vmatpush.bf16.msra.mxu0 %v3770
    %4229 = vmatpush.bf16.msra.mxu0 %v3763
    %4230 = vmatpush.bf16.msra.mxu0 %v3756
    %4231 = vmatpush.bf16.msra.mxu0 %v3749
    %4232 = vmatpush.bf16.msra.mxu0 %v3742
    %4233 = vmatpush.bf16.msra.mxu0 %v3735
    %4234 = vmatpush.bf16.msra.mxu0 %v3728
    %4235 = vmatpush.bf16.msra.mxu0 %v3721
    %4236 = vmatmul.bf16.gmra.mxu0 %v2684
    %v4237 = vpop.f32.mrf.mxu0
    %v4238 = vadd.f32 %v4225, %v4237
    %v4239 = vpop.f32.mrf.mxu0
    %4240 = vdwg.mxu0
    %4241 = vmatpush.bf16.msra.mxu0 %v3826
    %4242 = vmatpush.bf16.msra.mxu0 %v3819
    %4243 = vmatpush.bf16.msra.mxu0 %v3812
    %4244 = vmatpush.bf16.msra.mxu0 %v3805
    %4245 = vmatpush.bf16.msra.mxu0 %v3798
    %4246 = vmatpush.bf16.msra.mxu0 %v3791
    %4247 = vmatpush.bf16.msra.mxu0 %v3784
    %4248 = vmatpush.bf16.msra.mxu0 %v3777
    %4249 = vmatmul.bf16.gmra.mxu0 %v2685
    %v4250 = vpop.f32.mrf.mxu0
    %v4251 = vadd.f32 %v4238, %v4250
    %v4252 = vpop.f32.mrf.mxu0
    %4253 = vdwg.mxu0
    %4254 = vmatpush.bf16.msra.mxu0 %v3882
    %4255 = vmatpush.bf16.msra.mxu0 %v3875
    %4256 = vmatpush.bf16.msra.mxu0 %v3868
    %4257 = vmatpush.bf16.msra.mxu0 %v3861
    %4258 = vmatpush.bf16.msra.mxu0 %v3854
    %4259 = vmatpush.bf16.msra.mxu0 %v3847
    %4260 = vmatpush.bf16.msra.mxu0 %v3840
    %4261 = vmatpush.bf16.msra.mxu0 %v3833
    %4262 = vmatmul.bf16.gmra.mxu0 %v2686
    %v4263 = vpop.f32.mrf.mxu0
    %v4264 = vadd.f32 %v4251, %v4263
    %v4265 = vpop.f32.mrf.mxu0
    %4266 = vdwg.mxu0
    %4267 = vmatpush.bf16.msra.mxu0 %v3715
    %4268 = vmatpush.bf16.msra.mxu0 %v3708
    %4269 = vmatpush.bf16.msra.mxu0 %v3701
    %4270 = vmatpush.bf16.msra.mxu0 %v3694
    %4271 = vmatpush.bf16.msra.mxu0 %v3687
    %4272 = vmatpush.bf16.msra.mxu0 %v3680
    %4273 = vmatpush.bf16.msra.mxu0 %v3673
    %4274 = vmatpush.bf16.msra.mxu0 %v3666
    %4275 = vmatmul.bf16.gmra.mxu0 %v2683
    %v4276 = vpop.f32.mrf.mxu0
    %v4277 = vadd.f32 %v2948, %v4276
    %v4278 = vpop.f32.mrf.mxu0
    %4279 = vdwg.mxu0
    %4280 = vmatpush.bf16.msra.mxu0 %v3771
    %4281 = vmatpush.bf16.msra.mxu0 %v3764
    %4282 = vmatpush.bf16.msra.mxu0 %v3757
    %4283 = vmatpush.bf16.msra.mxu0 %v3750
    %4284 = vmatpush.bf16.msra.mxu0 %v3743
    %4285 = vmatpush.bf16.msra.mxu0 %v3736
    %4286 = vmatpush.bf16.msra.mxu0 %v3729
    %4287 = vmatpush.bf16.msra.mxu0 %v3722
    %4288 = vmatmul.bf16.gmra.mxu0 %v2684
    %v4289 = vpop.f32.mrf.mxu0
    %v4290 = vadd.f32 %v4277, %v4289
    %v4291 = vpop.f32.mrf.mxu0
    %4292 = vdwg.mxu0
    %4293 = vmatpush.bf16.msra.mxu0 %v3827
    %4294 = vmatpush.bf16.msra.mxu0 %v3820
    %4295 = vmatpush.bf16.msra.mxu0 %v3813
    %4296 = vmatpush.bf16.msra.mxu0 %v3806
    %4297 = vmatpush.bf16.msra.mxu0 %v3799
    %4298 = vmatpush.bf16.msra.mxu0 %v3792
    %4299 = vmatpush.bf16.msra.mxu0 %v3785
    %4300 = vmatpush.bf16.msra.mxu0 %v3778
    %4301 = vmatmul.bf16.gmra.mxu0 %v2685
    %v4302 = vpop.f32.mrf.mxu0
    %v4303 = vadd.f32 %v4290, %v4302
    %v4304 = vpop.f32.mrf.mxu0
    %4305 = vdwg.mxu0
    %4306 = vmatpush.bf16.msra.mxu0 %v3883
    %4307 = vmatpush.bf16.msra.mxu0 %v3876
    %4308 = vmatpush.bf16.msra.mxu0 %v3869
    %4309 = vmatpush.bf16.msra.mxu0 %v3862
    %4310 = vmatpush.bf16.msra.mxu0 %v3855
    %4311 = vmatpush.bf16.msra.mxu0 %v3848
    %4312 = vmatpush.bf16.msra.mxu0 %v3841
    %4313 = vmatpush.bf16.msra.mxu0 %v3834
    %4314 = vmatmul.bf16.gmra.mxu0 %v2686
    %v4315 = vpop.f32.mrf.mxu0
    %v4316 = vadd.f32 %v4303, %v4315
    %v4317 = vpop.f32.mrf.mxu0
    %4318 = vdwg.mxu0
    %4319 = vmatpush.bf16.msra.mxu0 %v3716
    %4320 = vmatpush.bf16.msra.mxu0 %v3709
    %4321 = vmatpush.bf16.msra.mxu0 %v3702
    %4322 = vmatpush.bf16.msra.mxu0 %v3695
    %4323 = vmatpush.bf16.msra.mxu0 %v3688
    %4324 = vmatpush.bf16.msra.mxu0 %v3681
    %4325 = vmatpush.bf16.msra.mxu0 %v3674
    %4326 = vmatpush.bf16.msra.mxu0 %v3667
    %4327 = vmatmul.bf16.gmra.mxu0 %v2683
    %v4328 = vpop.f32.mrf.mxu0
    %v4329 = vadd.f32 %v2949, %v4328
    %v4330 = vpop.f32.mrf.mxu0
    %4331 = vdwg.mxu0
    %4332 = vmatpush.bf16.msra.mxu0 %v3772
    %4333 = vmatpush.bf16.msra.mxu0 %v3765
    %4334 = vmatpush.bf16.msra.mxu0 %v3758
    %4335 = vmatpush.bf16.msra.mxu0 %v3751
    %4336 = vmatpush.bf16.msra.mxu0 %v3744
    %4337 = vmatpush.bf16.msra.mxu0 %v3737
    %4338 = vmatpush.bf16.msra.mxu0 %v3730
    %4339 = vmatpush.bf16.msra.mxu0 %v3723
    %4340 = vmatmul.bf16.gmra.mxu0 %v2684
    %v4341 = vpop.f32.mrf.mxu0
    %v4342 = vadd.f32 %v4329, %v4341
    %v4343 = vpop.f32.mrf.mxu0
    %4344 = vdwg.mxu0
    %4345 = vmatpush.bf16.msra.mxu0 %v3828
    %4346 = vmatpush.bf16.msra.mxu0 %v3821
    %4347 = vmatpush.bf16.msra.mxu0 %v3814
    %4348 = vmatpush.bf16.msra.mxu0 %v3807
    %4349 = vmatpush.bf16.msra.mxu0 %v3800
    %4350 = vmatpush.bf16.msra.mxu0 %v3793
    %4351 = vmatpush.bf16.msra.mxu0 %v3786
    %4352 = vmatpush.bf16.msra.mxu0 %v3779
    %4353 = vmatmul.bf16.gmra.mxu0 %v2685
    %v4354 = vpop.f32.mrf.mxu0
    %v4355 = vadd.f32 %v4342, %v4354
    %v4356 = vpop.f32.mrf.mxu0
    %4357 = vdwg.mxu0
    %4358 = vmatpush.bf16.msra.mxu0 %v3884
    %4359 = vmatpush.bf16.msra.mxu0 %v3877
    %4360 = vmatpush.bf16.msra.mxu0 %v3870
    %4361 = vmatpush.bf16.msra.mxu0 %v3863
    %4362 = vmatpush.bf16.msra.mxu0 %v3856
    %4363 = vmatpush.bf16.msra.mxu0 %v3849
    %4364 = vmatpush.bf16.msra.mxu0 %v3842
    %4365 = vmatpush.bf16.msra.mxu0 %v3835
    %4366 = vmatmul.bf16.gmra.mxu0 %v2686
    %v4367 = vpop.f32.mrf.mxu0
    %v4368 = vadd.f32 %v4355, %v4367
    %v4369 = vpop.f32.mrf.mxu0
    %4370 = vdwg.mxu0
    %4371 = vmatpush.bf16.msra.mxu0 %v3717
    %4372 = vmatpush.bf16.msra.mxu0 %v3710
    %4373 = vmatpush.bf16.msra.mxu0 %v3703
    %4374 = vmatpush.bf16.msra.mxu0 %v3696
    %4375 = vmatpush.bf16.msra.mxu0 %v3689
    %4376 = vmatpush.bf16.msra.mxu0 %v3682
    %4377 = vmatpush.bf16.msra.mxu0 %v3675
    %4378 = vmatpush.bf16.msra.mxu0 %v3668
    %4379 = vmatmul.bf16.gmra.mxu0 %v2683
    %v4380 = vpop.f32.mrf.mxu0
    %v4381 = vadd.f32 %v2950, %v4380
    %v4382 = vpop.f32.mrf.mxu0
    %4383 = vdwg.mxu0
    %4384 = vmatpush.bf16.msra.mxu0 %v3773
    %4385 = vmatpush.bf16.msra.mxu0 %v3766
    %4386 = vmatpush.bf16.msra.mxu0 %v3759
    %4387 = vmatpush.bf16.msra.mxu0 %v3752
    %4388 = vmatpush.bf16.msra.mxu0 %v3745
    %4389 = vmatpush.bf16.msra.mxu0 %v3738
    %4390 = vmatpush.bf16.msra.mxu0 %v3731
    %4391 = vmatpush.bf16.msra.mxu0 %v3724
    %4392 = vmatmul.bf16.gmra.mxu0 %v2684
    %v4393 = vpop.f32.mrf.mxu0
    %v4394 = vadd.f32 %v4381, %v4393
    %v4395 = vpop.f32.mrf.mxu0
    %4396 = vdwg.mxu0
    %4397 = vmatpush.bf16.msra.mxu0 %v3829
    %4398 = vmatpush.bf16.msra.mxu0 %v3822
    %4399 = vmatpush.bf16.msra.mxu0 %v3815
    %4400 = vmatpush.bf16.msra.mxu0 %v3808
    %4401 = vmatpush.bf16.msra.mxu0 %v3801
    %4402 = vmatpush.bf16.msra.mxu0 %v3794
    %4403 = vmatpush.bf16.msra.mxu0 %v3787
    %4404 = vmatpush.bf16.msra.mxu0 %v3780
    %4405 = vmatmul.bf16.gmra.mxu0 %v2685
    %v4406 = vpop.f32.mrf.mxu0
    %v4407 = vadd.f32 %v4394, %v4406
    %v4408 = vpop.f32.mrf.mxu0
    %4409 = vdwg.mxu0
    %4410 = vmatpush.bf16.msra.mxu0 %v3885
    %4411 = vmatpush.bf16.msra.mxu0 %v3878
    %4412 = vmatpush.bf16.msra.mxu0 %v3871
    %4413 = vmatpush.bf16.msra.mxu0 %v3864
    %4414 = vmatpush.bf16.msra.mxu0 %v3857
    %4415 = vmatpush.bf16.msra.mxu0 %v3850
    %4416 = vmatpush.bf16.msra.mxu0 %v3843
    %4417 = vmatpush.bf16.msra.mxu0 %v3836
    %4418 = vmatmul.bf16.gmra.mxu0 %v2686
    %v4419 = vpop.f32.mrf.mxu0
    %v4420 = vadd.f32 %v4407, %v4419
    %v4421 = vpop.f32.mrf.mxu0
    %4422 = vdwg.mxu0
    %4423 = vmatpush.bf16.msra.mxu0 %v3718
    %4424 = vmatpush.bf16.msra.mxu0 %v3711
    %4425 = vmatpush.bf16.msra.mxu0 %v3704
    %4426 = vmatpush.bf16.msra.mxu0 %v3697
    %4427 = vmatpush.bf16.msra.mxu0 %v3690
    %4428 = vmatpush.bf16.msra.mxu0 %v3683
    %4429 = vmatpush.bf16.msra.mxu0 %v3676
    %4430 = vmatpush.bf16.msra.mxu0 %v3669
    %4431 = vmatmul.bf16.gmra.mxu0 %v2683
    %v4432 = vpop.f32.mrf.mxu0
    %v4433 = vadd.f32 %v2951, %v4432
    %v4434 = vpop.f32.mrf.mxu0
    %4435 = vdwg.mxu0
    %4436 = vmatpush.bf16.msra.mxu0 %v3774
    %4437 = vmatpush.bf16.msra.mxu0 %v3767
    %4438 = vmatpush.bf16.msra.mxu0 %v3760
    %4439 = vmatpush.bf16.msra.mxu0 %v3753
    %4440 = vmatpush.bf16.msra.mxu0 %v3746
    %4441 = vmatpush.bf16.msra.mxu0 %v3739
    %4442 = vmatpush.bf16.msra.mxu0 %v3732
    %4443 = vmatpush.bf16.msra.mxu0 %v3725
    %4444 = vmatmul.bf16.gmra.mxu0 %v2684
    %v4445 = vpop.f32.mrf.mxu0
    %v4446 = vadd.f32 %v4433, %v4445
    %v4447 = vpop.f32.mrf.mxu0
    %4448 = vdwg.mxu0
    %4449 = vmatpush.bf16.msra.mxu0 %v3830
    %4450 = vmatpush.bf16.msra.mxu0 %v3823
    %4451 = vmatpush.bf16.msra.mxu0 %v3816
    %4452 = vmatpush.bf16.msra.mxu0 %v3809
    %4453 = vmatpush.bf16.msra.mxu0 %v3802
    %4454 = vmatpush.bf16.msra.mxu0 %v3795
    %4455 = vmatpush.bf16.msra.mxu0 %v3788
    %4456 = vmatpush.bf16.msra.mxu0 %v3781
    %4457 = vmatmul.bf16.gmra.mxu0 %v2685
    %v4458 = vpop.f32.mrf.mxu0
    %v4459 = vadd.f32 %v4446, %v4458
    %v4460 = vpop.f32.mrf.mxu0
    %4461 = vdwg.mxu0
    %4462 = vmatpush.bf16.msra.mxu0 %v3886
    %4463 = vmatpush.bf16.msra.mxu0 %v3879
    %4464 = vmatpush.bf16.msra.mxu0 %v3872
    %4465 = vmatpush.bf16.msra.mxu0 %v3865
    %4466 = vmatpush.bf16.msra.mxu0 %v3858
    %4467 = vmatpush.bf16.msra.mxu0 %v3851
    %4468 = vmatpush.bf16.msra.mxu0 %v3844
    %4469 = vmatpush.bf16.msra.mxu0 %v3837
    %4470 = vmatmul.bf16.gmra.mxu0 %v2686
    %v4471 = vpop.f32.mrf.mxu0
    %v4472 = vadd.f32 %v4459, %v4471
    %v4473 = vpop.f32.mrf.mxu0
    %4474 = vdwg.mxu0
    %v4475 = vsub.f32 0.0, %v4160
    %v4476 = vsub.f32 0.0, %v4212
    %v4477 = vsub.f32 0.0, %v4264
    %v4478 = vsub.f32 0.0, %v4316
    %v4479 = vsub.f32 0.0, %v4368
    %v4480 = vsub.f32 0.0, %v4420
    %v4481 = vsub.f32 0.0, %v4472
    %v4482 = vmul.f32 %v4475, 1.442695
    %v4483 = vpow.pop %v4482
    %v4484 = vmul.f32 %v4476, 1.442695
    %v4485 = vpow.pop %v4484
    %v4486 = vmul.f32 %v4477, 1.442695
    %v4487 = vpow.pop %v4486
    %v4488 = vmul.f32 %v4478, 1.442695
    %v4489 = vpow.pop %v4488
    %v4490 = vmul.f32 %v4479, 1.442695
    %v4491 = vpow.pop %v4490
    %v4492 = vmul.f32 %v4480, 1.442695
    %v4493 = vpow.pop %v4492
    %v4494 = vmul.f32 %v4481, 1.442695
    %v4495 = vpow.pop %v4494
    %v4496 = vadd.f32 %v4483, 1.0
    %v4497 = vadd.f32 %v4485, 1.0
    %v4498 = vadd.f32 %v4487, 1.0
    %v4499 = vadd.f32 %v4489, 1.0
    %v4500 = vadd.f32 %v4491, 1.0
    %v4501 = vadd.f32 %v4493, 1.0
    %v4502 = vadd.f32 %v4495, 1.0
    %v4503 = vrcp.pop %v4496
    %v4504 = vrcp.pop %v4497
    %v4505 = vrcp.pop %v4498
    %v4506 = vrcp.pop %v4499
    %v4507 = vrcp.pop %v4500
    %v4508 = vrcp.pop %v4501
    %v4509 = vrcp.pop %v4502
    %v4510 = vpack.c.bf16 %v4504, %v4503
    %v4511 = vpack.c.bf16 %v4506, %v4505
    %v4512 = vpack.c.bf16 %v4508, %v4507
    %v4513 = vpack.c.bf16 %v4509, %v4509
    %4514 = vst [vmem:[#allocation17] sm:$0xff] %v4510
    %4515 = vst [vmem:[#allocation17 + $0x8] sm:$0xff] %v4511
    %4516 = vst [vmem:[#allocation17 + $0x10] sm:$0xff] %v4512
    %4517 = vst [vmem:[#allocation17 + $0x18] sm:$0xf] %v4513
    %4518 = vst [vmem:[#allocation18] sm:$0xff] %v2363
    %4519 = vst [vmem:[#allocation18 + $0x8] sm:$0xff] %v2415
    // Predicated region
    $region78: #{tpu_custom_call.1} parent=1 // pred_check
      _
    $region79: #{tpu_custom_call.1} parent=1 // pred_check_branch
      %4521 = sbr.rel (0) target = $region81
    $region80: #{tpu_custom_call.1} parent=1 // pred_region
      %4523 = vsyncadd [#allocation4], 0
      %s4525 = sshll.u32 [#allocation17], 4
      %s4526 = int_to_ptr.vmem [resolvable:$true] %s4525
      %s4527 = sshll.u32 %s10, 4
      %s4528 = int_to_ptr.hbm [resolvable:$true] %s4527
      %4530 = dma.vmem_to_hbm [thread:$0]  %s4526, 448, %s4528, [#allocation4]
    $region81: #{tpu_custom_call.1} parent=1 // pred_fallthru
      _
    // Predicated region
    $region82: #{tpu_custom_call.1} parent=1 // pred_check
      _
    $region83: #{tpu_custom_call.1} parent=1 // pred_check_branch
      %4532 = sbr.rel (0) target = $region85
    $region84: #{tpu_custom_call.1} parent=1 // pred_region
      %4534 = vsyncadd [#allocation19], 0
      %s4536 = sshll.u32 [#allocation18], 4
      %s4537 = int_to_ptr.vmem [resolvable:$true] %s4536
      %s4538 = sshll.u32 %s11, 4
      %s4539 = int_to_ptr.hbm [resolvable:$true] %s4538
      %4541 = dma.vmem_to_hbm [thread:$0]  %s4537, 256, %s4539, [#allocation19]
    $region85: #{tpu_custom_call.1} parent=1 // pred_fallthru
      _
    // Predicated region
    $region86: #{tpu_custom_call.1} parent=1 // pred_check
      _
    $region87: #{tpu_custom_call.1} parent=1 // pred_check_branch
      %4543 = sbr.rel (0) target = $region89
    $region88: #{tpu_custom_call.1} parent=1 // pred_region
      %4545 = dma.done [#allocation4], 448
    $region89: #{tpu_custom_call.1} parent=1 // pred_fallthru
      _
    // Predicated region
    $region90: #{tpu_custom_call.1} parent=1 // pred_check
      _
    $region91: #{tpu_custom_call.1} parent=1 // pred_check_branch
      %4547 = sbr.rel (0) target = $region93
    $region92: #{tpu_custom_call.1} parent=1 // pred_region
      %4549 = dma.done [#allocation19], 256
    $region93: #{tpu_custom_call.1} parent=1 // pred_fallthru
      _
    %4550 = vsyncpa [#allocation3], 1
    %4551 = vsyncpa [#allocation6], 1
    %4552 = vsyncpa [#allocation9], 1
    %4553 = vsyncpa [#allocation12], 1
    %4554 = vsyncpa [#allocation15], 1
    %4555 = vsyncpa [#allocation4], 1
    %4556 = vsyncpa [#allocation19], 1

</llo_original>
